<compile_context>
chip_gen: v6e
topology: v6e:2x2x1
jax: 0.10.0
libtpu: 0.0.40
codegen_flags: <defaults>
</compile_context>

<pallas_src>
import numpy as np
import jax
import jax.numpy as jnp
from jax.experimental import pallas as pl
from jax.experimental.pallas import tpu as pltpu

KSIZE = 7
PAD = (KSIZE - 1) // 2          # 3
ROW_OFF = 8                     # sublane-aligned start of the valid region
COL_OFF = 128                   # lane-tile-aligned start of the valid region
BR = ROW_OFF - PAD              # first scratch row the conv taps read (5)
BC = COL_OFF - PAD              # first scratch col the conv taps read (125)


def _round_up(x, m):
    return (x + m - 1) // m * m


def _vmem_block_bytes(shape, itemsize):
    """Approximate padded VMEM footprint of a block (minor two dims are stored
    in (8*4/itemsize, 128)-element tiles)."""
    sub = 8 * max(1, 4 // itemsize)
    if len(shape) == 1:
        return _round_up(int(shape[0]), 128) * itemsize
    lead = 1
    for d in shape[:-2]:
        lead *= int(d)
    return (lead * _round_up(int(shape[-2]), sub)
            * _round_up(int(shape[-1]), 128) * itemsize)


def _cross_spatial_gate_kernel(w_ref, b_ref, x1_ref, x2_ref, o_ref,
                               pad_ref, gate_ref):
    """One batch tile per grid step.

    w_ref   : SMEM (98,)  BN-folded conv weights, flat [c, ky, kx]; 1/C of the
              channel mean is folded into the c == 1 taps.
    b_ref   : SMEM (1,)   BN-folded bias.
    x1_ref  : VMEM (TB, C, H*W)   lane-dense flattened-spatial layout.
    x2_ref  : VMEM (TB, C, H, W)  NCHW (pooled maps land directly in 2-D).
    o_ref   : VMEM (TB, C, H*W)
    pad_ref : VMEM (2, TB, Hp, Wp) f32 padded pooled maps; valid region starts
              at (ROW_OFF, COL_OFF) so its store is (8,128)-tile aligned.
    gate_ref: VMEM (TB, H*W)      gate in the flattened layout.
    """
    TB, C, H, W = x2_ref.shape
    Wp = pad_ref.shape[-1]

    # ---- ChannelPool: max / sum over channels (1/C is folded into weights).
    x2 = x2_ref[...]
    cmax = jnp.max(x2, axis=1).astype(jnp.float32)      # (TB, H, W)
    csum = jnp.sum(x2.astype(jnp.float32), axis=1)      # (TB, H, W)

    # ---- Zero only the 7x7 halo of the scratch (interior is fully rewritten
    #      below).  Unconditional so a megacore split of the parallel batch
    #      axis stays correct.
    zrow = jnp.zeros((TB, PAD, Wp), jnp.float32)
    zcol = jnp.zeros((TB, H, PAD), jnp.float32)
    for ch in range(2):
        pad_ref[ch, :, ROW_OFF - PAD:ROW_OFF, :] = zrow
        pad_ref[ch, :, ROW_OFF + H:ROW_OFF + H + PAD, :] = zrow
        pad_ref[ch, :, ROW_OFF:ROW_OFF + H, COL_OFF - PAD:COL_OFF] = zcol
        pad_ref[ch, :, ROW_OFF:ROW_OFF + H, COL_OFF + W:COL_OFF + W + PAD] = zcol

    # ---- Tile-aligned interior stores (row 8 / lane 128 => no rotation).
    pad_ref[0, :, ROW_OFF:ROW_OFF + H, COL_OFF:COL_OFF + W] = cmax
    pad_ref[1, :, ROW_OFF:ROW_OFF + H, COL_OFF:COL_OFF + W] = csum

    # ---- 7x7 conv (2 in-ch -> 1 out-ch) on the VPU.  Per channel: 7 hoisted
    #      lane-shifted column views; dy-outer loop accumulates a full-height
    #      horizontal partial, then one sublane slice per dy.
    def conv_channel(ch, w_base):
        p = pad_ref[ch]                                          # (TB, Hp, Wp)
        cols = [p[:, :, BC + dx:BC + dx + W] for dx in range(KSIZE)]
        acc_c = jnp.zeros((TB, H, W), jnp.float32)
        for dy in range(KSIZE):
            g = cols[0] * w_ref[w_base + dy * KSIZE]
            for dx in range(1, KSIZE):
                g = g + cols[dx] * w_ref[w_base + dy * KSIZE + dx]
            acc_c = acc_c + g[:, BR + dy:BR + dy + H, :]
        return acc_c

    acc = conv_channel(0, 0) + conv_channel(1, KSIZE * KSIZE)

    # ---- Folded-BN bias + sigmoid gate (f32), cast once to the I/O dtype.
    gate2d = jax.nn.sigmoid(acc + b_ref[0]).astype(gate_ref.dtype)   # (TB,H,W)

    # ---- Relayout the gate once into the lane-dense flattened layout.
    # TODO(synk): replace with one jnp.reshape((TB, H*W)) when Mosaic supports
    #             that reshape for W < 128; these H row stores are the
    #             guaranteed-to-lower equivalent (1 small row each).
    for h in range(H):
        gate_ref[:, h * W:(h + 1) * W] = gate2d[:, h, :]

    # ---- Lane-dense gating of x1 (the dominant HBM traffic), native dtype.
    gate = gate_ref[...]                                          # (TB, H*W)
    o_ref[...] = (x1_ref[...] * gate[:, None, :]).astype(o_ref.dtype)


def cross_spatial_gate(x1, x2, conv_w, bn_gamma, bn_beta, bn_mean, bn_var,
                       eps=1e-5, batch_tile=None, donate_x1=False):
    """x1, x2: (B, C, H, W).  conv_w: (1, 2, 7, 7).  bn_*: (1,) (eval mode)."""
    B, C, H, W = x1.shape
    assert x2.shape == x1.shape
    HW = H * W

    # Fold eval-mode BatchNorm into the conv weight and a scalar bias, and
    # fold 1/C (channel mean) into the mean-channel weights.
    a = (bn_gamma / jnp.sqrt(bn_var + eps)).astype(jnp.float32)          # (1,)
    w_folded = (conv_w.astype(jnp.float32) * a[:, None, None, None])[0]  # (2,7,7)
    w_folded = w_folded * jnp.array([1.0, 1.0 / C], jnp.float32)[:, None, None]
    w_flat = w_folded.reshape(-1)                                        # (98,)
    bias = (bn_beta - bn_mean * a).astype(jnp.float32)                   # (1,)

    # Padded pooled-map scratch sized so the aligned valid region + 7x7 halo fit.
    Hp = _round_up(ROW_OFF + H + PAD, 8)
    Wp = _round_up(COL_OFF + W + PAD, 128)

    # ---- Generation-aware VMEM budget & batch-tile selection. ----
    itemsize = jnp.dtype(x1.dtype).itemsize
    vmem_cap = 64 * 1024 * 1024                       # conservative: v7x per-TC
    try:
        vmem_cap = int(getattr(pltpu.get_tpu_info(), "vmem_capacity_bytes",
                               vmem_cap))
    except Exception:
        pass
    vmem_limit = int(min(vmem_cap * 3 // 4, 96 * 1024 * 1024))  # ~25% headroom
    vmem_limit = max(vmem_limit, 32 * 1024 * 1024)
    block_budget = max(min(vmem_limit - 8 * 1024 * 1024, 40 * 1024 * 1024),
                       2 * 1024 * 1024)

    per_batch = (
        2 * (_vmem_block_bytes((1, C, HW), itemsize)         # x1 (double-buffered)
             + _vmem_block_bytes((1, C, H, W), itemsize)     # x2
             + _vmem_block_bytes((1, C, HW), itemsize))      # out
        + 2 * Hp * Wp * 4                                    # pooled-map scratch
        + _vmem_block_bytes((1, HW), itemsize))              # gate scratch
    if batch_tile is None:
        batch_tile = block_budget // max(per_batch, 1)
    TB = int(max(1, min(batch_tile, B)))
    if B > 1:
        # Keep >= 2 grid steps so the parallel axis can shard across the two
        # TensorCores of a v7x chip (costs ~0.35 us/step elsewhere: negligible).
        TB = min(TB, pl.cdiv(B, 2))
    grid = (pl.cdiv(B, TB),)
    # NOTE: if B % TB != 0 the last block is padded by Pallas; the pool/conv
    # math runs on unspecified padding rows whose outputs are dropped (benign).

    x1f = x1.reshape(B, C, HW)          # free: NCHW is contiguous

    extra = {}
    if donate_x1:
        extra["input_output_aliases"] = {2: 0}      # alias x1 -> out

    out = pl.pallas_call(
        _cross_spatial_gate_kernel,
        out_shape=jax.ShapeDtypeStruct((B, C, HW), x1.dtype),
        grid=grid,
        in_specs=[
            pl.BlockSpec(memory_space=pltpu.MemorySpace.SMEM),     # w_flat
            pl.BlockSpec(memory_space=pltpu.MemorySpace.SMEM),     # bias
            pl.BlockSpec((TB, C, HW), lambda b: (b, 0, 0)),        # x1 (flat)
            pl.BlockSpec((TB, C, H, W), lambda b: (b, 0, 0, 0)),   # x2 (NCHW)
        ],
        out_specs=pl.BlockSpec((TB, C, HW), lambda b: (b, 0, 0)),
        scratch_shapes=[
            pltpu.VMEM((2, TB, Hp, Wp), jnp.float32),   # padded pooled maps
            pltpu.VMEM((TB, HW), x1.dtype),             # flattened gate
        ],
        compiler_params=pltpu.CompilerParams(
            dimension_semantics=("parallel",),
            vmem_limit_bytes=vmem_limit,
        ),
        **extra,
    )(w_flat, bias, x1f, x2)
    return out.reshape(B, C, H, W)


def _reference(x1, x2, conv_w, bn_gamma, bn_beta, bn_mean, bn_var, eps=1e-5):
    cmax = jnp.max(x2, axis=1, keepdims=True)
    cmean = jnp.mean(x2, axis=1, keepdims=True)
    comp = jnp.concatenate([cmax, cmean], axis=1)                 # (B, 2, H, W)
    y = jax.lax.conv_general_dilated(
        comp, conv_w, window_strides=(1, 1), padding=[(PAD, PAD), (PAD, PAD)],
        dimension_numbers=("NCHW", "OIHW", "NCHW"))
    g = bn_gamma[None, :, None, None]
    b = bn_beta[None, :, None, None]
    m = bn_mean[None, :, None, None]
    v = bn_var[None, :, None, None]
    y = (y - m) / jnp.sqrt(v + eps) * g + b
    return x1 * jax.nn.sigmoid(y)


if __name__ == "__main__":
    key = jax.random.PRNGKey(0)
    k1, k2, kw = jax.random.split(key, 3)

    B, C, H, W = 2, 4, 16, 16
    x1 = jax.random.normal(k1, (B, C, H, W), dtype=jnp.float32)
    x2 = jax.random.normal(k2, (B, C, H, W), dtype=jnp.float32)

    # Conv2d(2, 1, 7, bias=False) weight: (out=1, in=2, 7, 7)
    fan_in = 2 * KSIZE * KSIZE
    bound = 1.0 / np.sqrt(fan_in)
    conv_w = jax.random.uniform(kw, (1, 2, KSIZE, KSIZE),
                                dtype=jnp.float32, minval=-bound, maxval=bound)

    # BatchNorm2d(1) default params (eval mode).
    bn_gamma = jnp.ones((1,), jnp.float32)
    bn_beta = jnp.zeros((1,), jnp.float32)
    bn_mean = jnp.zeros((1,), jnp.float32)
    bn_var = jnp.ones((1,), jnp.float32)

    out = cross_spatial_gate(x1, x2, conv_w, bn_gamma, bn_beta, bn_mean, bn_var)
    out = jax.block_until_ready(out)

    ref = _reference(x1, x2, conv_w, bn_gamma, bn_beta, bn_mean, bn_var)
    ref = jax.block_until_ready(ref)

    np.testing.assert_allclose(np.asarray(out), np.asarray(ref),
                               atol=1e-4, rtol=1e-4)
    print("KERNEL_OK")
</pallas_src>

<mosaic_0001>
module attributes {stable_mosaic.version = 11 : i64} {
  func.func @_cross_spatial_gate_kernel(%arg0: i32, %arg1: memref<98xf32, #tpu.memory_space<smem>>, %arg2: memref<1xf32, #tpu.memory_space<smem>>, %arg3: memref<1x4x256xf32, #tpu.memory_space<vmem>>, %arg4: memref<1x4x16x16xf32, #tpu.memory_space<vmem>>, %arg5: memref<1x4x256xf32, #tpu.memory_space<vmem>>, %arg6: memref<2x1x32x256xf32, #tpu.memory_space<vmem>>, %arg7: memref<1x256xf32, #tpu.memory_space<vmem>>) attributes {dimension_semantics = [#tpu.dimension_semantics<parallel>], iteration_bounds = array<i64: 2>, scalar_prefetch = 0 : i64, scratch_operands = 2 : i64, tpu.core_type = #tpu.core_type<tc>, window_params = [{transform_indices = @transform_0, window_bounds = array<i64: 98>}, {transform_indices = @transform_1, window_bounds = array<i64: 1>}, {transform_indices = @transform_2, window_bounds = array<i64: 1, 4, 256>}, {transform_indices = @transform_3, window_bounds = array<i64: 1, 4, 16, 16>}, {transform_indices = @transform_4, window_bounds = array<i64: 1, 4, 256>}]} {
    %c0 = arith.constant 0 : index
    %c0_0 = arith.constant 0 : index
    %c0_1 = arith.constant 0 : index
    %c0_2 = arith.constant 0 : index
    %0 = vector.load %arg4[%c0, %c0_0, %c0_1, %c0_2] : memref<1x4x16x16xf32, #tpu.memory_space<vmem>>, vector<1x4x16x16xf32>
    %cst = arith.constant dense<0xFF800000> : vector<1x16x16xf32>
    %1 = vector.multi_reduction <maximumf>, %0, %cst [1] : vector<1x4x16x16xf32> to vector<1x16x16xf32>
    %cst_3 = arith.constant dense<0.000000e+00> : vector<1x16x16xf32>
    %2 = vector.multi_reduction <add>, %0, %cst_3 [1] : vector<1x4x16x16xf32> to vector<1x16x16xf32>
    %cst_4 = arith.constant 0.000000e+00 : f32
    %3 = vector.broadcast %cst_4 : f32 to vector<1x3x256xf32>
    %cst_5 = arith.constant 0.000000e+00 : f32
    %4 = vector.broadcast %cst_5 : f32 to vector<1x16x3xf32>
    %c0_6 = arith.constant 0 : index
    %c0_7 = arith.constant 0 : index
    %c5 = arith.constant 5 : index
    %c0_8 = arith.constant 0 : index
    %5 = vector.load %arg6[%c0_6, %c0_7, %c5, %c0_8] : memref<2x1x32x256xf32, #tpu.memory_space<vmem>>, vector<1x1x3x256xf32>
    %6 = vector.shape_cast %5 : vector<1x1x3x256xf32> to vector<1x3x256xf32>
    %7 = vector.shape_cast %3 : vector<1x3x256xf32> to vector<1x1x3x256xf32>
    tpu.vector_store %arg6[%c0_6, %c0_7, %c5, %c0_8], %7 {strides = array<i32>} : memref<2x1x32x256xf32, #tpu.memory_space<vmem>>, vector<1x1x3x256xf32>,
    %c0_9 = arith.constant 0 : index
    %c0_10 = arith.constant 0 : index
    %c24 = arith.constant 24 : index
    %c0_11 = arith.constant 0 : index
    %8 = vector.load %arg6[%c0_9, %c0_10, %c24, %c0_11] : memref<2x1x32x256xf32, #tpu.memory_space<vmem>>, vector<1x1x3x256xf32>
    %9 = vector.shape_cast %8 : vector<1x1x3x256xf32> to vector<1x3x256xf32>
    %10 = vector.shape_cast %3 : vector<1x3x256xf32> to vector<1x1x3x256xf32>
    tpu.vector_store %arg6[%c0_9, %c0_10, %c24, %c0_11], %10 {strides = array<i32>} : memref<2x1x32x256xf32, #tpu.memory_space<vmem>>, vector<1x1x3x256xf32>,
    %c0_12 = arith.constant 0 : index
    %c0_13 = arith.constant 0 : index
    %c8 = arith.constant 8 : index
    %c125 = arith.constant 125 : index
    %11 = vector.load %arg6[%c0_12, %c0_13, %c8, %c125] : memref<2x1x32x256xf32, #tpu.memory_space<vmem>>, vector<1x1x16x3xf32>
    %12 = vector.shape_cast %11 : vector<1x1x16x3xf32> to vector<1x16x3xf32>
    %13 = vector.shape_cast %4 : vector<1x16x3xf32> to vector<1x1x16x3xf32>
    tpu.vector_store %arg6[%c0_12, %c0_13, %c8, %c125], %13 {strides = array<i32>} : memref<2x1x32x256xf32, #tpu.memory_space<vmem>>, vector<1x1x16x3xf32>,
    %c0_14 = arith.constant 0 : index
    %c0_15 = arith.constant 0 : index
    %c8_16 = arith.constant 8 : index
    %c144 = arith.constant 144 : index
    %14 = vector.load %arg6[%c0_14, %c0_15, %c8_16, %c144] : memref<2x1x32x256xf32, #tpu.memory_space<vmem>>, vector<1x1x16x3xf32>
    %15 = vector.shape_cast %14 : vector<1x1x16x3xf32> to vector<1x16x3xf32>
    %16 = vector.shape_cast %4 : vector<1x16x3xf32> to vector<1x1x16x3xf32>
    tpu.vector_store %arg6[%c0_14, %c0_15, %c8_16, %c144], %16 {strides = array<i32>} : memref<2x1x32x256xf32, #tpu.memory_space<vmem>>, vector<1x1x16x3xf32>,
    %c1 = arith.constant 1 : index
    %c0_17 = arith.constant 0 : index
    %c5_18 = arith.constant 5 : index
    %c0_19 = arith.constant 0 : index
    %17 = vector.load %arg6[%c1, %c0_17, %c5_18, %c0_19] : memref<2x1x32x256xf32, #tpu.memory_space<vmem>>, vector<1x1x3x256xf32>
    %18 = vector.shape_cast %17 : vector<1x1x3x256xf32> to vector<1x3x256xf32>
    %19 = vector.shape_cast %3 : vector<1x3x256xf32> to vector<1x1x3x256xf32>
    tpu.vector_store %arg6[%c1, %c0_17, %c5_18, %c0_19], %19 {strides = array<i32>} : memref<2x1x32x256xf32, #tpu.memory_space<vmem>>, vector<1x1x3x256xf32>,
    %c1_20 = arith.constant 1 : index
    %c0_21 = arith.constant 0 : index
    %c24_22 = arith.constant 24 : index
    %c0_23 = arith.constant 0 : index
    %20 = vector.load %arg6[%c1_20, %c0_21, %c24_22, %c0_23] : memref<2x1x32x256xf32, #tpu.memory_space<vmem>>, vector<1x1x3x256xf32>
    %21 = vector.shape_cast %20 : vector<1x1x3x256xf32> to vector<1x3x256xf32>
    %22 = vector.shape_cast %3 : vector<1x3x256xf32> to vector<1x1x3x256xf32>
    tpu.vector_store %arg6[%c1_20, %c0_21, %c24_22, %c0_23], %22 {strides = array<i32>} : memref<2x1x32x256xf32, #tpu.memory_space<vmem>>, vector<1x1x3x256xf32>,
    %c1_24 = arith.constant 1 : index
    %c0_25 = arith.constant 0 : index
    %c8_26 = arith.constant 8 : index
    %c125_27 = arith.constant 125 : index
    %23 = vector.load %arg6[%c1_24, %c0_25, %c8_26, %c125_27] : memref<2x1x32x256xf32, #tpu.memory_space<vmem>>, vector<1x1x16x3xf32>
    %24 = vector.shape_cast %23 : vector<1x1x16x3xf32> to vector<1x16x3xf32>
    %25 = vector.shape_cast %4 : vector<1x16x3xf32> to vector<1x1x16x3xf32>
    tpu.vector_store %arg6[%c1_24, %c0_25, %c8_26, %c125_27], %25 {strides = array<i32>} : memref<2x1x32x256xf32, #tpu.memory_space<vmem>>, vector<1x1x16x3xf32>,
    %c1_28 = arith.constant 1 : index
    %c0_29 = arith.constant 0 : index
    %c8_30 = arith.constant 8 : index
    %c144_31 = arith.constant 144 : index
    %26 = vector.load %arg6[%c1_28, %c0_29, %c8_30, %c144_31] : memref<2x1x32x256xf32, #tpu.memory_space<vmem>>, vector<1x1x16x3xf32>
    %27 = vector.shape_cast %26 : vector<1x1x16x3xf32> to vector<1x16x3xf32>
    %28 = vector.shape_cast %4 : vector<1x16x3xf32> to vector<1x1x16x3xf32>
    tpu.vector_store %arg6[%c1_28, %c0_29, %c8_30, %c144_31], %28 {strides = array<i32>} : memref<2x1x32x256xf32, #tpu.memory_space<vmem>>, vector<1x1x16x3xf32>,
    %c0_32 = arith.constant 0 : index
    %c0_33 = arith.constant 0 : index
    %c8_34 = arith.constant 8 : index
    %c128 = arith.constant 128 : index
    %29 = vector.load %arg6[%c0_32, %c0_33, %c8_34, %c128] : memref<2x1x32x256xf32, #tpu.memory_space<vmem>>, vector<1x1x16x16xf32>
    %30 = vector.shape_cast %29 : vector<1x1x16x16xf32> to vector<1x16x16xf32>
    %31 = vector.shape_cast %1 : vector<1x16x16xf32> to vector<1x1x16x16xf32>
    tpu.vector_store %arg6[%c0_32, %c0_33, %c8_34, %c128], %31 {strides = array<i32>} : memref<2x1x32x256xf32, #tpu.memory_space<vmem>>, vector<1x1x16x16xf32>,
    %c1_35 = arith.constant 1 : index
    %c0_36 = arith.constant 0 : index
    %c8_37 = arith.constant 8 : index
    %c128_38 = arith.constant 128 : index
    %32 = vector.load %arg6[%c1_35, %c0_36, %c8_37, %c128_38] : memref<2x1x32x256xf32, #tpu.memory_space<vmem>>, vector<1x1x16x16xf32>
    %33 = vector.shape_cast %32 : vector<1x1x16x16xf32> to vector<1x16x16xf32>
    %34 = vector.shape_cast %2 : vector<1x16x16xf32> to vector<1x1x16x16xf32>
    tpu.vector_store %arg6[%c1_35, %c0_36, %c8_37, %c128_38], %34 {strides = array<i32>} : memref<2x1x32x256xf32, #tpu.memory_space<vmem>>, vector<1x1x16x16xf32>,
    %c0_39 = arith.constant 0 : index
    %c0_40 = arith.constant 0 : index
    %c0_41 = arith.constant 0 : index
    %c0_42 = arith.constant 0 : index
    %35 = vector.load %arg6[%c0_39, %c0_40, %c0_41, %c0_42] : memref<2x1x32x256xf32, #tpu.memory_space<vmem>>, vector<1x1x32x256xf32>
    %36 = vector.shape_cast %35 : vector<1x1x32x256xf32> to vector<1x32x256xf32>
    %37 = vector.extract_strided_slice %36 {offsets = [0, 0, 125], sizes = [1, 32, 16], strides = [1, 1, 1]} : vector<1x32x256xf32> to vector<1x32x16xf32>
    %38 = vector.extract_strided_slice %36 {offsets = [0, 0, 126], sizes = [1, 32, 16], strides = [1, 1, 1]} : vector<1x32x256xf32> to vector<1x32x16xf32>
    %39 = vector.extract_strided_slice %36 {offsets = [0, 0, 127], sizes = [1, 32, 16], strides = [1, 1, 1]} : vector<1x32x256xf32> to vector<1x32x16xf32>
    %40 = vector.extract_strided_slice %36 {offsets = [0, 0, 128], sizes = [1, 32, 16], strides = [1, 1, 1]} : vector<1x32x256xf32> to vector<1x32x16xf32>
    %41 = vector.extract_strided_slice %36 {offsets = [0, 0, 129], sizes = [1, 32, 16], strides = [1, 1, 1]} : vector<1x32x256xf32> to vector<1x32x16xf32>
    %42 = vector.extract_strided_slice %36 {offsets = [0, 0, 130], sizes = [1, 32, 16], strides = [1, 1, 1]} : vector<1x32x256xf32> to vector<1x32x16xf32>
    %43 = vector.extract_strided_slice %36 {offsets = [0, 0, 131], sizes = [1, 32, 16], strides = [1, 1, 1]} : vector<1x32x256xf32> to vector<1x32x16xf32>
    %cst_43 = arith.constant 0.000000e+00 : f32
    %44 = vector.broadcast %cst_43 : f32 to vector<1x16x16xf32>
    %c0_44 = arith.constant 0 : index
    %45 = memref.load %arg1[%c0_44] : memref<98xf32, #tpu.memory_space<smem>>
    %46 = vector.broadcast %45 : f32 to vector<1x32x16xf32>
    %47 = arith.mulf %37, %46 : vector<1x32x16xf32>
    %c1_45 = arith.constant 1 : index
    %48 = memref.load %arg1[%c1_45] : memref<98xf32, #tpu.memory_space<smem>>
    %49 = vector.broadcast %48 : f32 to vector<1x32x16xf32>
    %50 = arith.mulf %38, %49 : vector<1x32x16xf32>
    %51 = arith.addf %47, %50 : vector<1x32x16xf32>
    %c2 = arith.constant 2 : index
    %52 = memref.load %arg1[%c2] : memref<98xf32, #tpu.memory_space<smem>>
    %53 = vector.broadcast %52 : f32 to vector<1x32x16xf32>
    %54 = arith.mulf %39, %53 : vector<1x32x16xf32>
    %55 = arith.addf %51, %54 : vector<1x32x16xf32>
    %c3 = arith.constant 3 : index
    %56 = memref.load %arg1[%c3] : memref<98xf32, #tpu.memory_space<smem>>
    %57 = vector.broadcast %56 : f32 to vector<1x32x16xf32>
    %58 = arith.mulf %40, %57 : vector<1x32x16xf32>
    %59 = arith.addf %55, %58 : vector<1x32x16xf32>
    %c4 = arith.constant 4 : index
    %60 = memref.load %arg1[%c4] : memref<98xf32, #tpu.memory_space<smem>>
    %61 = vector.broadcast %60 : f32 to vector<1x32x16xf32>
    %62 = arith.mulf %41, %61 : vector<1x32x16xf32>
    %63 = arith.addf %59, %62 : vector<1x32x16xf32>
    %c5_46 = arith.constant 5 : index
    %64 = memref.load %arg1[%c5_46] : memref<98xf32, #tpu.memory_space<smem>>
    %65 = vector.broadcast %64 : f32 to vector<1x32x16xf32>
    %66 = arith.mulf %42, %65 : vector<1x32x16xf32>
    %67 = arith.addf %63, %66 : vector<1x32x16xf32>
    %c6 = arith.constant 6 : index
    %68 = memref.load %arg1[%c6] : memref<98xf32, #tpu.memory_space<smem>>
    %69 = vector.broadcast %68 : f32 to vector<1x32x16xf32>
    %70 = arith.mulf %43, %69 : vector<1x32x16xf32>
    %71 = arith.addf %67, %70 : vector<1x32x16xf32>
    %72 = vector.extract_strided_slice %71 {offsets = [0, 5, 0], sizes = [1, 16, 16], strides = [1, 1, 1]} : vector<1x32x16xf32> to vector<1x16x16xf32>
    %73 = arith.addf %44, %72 : vector<1x16x16xf32>
    %c7 = arith.constant 7 : index
    %74 = memref.load %arg1[%c7] : memref<98xf32, #tpu.memory_space<smem>>
    %75 = vector.broadcast %74 : f32 to vector<1x32x16xf32>
    %76 = arith.mulf %37, %75 : vector<1x32x16xf32>
    %c8_47 = arith.constant 8 : index
    %77 = memref.load %arg1[%c8_47] : memref<98xf32, #tpu.memory_space<smem>>
    %78 = vector.broadcast %77 : f32 to vector<1x32x16xf32>
    %79 = arith.mulf %38, %78 : vector<1x32x16xf32>
    %80 = arith.addf %76, %79 : vector<1x32x16xf32>
    %c9 = arith.constant 9 : index
    %81 = memref.load %arg1[%c9] : memref<98xf32, #tpu.memory_space<smem>>
    %82 = vector.broadcast %81 : f32 to vector<1x32x16xf32>
    %83 = arith.mulf %39, %82 : vector<1x32x16xf32>
    %84 = arith.addf %80, %83 : vector<1x32x16xf32>
    %c10 = arith.constant 10 : index
    %85 = memref.load %arg1[%c10] : memref<98xf32, #tpu.memory_space<smem>>
    %86 = vector.broadcast %85 : f32 to vector<1x32x16xf32>
    %87 = arith.mulf %40, %86 : vector<1x32x16xf32>
    %88 = arith.addf %84, %87 : vector<1x32x16xf32>
    %c11 = arith.constant 11 : index
    %89 = memref.load %arg1[%c11] : memref<98xf32, #tpu.memory_space<smem>>
    %90 = vector.broadcast %89 : f32 to vector<1x32x16xf32>
    %91 = arith.mulf %41, %90 : vector<1x32x16xf32>
    %92 = arith.addf %88, %91 : vector<1x32x16xf32>
    %c12 = arith.constant 12 : index
    %93 = memref.load %arg1[%c12] : memref<98xf32, #tpu.memory_space<smem>>
    %94 = vector.broadcast %93 : f32 to vector<1x32x16xf32>
    %95 = arith.mulf %42, %94 : vector<1x32x16xf32>
    %96 = arith.addf %92, %95 : vector<1x32x16xf32>
    %c13 = arith.constant 13 : index
    %97 = memref.load %arg1[%c13] : memref<98xf32, #tpu.memory_space<smem>>
    %98 = vector.broadcast %97 : f32 to vector<1x32x16xf32>
    %99 = arith.mulf %43, %98 : vector<1x32x16xf32>
    %100 = arith.addf %96, %99 : vector<1x32x16xf32>
    %101 = vector.extract_strided_slice %100 {offsets = [0, 6, 0], sizes = [1, 16, 16], strides = [1, 1, 1]} : vector<1x32x16xf32> to vector<1x16x16xf32>
    %102 = arith.addf %73, %101 : vector<1x16x16xf32>
    %c14 = arith.constant 14 : index
    %103 = memref.load %arg1[%c14] : memref<98xf32, #tpu.memory_space<smem>>
    %104 = vector.broadcast %103 : f32 to vector<1x32x16xf32>
    %105 = arith.mulf %37, %104 : vector<1x32x16xf32>
    %c15 = arith.constant 15 : index
    %106 = memref.load %arg1[%c15] : memref<98xf32, #tpu.memory_space<smem>>
    %107 = vector.broadcast %106 : f32 to vector<1x32x16xf32>
    %108 = arith.mulf %38, %107 : vector<1x32x16xf32>
    %109 = arith.addf %105, %108 : vector<1x32x16xf32>
    %c16 = arith.constant 16 : index
    %110 = memref.load %arg1[%c16] : memref<98xf32, #tpu.memory_space<smem>>
    %111 = vector.broadcast %110 : f32 to vector<1x32x16xf32>
    %112 = arith.mulf %39, %111 : vector<1x32x16xf32>
    %113 = arith.addf %109, %112 : vector<1x32x16xf32>
    %c17 = arith.constant 17 : index
    %114 = memref.load %arg1[%c17] : memref<98xf32, #tpu.memory_space<smem>>
    %115 = vector.broadcast %114 : f32 to vector<1x32x16xf32>
    %116 = arith.mulf %40, %115 : vector<1x32x16xf32>
    %117 = arith.addf %113, %116 : vector<1x32x16xf32>
    %c18 = arith.constant 18 : index
    %118 = memref.load %arg1[%c18] : memref<98xf32, #tpu.memory_space<smem>>
    %119 = vector.broadcast %118 : f32 to vector<1x32x16xf32>
    %120 = arith.mulf %41, %119 : vector<1x32x16xf32>
    %121 = arith.addf %117, %120 : vector<1x32x16xf32>
    %c19 = arith.constant 19 : index
    %122 = memref.load %arg1[%c19] : memref<98xf32, #tpu.memory_space<smem>>
    %123 = vector.broadcast %122 : f32 to vector<1x32x16xf32>
    %124 = arith.mulf %42, %123 : vector<1x32x16xf32>
    %125 = arith.addf %121, %124 : vector<1x32x16xf32>
    %c20 = arith.constant 20 : index
    %126 = memref.load %arg1[%c20] : memref<98xf32, #tpu.memory_space<smem>>
    %127 = vector.broadcast %126 : f32 to vector<1x32x16xf32>
    %128 = arith.mulf %43, %127 : vector<1x32x16xf32>
    %129 = arith.addf %125, %128 : vector<1x32x16xf32>
    %130 = vector.extract_strided_slice %129 {offsets = [0, 7, 0], sizes = [1, 16, 16], strides = [1, 1, 1]} : vector<1x32x16xf32> to vector<1x16x16xf32>
    %131 = arith.addf %102, %130 : vector<1x16x16xf32>
    %c21 = arith.constant 21 : index
    %132 = memref.load %arg1[%c21] : memref<98xf32, #tpu.memory_space<smem>>
    %133 = vector.broadcast %132 : f32 to vector<1x32x16xf32>
    %134 = arith.mulf %37, %133 : vector<1x32x16xf32>
    %c22 = arith.constant 22 : index
    %135 = memref.load %arg1[%c22] : memref<98xf32, #tpu.memory_space<smem>>
    %136 = vector.broadcast %135 : f32 to vector<1x32x16xf32>
    %137 = arith.mulf %38, %136 : vector<1x32x16xf32>
    %138 = arith.addf %134, %137 : vector<1x32x16xf32>
    %c23 = arith.constant 23 : index
    %139 = memref.load %arg1[%c23] : memref<98xf32, #tpu.memory_space<smem>>
    %140 = vector.broadcast %139 : f32 to vector<1x32x16xf32>
    %141 = arith.mulf %39, %140 : vector<1x32x16xf32>
    %142 = arith.addf %138, %141 : vector<1x32x16xf32>
    %c24_48 = arith.constant 24 : index
    %143 = memref.load %arg1[%c24_48] : memref<98xf32, #tpu.memory_space<smem>>
    %144 = vector.broadcast %143 : f32 to vector<1x32x16xf32>
    %145 = arith.mulf %40, %144 : vector<1x32x16xf32>
    %146 = arith.addf %142, %145 : vector<1x32x16xf32>
    %c25 = arith.constant 25 : index
    %147 = memref.load %arg1[%c25] : memref<98xf32, #tpu.memory_space<smem>>
    %148 = vector.broadcast %147 : f32 to vector<1x32x16xf32>
    %149 = arith.mulf %41, %148 : vector<1x32x16xf32>
    %150 = arith.addf %146, %149 : vector<1x32x16xf32>
    %c26 = arith.constant 26 : index
    %151 = memref.load %arg1[%c26] : memref<98xf32, #tpu.memory_space<smem>>
    %152 = vector.broadcast %151 : f32 to vector<1x32x16xf32>
    %153 = arith.mulf %42, %152 : vector<1x32x16xf32>
    %154 = arith.addf %150, %153 : vector<1x32x16xf32>
    %c27 = arith.constant 27 : index
    %155 = memref.load %arg1[%c27] : memref<98xf32, #tpu.memory_space<smem>>
    %156 = vector.broadcast %155 : f32 to vector<1x32x16xf32>
    %157 = arith.mulf %43, %156 : vector<1x32x16xf32>
    %158 = arith.addf %154, %157 : vector<1x32x16xf32>
    %159 = vector.extract_strided_slice %158 {offsets = [0, 8, 0], sizes = [1, 16, 16], strides = [1, 1, 1]} : vector<1x32x16xf32> to vector<1x16x16xf32>
    %160 = arith.addf %131, %159 : vector<1x16x16xf32>
    %c28 = arith.constant 28 : index
    %161 = memref.load %arg1[%c28] : memref<98xf32, #tpu.memory_space<smem>>
    %162 = vector.broadcast %161 : f32 to vector<1x32x16xf32>
    %163 = arith.mulf %37, %162 : vector<1x32x16xf32>
    %c29 = arith.constant 29 : index
    %164 = memref.load %arg1[%c29] : memref<98xf32, #tpu.memory_space<smem>>
    %165 = vector.broadcast %164 : f32 to vector<1x32x16xf32>
    %166 = arith.mulf %38, %165 : vector<1x32x16xf32>
    %167 = arith.addf %163, %166 : vector<1x32x16xf32>
    %c30 = arith.constant 30 : index
    %168 = memref.load %arg1[%c30] : memref<98xf32, #tpu.memory_space<smem>>
    %169 = vector.broadcast %168 : f32 to vector<1x32x16xf32>
    %170 = arith.mulf %39, %169 : vector<1x32x16xf32>
    %171 = arith.addf %167, %170 : vector<1x32x16xf32>
    %c31 = arith.constant 31 : index
    %172 = memref.load %arg1[%c31] : memref<98xf32, #tpu.memory_space<smem>>
    %173 = vector.broadcast %172 : f32 to vector<1x32x16xf32>
    %174 = arith.mulf %40, %173 : vector<1x32x16xf32>
    %175 = arith.addf %171, %174 : vector<1x32x16xf32>
    %c32 = arith.constant 32 : index
    %176 = memref.load %arg1[%c32] : memref<98xf32, #tpu.memory_space<smem>>
    %177 = vector.broadcast %176 : f32 to vector<1x32x16xf32>
    %178 = arith.mulf %41, %177 : vector<1x32x16xf32>
    %179 = arith.addf %175, %178 : vector<1x32x16xf32>
    %c33 = arith.constant 33 : index
    %180 = memref.load %arg1[%c33] : memref<98xf32, #tpu.memory_space<smem>>
    %181 = vector.broadcast %180 : f32 to vector<1x32x16xf32>
    %182 = arith.mulf %42, %181 : vector<1x32x16xf32>
    %183 = arith.addf %179, %182 : vector<1x32x16xf32>
    %c34 = arith.constant 34 : index
    %184 = memref.load %arg1[%c34] : memref<98xf32, #tpu.memory_space<smem>>
    %185 = vector.broadcast %184 : f32 to vector<1x32x16xf32>
    %186 = arith.mulf %43, %185 : vector<1x32x16xf32>
    %187 = arith.addf %183, %186 : vector<1x32x16xf32>
    %188 = vector.extract_strided_slice %187 {offsets = [0, 9, 0], sizes = [1, 16, 16], strides = [1, 1, 1]} : vector<1x32x16xf32> to vector<1x16x16xf32>
    %189 = arith.addf %160, %188 : vector<1x16x16xf32>
    %c35 = arith.constant 35 : index
    %190 = memref.load %arg1[%c35] : memref<98xf32, #tpu.memory_space<smem>>
    %191 = vector.broadcast %190 : f32 to vector<1x32x16xf32>
    %192 = arith.mulf %37, %191 : vector<1x32x16xf32>
    %c36 = arith.constant 36 : index
    %193 = memref.load %arg1[%c36] : memref<98xf32, #tpu.memory_space<smem>>
    %194 = vector.broadcast %193 : f32 to vector<1x32x16xf32>
    %195 = arith.mulf %38, %194 : vector<1x32x16xf32>
    %196 = arith.addf %192, %195 : vector<1x32x16xf32>
    %c37 = arith.constant 37 : index
    %197 = memref.load %arg1[%c37] : memref<98xf32, #tpu.memory_space<smem>>
    %198 = vector.broadcast %197 : f32 to vector<1x32x16xf32>
    %199 = arith.mulf %39, %198 : vector<1x32x16xf32>
    %200 = arith.addf %196, %199 : vector<1x32x16xf32>
    %c38 = arith.constant 38 : index
    %201 = memref.load %arg1[%c38] : memref<98xf32, #tpu.memory_space<smem>>
    %202 = vector.broadcast %201 : f32 to vector<1x32x16xf32>
    %203 = arith.mulf %40, %202 : vector<1x32x16xf32>
    %204 = arith.addf %200, %203 : vector<1x32x16xf32>
    %c39 = arith.constant 39 : index
    %205 = memref.load %arg1[%c39] : memref<98xf32, #tpu.memory_space<smem>>
    %206 = vector.broadcast %205 : f32 to vector<1x32x16xf32>
    %207 = arith.mulf %41, %206 : vector<1x32x16xf32>
    %208 = arith.addf %204, %207 : vector<1x32x16xf32>
    %c40 = arith.constant 40 : index
    %209 = memref.load %arg1[%c40] : memref<98xf32, #tpu.memory_space<smem>>
    %210 = vector.broadcast %209 : f32 to vector<1x32x16xf32>
    %211 = arith.mulf %42, %210 : vector<1x32x16xf32>
    %212 = arith.addf %208, %211 : vector<1x32x16xf32>
    %c41 = arith.constant 41 : index
    %213 = memref.load %arg1[%c41] : memref<98xf32, #tpu.memory_space<smem>>
    %214 = vector.broadcast %213 : f32 to vector<1x32x16xf32>
    %215 = arith.mulf %43, %214 : vector<1x32x16xf32>
    %216 = arith.addf %212, %215 : vector<1x32x16xf32>
    %217 = vector.extract_strided_slice %216 {offsets = [0, 10, 0], sizes = [1, 16, 16], strides = [1, 1, 1]} : vector<1x32x16xf32> to vector<1x16x16xf32>
    %218 = arith.addf %189, %217 : vector<1x16x16xf32>
    %c42 = arith.constant 42 : index
    %219 = memref.load %arg1[%c42] : memref<98xf32, #tpu.memory_space<smem>>
    %220 = vector.broadcast %219 : f32 to vector<1x32x16xf32>
    %221 = arith.mulf %37, %220 : vector<1x32x16xf32>
    %c43 = arith.constant 43 : index
    %222 = memref.load %arg1[%c43] : memref<98xf32, #tpu.memory_space<smem>>
    %223 = vector.broadcast %222 : f32 to vector<1x32x16xf32>
    %224 = arith.mulf %38, %223 : vector<1x32x16xf32>
    %225 = arith.addf %221, %224 : vector<1x32x16xf32>
    %c44 = arith.constant 44 : index
    %226 = memref.load %arg1[%c44] : memref<98xf32, #tpu.memory_space<smem>>
    %227 = vector.broadcast %226 : f32 to vector<1x32x16xf32>
    %228 = arith.mulf %39, %227 : vector<1x32x16xf32>
    %229 = arith.addf %225, %228 : vector<1x32x16xf32>
    %c45 = arith.constant 45 : index
    %230 = memref.load %arg1[%c45] : memref<98xf32, #tpu.memory_space<smem>>
    %231 = vector.broadcast %230 : f32 to vector<1x32x16xf32>
    %232 = arith.mulf %40, %231 : vector<1x32x16xf32>
    %233 = arith.addf %229, %232 : vector<1x32x16xf32>
    %c46 = arith.constant 46 : index
    %234 = memref.load %arg1[%c46] : memref<98xf32, #tpu.memory_space<smem>>
    %235 = vector.broadcast %234 : f32 to vector<1x32x16xf32>
    %236 = arith.mulf %41, %235 : vector<1x32x16xf32>
    %237 = arith.addf %233, %236 : vector<1x32x16xf32>
    %c47 = arith.constant 47 : index
    %238 = memref.load %arg1[%c47] : memref<98xf32, #tpu.memory_space<smem>>
    %239 = vector.broadcast %238 : f32 to vector<1x32x16xf32>
    %240 = arith.mulf %42, %239 : vector<1x32x16xf32>
    %241 = arith.addf %237, %240 : vector<1x32x16xf32>
    %c48 = arith.constant 48 : index
    %242 = memref.load %arg1[%c48] : memref<98xf32, #tpu.memory_space<smem>>
    %243 = vector.broadcast %242 : f32 to vector<1x32x16xf32>
    %244 = arith.mulf %43, %243 : vector<1x32x16xf32>
    %245 = arith.addf %241, %244 : vector<1x32x16xf32>
    %246 = vector.extract_strided_slice %245 {offsets = [0, 11, 0], sizes = [1, 16, 16], strides = [1, 1, 1]} : vector<1x32x16xf32> to vector<1x16x16xf32>
    %247 = arith.addf %218, %246 : vector<1x16x16xf32>
    %c1_49 = arith.constant 1 : index
    %c0_50 = arith.constant 0 : index
    %c0_51 = arith.constant 0 : index
    %c0_52 = arith.constant 0 : index
    %248 = vector.load %arg6[%c1_49, %c0_50, %c0_51, %c0_52] : memref<2x1x32x256xf32, #tpu.memory_space<vmem>>, vector<1x1x32x256xf32>
    %249 = vector.shape_cast %248 : vector<1x1x32x256xf32> to vector<1x32x256xf32>
    %250 = vector.extract_strided_slice %249 {offsets = [0, 0, 125], sizes = [1, 32, 16], strides = [1, 1, 1]} : vector<1x32x256xf32> to vector<1x32x16xf32>
    %251 = vector.extract_strided_slice %249 {offsets = [0, 0, 126], sizes = [1, 32, 16], strides = [1, 1, 1]} : vector<1x32x256xf32> to vector<1x32x16xf32>
    %252 = vector.extract_strided_slice %249 {offsets = [0, 0, 127], sizes = [1, 32, 16], strides = [1, 1, 1]} : vector<1x32x256xf32> to vector<1x32x16xf32>
    %253 = vector.extract_strided_slice %249 {offsets = [0, 0, 128], sizes = [1, 32, 16], strides = [1, 1, 1]} : vector<1x32x256xf32> to vector<1x32x16xf32>
    %254 = vector.extract_strided_slice %249 {offsets = [0, 0, 129], sizes = [1, 32, 16], strides = [1, 1, 1]} : vector<1x32x256xf32> to vector<1x32x16xf32>
    %255 = vector.extract_strided_slice %249 {offsets = [0, 0, 130], sizes = [1, 32, 16], strides = [1, 1, 1]} : vector<1x32x256xf32> to vector<1x32x16xf32>
    %256 = vector.extract_strided_slice %249 {offsets = [0, 0, 131], sizes = [1, 32, 16], strides = [1, 1, 1]} : vector<1x32x256xf32> to vector<1x32x16xf32>
    %cst_53 = arith.constant 0.000000e+00 : f32
    %257 = vector.broadcast %cst_53 : f32 to vector<1x16x16xf32>
    %c49 = arith.constant 49 : index
    %258 = memref.load %arg1[%c49] : memref<98xf32, #tpu.memory_space<smem>>
    %259 = vector.broadcast %258 : f32 to vector<1x32x16xf32>
    %260 = arith.mulf %250, %259 : vector<1x32x16xf32>
    %c50 = arith.constant 50 : index
    %261 = memref.load %arg1[%c50] : memref<98xf32, #tpu.memory_space<smem>>
    %262 = vector.broadcast %261 : f32 to vector<1x32x16xf32>
    %263 = arith.mulf %251, %262 : vector<1x32x16xf32>
    %264 = arith.addf %260, %263 : vector<1x32x16xf32>
    %c51 = arith.constant 51 : index
    %265 = memref.load %arg1[%c51] : memref<98xf32, #tpu.memory_space<smem>>
    %266 = vector.broadcast %265 : f32 to vector<1x32x16xf32>
    %267 = arith.mulf %252, %266 : vector<1x32x16xf32>
    %268 = arith.addf %264, %267 : vector<1x32x16xf32>
    %c52 = arith.constant 52 : index
    %269 = memref.load %arg1[%c52] : memref<98xf32, #tpu.memory_space<smem>>
    %270 = vector.broadcast %269 : f32 to vector<1x32x16xf32>
    %271 = arith.mulf %253, %270 : vector<1x32x16xf32>
    %272 = arith.addf %268, %271 : vector<1x32x16xf32>
    %c53 = arith.constant 53 : index
    %273 = memref.load %arg1[%c53] : memref<98xf32, #tpu.memory_space<smem>>
    %274 = vector.broadcast %273 : f32 to vector<1x32x16xf32>
    %275 = arith.mulf %254, %274 : vector<1x32x16xf32>
    %276 = arith.addf %272, %275 : vector<1x32x16xf32>
    %c54 = arith.constant 54 : index
    %277 = memref.load %arg1[%c54] : memref<98xf32, #tpu.memory_space<smem>>
    %278 = vector.broadcast %277 : f32 to vector<1x32x16xf32>
    %279 = arith.mulf %255, %278 : vector<1x32x16xf32>
    %280 = arith.addf %276, %279 : vector<1x32x16xf32>
    %c55 = arith.constant 55 : index
    %281 = memref.load %arg1[%c55] : memref<98xf32, #tpu.memory_space<smem>>
    %282 = vector.broadcast %281 : f32 to vector<1x32x16xf32>
    %283 = arith.mulf %256, %282 : vector<1x32x16xf32>
    %284 = arith.addf %280, %283 : vector<1x32x16xf32>
    %285 = vector.extract_strided_slice %284 {offsets = [0, 5, 0], sizes = [1, 16, 16], strides = [1, 1, 1]} : vector<1x32x16xf32> to vector<1x16x16xf32>
    %286 = arith.addf %257, %285 : vector<1x16x16xf32>
    %c56 = arith.constant 56 : index
    %287 = memref.load %arg1[%c56] : memref<98xf32, #tpu.memory_space<smem>>
    %288 = vector.broadcast %287 : f32 to vector<1x32x16xf32>
    %289 = arith.mulf %250, %288 : vector<1x32x16xf32>
    %c57 = arith.constant 57 : index
    %290 = memref.load %arg1[%c57] : memref<98xf32, #tpu.memory_space<smem>>
    %291 = vector.broadcast %290 : f32 to vector<1x32x16xf32>
    %292 = arith.mulf %251, %291 : vector<1x32x16xf32>
    %293 = arith.addf %289, %292 : vector<1x32x16xf32>
    %c58 = arith.constant 58 : index
    %294 = memref.load %arg1[%c58] : memref<98xf32, #tpu.memory_space<smem>>
    %295 = vector.broadcast %294 : f32 to vector<1x32x16xf32>
    %296 = arith.mulf %252, %295 : vector<1x32x16xf32>
    %297 = arith.addf %293, %296 : vector<1x32x16xf32>
    %c59 = arith.constant 59 : index
    %298 = memref.load %arg1[%c59] : memref<98xf32, #tpu.memory_space<smem>>
    %299 = vector.broadcast %298 : f32 to vector<1x32x16xf32>
    %300 = arith.mulf %253, %299 : vector<1x32x16xf32>
    %301 = arith.addf %297, %300 : vector<1x32x16xf32>
    %c60 = arith.constant 60 : index
    %302 = memref.load %arg1[%c60] : memref<98xf32, #tpu.memory_space<smem>>
    %303 = vector.broadcast %302 : f32 to vector<1x32x16xf32>
    %304 = arith.mulf %254, %303 : vector<1x32x16xf32>
    %305 = arith.addf %301, %304 : vector<1x32x16xf32>
    %c61 = arith.constant 61 : index
    %306 = memref.load %arg1[%c61] : memref<98xf32, #tpu.memory_space<smem>>
    %307 = vector.broadcast %306 : f32 to vector<1x32x16xf32>
    %308 = arith.mulf %255, %307 : vector<1x32x16xf32>
    %309 = arith.addf %305, %308 : vector<1x32x16xf32>
    %c62 = arith.constant 62 : index
    %310 = memref.load %arg1[%c62] : memref<98xf32, #tpu.memory_space<smem>>
    %311 = vector.broadcast %310 : f32 to vector<1x32x16xf32>
    %312 = arith.mulf %256, %311 : vector<1x32x16xf32>
    %313 = arith.addf %309, %312 : vector<1x32x16xf32>
    %314 = vector.extract_strided_slice %313 {offsets = [0, 6, 0], sizes = [1, 16, 16], strides = [1, 1, 1]} : vector<1x32x16xf32> to vector<1x16x16xf32>
    %315 = arith.addf %286, %314 : vector<1x16x16xf32>
    %c63 = arith.constant 63 : index
    %316 = memref.load %arg1[%c63] : memref<98xf32, #tpu.memory_space<smem>>
    %317 = vector.broadcast %316 : f32 to vector<1x32x16xf32>
    %318 = arith.mulf %250, %317 : vector<1x32x16xf32>
    %c64 = arith.constant 64 : index
    %319 = memref.load %arg1[%c64] : memref<98xf32, #tpu.memory_space<smem>>
    %320 = vector.broadcast %319 : f32 to vector<1x32x16xf32>
    %321 = arith.mulf %251, %320 : vector<1x32x16xf32>
    %322 = arith.addf %318, %321 : vector<1x32x16xf32>
    %c65 = arith.constant 65 : index
    %323 = memref.load %arg1[%c65] : memref<98xf32, #tpu.memory_space<smem>>
    %324 = vector.broadcast %323 : f32 to vector<1x32x16xf32>
    %325 = arith.mulf %252, %324 : vector<1x32x16xf32>
    %326 = arith.addf %322, %325 : vector<1x32x16xf32>
    %c66 = arith.constant 66 : index
    %327 = memref.load %arg1[%c66] : memref<98xf32, #tpu.memory_space<smem>>
    %328 = vector.broadcast %327 : f32 to vector<1x32x16xf32>
    %329 = arith.mulf %253, %328 : vector<1x32x16xf32>
    %330 = arith.addf %326, %329 : vector<1x32x16xf32>
    %c67 = arith.constant 67 : index
    %331 = memref.load %arg1[%c67] : memref<98xf32, #tpu.memory_space<smem>>
    %332 = vector.broadcast %331 : f32 to vector<1x32x16xf32>
    %333 = arith.mulf %254, %332 : vector<1x32x16xf32>
    %334 = arith.addf %330, %333 : vector<1x32x16xf32>
    %c68 = arith.constant 68 : index
    %335 = memref.load %arg1[%c68] : memref<98xf32, #tpu.memory_space<smem>>
    %336 = vector.broadcast %335 : f32 to vector<1x32x16xf32>
    %337 = arith.mulf %255, %336 : vector<1x32x16xf32>
    %338 = arith.addf %334, %337 : vector<1x32x16xf32>
    %c69 = arith.constant 69 : index
    %339 = memref.load %arg1[%c69] : memref<98xf32, #tpu.memory_space<smem>>
    %340 = vector.broadcast %339 : f32 to vector<1x32x16xf32>
    %341 = arith.mulf %256, %340 : vector<1x32x16xf32>
    %342 = arith.addf %338, %341 : vector<1x32x16xf32>
    %343 = vector.extract_strided_slice %342 {offsets = [0, 7, 0], sizes = [1, 16, 16], strides = [1, 1, 1]} : vector<1x32x16xf32> to vector<1x16x16xf32>
    %344 = arith.addf %315, %343 : vector<1x16x16xf32>
    %c70 = arith.constant 70 : index
    %345 = memref.load %arg1[%c70] : memref<98xf32, #tpu.memory_space<smem>>
    %346 = vector.broadcast %345 : f32 to vector<1x32x16xf32>
    %347 = arith.mulf %250, %346 : vector<1x32x16xf32>
    %c71 = arith.constant 71 : index
    %348 = memref.load %arg1[%c71] : memref<98xf32, #tpu.memory_space<smem>>
    %349 = vector.broadcast %348 : f32 to vector<1x32x16xf32>
    %350 = arith.mulf %251, %349 : vector<1x32x16xf32>
    %351 = arith.addf %347, %350 : vector<1x32x16xf32>
    %c72 = arith.constant 72 : index
    %352 = memref.load %arg1[%c72] : memref<98xf32, #tpu.memory_space<smem>>
    %353 = vector.broadcast %352 : f32 to vector<1x32x16xf32>
    %354 = arith.mulf %252, %353 : vector<1x32x16xf32>
    %355 = arith.addf %351, %354 : vector<1x32x16xf32>
    %c73 = arith.constant 73 : index
    %356 = memref.load %arg1[%c73] : memref<98xf32, #tpu.memory_space<smem>>
    %357 = vector.broadcast %356 : f32 to vector<1x32x16xf32>
    %358 = arith.mulf %253, %357 : vector<1x32x16xf32>
    %359 = arith.addf %355, %358 : vector<1x32x16xf32>
    %c74 = arith.constant 74 : index
    %360 = memref.load %arg1[%c74] : memref<98xf32, #tpu.memory_space<smem>>
    %361 = vector.broadcast %360 : f32 to vector<1x32x16xf32>
    %362 = arith.mulf %254, %361 : vector<1x32x16xf32>
    %363 = arith.addf %359, %362 : vector<1x32x16xf32>
    %c75 = arith.constant 75 : index
    %364 = memref.load %arg1[%c75] : memref<98xf32, #tpu.memory_space<smem>>
    %365 = vector.broadcast %364 : f32 to vector<1x32x16xf32>
    %366 = arith.mulf %255, %365 : vector<1x32x16xf32>
    %367 = arith.addf %363, %366 : vector<1x32x16xf32>
    %c76 = arith.constant 76 : index
    %368 = memref.load %arg1[%c76] : memref<98xf32, #tpu.memory_space<smem>>
    %369 = vector.broadcast %368 : f32 to vector<1x32x16xf32>
    %370 = arith.mulf %256, %369 : vector<1x32x16xf32>
    %371 = arith.addf %367, %370 : vector<1x32x16xf32>
    %372 = vector.extract_strided_slice %371 {offsets = [0, 8, 0], sizes = [1, 16, 16], strides = [1, 1, 1]} : vector<1x32x16xf32> to vector<1x16x16xf32>
    %373 = arith.addf %344, %372 : vector<1x16x16xf32>
    %c77 = arith.constant 77 : index
    %374 = memref.load %arg1[%c77] : memref<98xf32, #tpu.memory_space<smem>>
    %375 = vector.broadcast %374 : f32 to vector<1x32x16xf32>
    %376 = arith.mulf %250, %375 : vector<1x32x16xf32>
    %c78 = arith.constant 78 : index
    %377 = memref.load %arg1[%c78] : memref<98xf32, #tpu.memory_space<smem>>
    %378 = vector.broadcast %377 : f32 to vector<1x32x16xf32>
    %379 = arith.mulf %251, %378 : vector<1x32x16xf32>
    %380 = arith.addf %376, %379 : vector<1x32x16xf32>
    %c79 = arith.constant 79 : index
    %381 = memref.load %arg1[%c79] : memref<98xf32, #tpu.memory_space<smem>>
    %382 = vector.broadcast %381 : f32 to vector<1x32x16xf32>
    %383 = arith.mulf %252, %382 : vector<1x32x16xf32>
    %384 = arith.addf %380, %383 : vector<1x32x16xf32>
    %c80 = arith.constant 80 : index
    %385 = memref.load %arg1[%c80] : memref<98xf32, #tpu.memory_space<smem>>
    %386 = vector.broadcast %385 : f32 to vector<1x32x16xf32>
    %387 = arith.mulf %253, %386 : vector<1x32x16xf32>
    %388 = arith.addf %384, %387 : vector<1x32x16xf32>
    %c81 = arith.constant 81 : index
    %389 = memref.load %arg1[%c81] : memref<98xf32, #tpu.memory_space<smem>>
    %390 = vector.broadcast %389 : f32 to vector<1x32x16xf32>
    %391 = arith.mulf %254, %390 : vector<1x32x16xf32>
    %392 = arith.addf %388, %391 : vector<1x32x16xf32>
    %c82 = arith.constant 82 : index
    %393 = memref.load %arg1[%c82] : memref<98xf32, #tpu.memory_space<smem>>
    %394 = vector.broadcast %393 : f32 to vector<1x32x16xf32>
    %395 = arith.mulf %255, %394 : vector<1x32x16xf32>
    %396 = arith.addf %392, %395 : vector<1x32x16xf32>
    %c83 = arith.constant 83 : index
    %397 = memref.load %arg1[%c83] : memref<98xf32, #tpu.memory_space<smem>>
    %398 = vector.broadcast %397 : f32 to vector<1x32x16xf32>
    %399 = arith.mulf %256, %398 : vector<1x32x16xf32>
    %400 = arith.addf %396, %399 : vector<1x32x16xf32>
    %401 = vector.extract_strided_slice %400 {offsets = [0, 9, 0], sizes = [1, 16, 16], strides = [1, 1, 1]} : vector<1x32x16xf32> to vector<1x16x16xf32>
    %402 = arith.addf %373, %401 : vector<1x16x16xf32>
    %c84 = arith.constant 84 : index
    %403 = memref.load %arg1[%c84] : memref<98xf32, #tpu.memory_space<smem>>
    %404 = vector.broadcast %403 : f32 to vector<1x32x16xf32>
    %405 = arith.mulf %250, %404 : vector<1x32x16xf32>
    %c85 = arith.constant 85 : index
    %406 = memref.load %arg1[%c85] : memref<98xf32, #tpu.memory_space<smem>>
    %407 = vector.broadcast %406 : f32 to vector<1x32x16xf32>
    %408 = arith.mulf %251, %407 : vector<1x32x16xf32>
    %409 = arith.addf %405, %408 : vector<1x32x16xf32>
    %c86 = arith.constant 86 : index
    %410 = memref.load %arg1[%c86] : memref<98xf32, #tpu.memory_space<smem>>
    %411 = vector.broadcast %410 : f32 to vector<1x32x16xf32>
    %412 = arith.mulf %252, %411 : vector<1x32x16xf32>
    %413 = arith.addf %409, %412 : vector<1x32x16xf32>
    %c87 = arith.constant 87 : index
    %414 = memref.load %arg1[%c87] : memref<98xf32, #tpu.memory_space<smem>>
    %415 = vector.broadcast %414 : f32 to vector<1x32x16xf32>
    %416 = arith.mulf %253, %415 : vector<1x32x16xf32>
    %417 = arith.addf %413, %416 : vector<1x32x16xf32>
    %c88 = arith.constant 88 : index
    %418 = memref.load %arg1[%c88] : memref<98xf32, #tpu.memory_space<smem>>
    %419 = vector.broadcast %418 : f32 to vector<1x32x16xf32>
    %420 = arith.mulf %254, %419 : vector<1x32x16xf32>
    %421 = arith.addf %417, %420 : vector<1x32x16xf32>
    %c89 = arith.constant 89 : index
    %422 = memref.load %arg1[%c89] : memref<98xf32, #tpu.memory_space<smem>>
    %423 = vector.broadcast %422 : f32 to vector<1x32x16xf32>
    %424 = arith.mulf %255, %423 : vector<1x32x16xf32>
    %425 = arith.addf %421, %424 : vector<1x32x16xf32>
    %c90 = arith.constant 90 : index
    %426 = memref.load %arg1[%c90] : memref<98xf32, #tpu.memory_space<smem>>
    %427 = vector.broadcast %426 : f32 to vector<1x32x16xf32>
    %428 = arith.mulf %256, %427 : vector<1x32x16xf32>
    %429 = arith.addf %425, %428 : vector<1x32x16xf32>
    %430 = vector.extract_strided_slice %429 {offsets = [0, 10, 0], sizes = [1, 16, 16], strides = [1, 1, 1]} : vector<1x32x16xf32> to vector<1x16x16xf32>
    %431 = arith.addf %402, %430 : vector<1x16x16xf32>
    %c91 = arith.constant 91 : index
    %432 = memref.load %arg1[%c91] : memref<98xf32, #tpu.memory_space<smem>>
    %433 = vector.broadcast %432 : f32 to vector<1x32x16xf32>
    %434 = arith.mulf %250, %433 : vector<1x32x16xf32>
    %c92 = arith.constant 92 : index
    %435 = memref.load %arg1[%c92] : memref<98xf32, #tpu.memory_space<smem>>
    %436 = vector.broadcast %435 : f32 to vector<1x32x16xf32>
    %437 = arith.mulf %251, %436 : vector<1x32x16xf32>
    %438 = arith.addf %434, %437 : vector<1x32x16xf32>
    %c93 = arith.constant 93 : index
    %439 = memref.load %arg1[%c93] : memref<98xf32, #tpu.memory_space<smem>>
    %440 = vector.broadcast %439 : f32 to vector<1x32x16xf32>
    %441 = arith.mulf %252, %440 : vector<1x32x16xf32>
    %442 = arith.addf %438, %441 : vector<1x32x16xf32>
    %c94 = arith.constant 94 : index
    %443 = memref.load %arg1[%c94] : memref<98xf32, #tpu.memory_space<smem>>
    %444 = vector.broadcast %443 : f32 to vector<1x32x16xf32>
    %445 = arith.mulf %253, %444 : vector<1x32x16xf32>
    %446 = arith.addf %442, %445 : vector<1x32x16xf32>
    %c95 = arith.constant 95 : index
    %447 = memref.load %arg1[%c95] : memref<98xf32, #tpu.memory_space<smem>>
    %448 = vector.broadcast %447 : f32 to vector<1x32x16xf32>
    %449 = arith.mulf %254, %448 : vector<1x32x16xf32>
    %450 = arith.addf %446, %449 : vector<1x32x16xf32>
    %c96 = arith.constant 96 : index
    %451 = memref.load %arg1[%c96] : memref<98xf32, #tpu.memory_space<smem>>
    %452 = vector.broadcast %451 : f32 to vector<1x32x16xf32>
    %453 = arith.mulf %255, %452 : vector<1x32x16xf32>
    %454 = arith.addf %450, %453 : vector<1x32x16xf32>
    %c97 = arith.constant 97 : index
    %455 = memref.load %arg1[%c97] : memref<98xf32, #tpu.memory_space<smem>>
    %456 = vector.broadcast %455 : f32 to vector<1x32x16xf32>
    %457 = arith.mulf %256, %456 : vector<1x32x16xf32>
    %458 = arith.addf %454, %457 : vector<1x32x16xf32>
    %459 = vector.extract_strided_slice %458 {offsets = [0, 11, 0], sizes = [1, 16, 16], strides = [1, 1, 1]} : vector<1x32x16xf32> to vector<1x16x16xf32>
    %460 = arith.addf %431, %459 : vector<1x16x16xf32>
    %461 = arith.addf %247, %460 : vector<1x16x16xf32>
    %c0_54 = arith.constant 0 : index
    %462 = memref.load %arg2[%c0_54] : memref<1xf32, #tpu.memory_space<smem>>
    %463 = vector.broadcast %462 : f32 to vector<1x16x16xf32>
    %464 = arith.addf %461, %463 : vector<1x16x16xf32>
    %465 = arith.negf %464 : vector<1x16x16xf32>
    %466 = math.exp %465 : vector<1x16x16xf32>
    %cst_55 = arith.constant 1.000000e+00 : f32
    %467 = vector.broadcast %cst_55 : f32 to vector<1x16x16xf32>
    %468 = arith.addf %467, %466 : vector<1x16x16xf32>
    %469 = arith.divf %467, %468 : vector<1x16x16xf32>
    %470 = vector.extract_strided_slice %469 {offsets = [0, 0, 0], sizes = [1, 1, 16], strides = [1, 1, 1]} : vector<1x16x16xf32> to vector<1x1x16xf32>
    %471 = vector.shape_cast %470 : vector<1x1x16xf32> to vector<1x16xf32>
    %c0_56 = arith.constant 0 : index
    %c0_57 = arith.constant 0 : index
    %472 = vector.load %arg7[%c0_56, %c0_57] : memref<1x256xf32, #tpu.memory_space<vmem>>, vector<1x16xf32>
    tpu.vector_store %arg7[%c0_56, %c0_57], %471 {strides = array<i32>} : memref<1x256xf32, #tpu.memory_space<vmem>>, vector<1x16xf32>,
    %473 = vector.extract_strided_slice %469 {offsets = [0, 1, 0], sizes = [1, 1, 16], strides = [1, 1, 1]} : vector<1x16x16xf32> to vector<1x1x16xf32>
    %474 = vector.shape_cast %473 : vector<1x1x16xf32> to vector<1x16xf32>
    %c0_58 = arith.constant 0 : index
    %c16_59 = arith.constant 16 : index
    %475 = vector.load %arg7[%c0_58, %c16_59] : memref<1x256xf32, #tpu.memory_space<vmem>>, vector<1x16xf32>
    tpu.vector_store %arg7[%c0_58, %c16_59], %474 {strides = array<i32>} : memref<1x256xf32, #tpu.memory_space<vmem>>, vector<1x16xf32>,
    %476 = vector.extract_strided_slice %469 {offsets = [0, 2, 0], sizes = [1, 1, 16], strides = [1, 1, 1]} : vector<1x16x16xf32> to vector<1x1x16xf32>
    %477 = vector.shape_cast %476 : vector<1x1x16xf32> to vector<1x16xf32>
    %c0_60 = arith.constant 0 : index
    %c32_61 = arith.constant 32 : index
    %478 = vector.load %arg7[%c0_60, %c32_61] : memref<1x256xf32, #tpu.memory_space<vmem>>, vector<1x16xf32>
    tpu.vector_store %arg7[%c0_60, %c32_61], %477 {strides = array<i32>} : memref<1x256xf32, #tpu.memory_space<vmem>>, vector<1x16xf32>,
    %479 = vector.extract_strided_slice %469 {offsets = [0, 3, 0], sizes = [1, 1, 16], strides = [1, 1, 1]} : vector<1x16x16xf32> to vector<1x1x16xf32>
    %480 = vector.shape_cast %479 : vector<1x1x16xf32> to vector<1x16xf32>
    %c0_62 = arith.constant 0 : index
    %c48_63 = arith.constant 48 : index
    %481 = vector.load %arg7[%c0_62, %c48_63] : memref<1x256xf32, #tpu.memory_space<vmem>>, vector<1x16xf32>
    tpu.vector_store %arg7[%c0_62, %c48_63], %480 {strides = array<i32>} : memref<1x256xf32, #tpu.memory_space<vmem>>, vector<1x16xf32>,
    %482 = vector.extract_strided_slice %469 {offsets = [0, 4, 0], sizes = [1, 1, 16], strides = [1, 1, 1]} : vector<1x16x16xf32> to vector<1x1x16xf32>
    %483 = vector.shape_cast %482 : vector<1x1x16xf32> to vector<1x16xf32>
    %c0_64 = arith.constant 0 : index
    %c64_65 = arith.constant 64 : index
    %484 = vector.load %arg7[%c0_64, %c64_65] : memref<1x256xf32, #tpu.memory_space<vmem>>, vector<1x16xf32>
    tpu.vector_store %arg7[%c0_64, %c64_65], %483 {strides = array<i32>} : memref<1x256xf32, #tpu.memory_space<vmem>>, vector<1x16xf32>,
    %485 = vector.extract_strided_slice %469 {offsets = [0, 5, 0], sizes = [1, 1, 16], strides = [1, 1, 1]} : vector<1x16x16xf32> to vector<1x1x16xf32>
    %486 = vector.shape_cast %485 : vector<1x1x16xf32> to vector<1x16xf32>
    %c0_66 = arith.constant 0 : index
    %c80_67 = arith.constant 80 : index
    %487 = vector.load %arg7[%c0_66, %c80_67] : memref<1x256xf32, #tpu.memory_space<vmem>>, vector<1x16xf32>
    tpu.vector_store %arg7[%c0_66, %c80_67], %486 {strides = array<i32>} : memref<1x256xf32, #tpu.memory_space<vmem>>, vector<1x16xf32>,
    %488 = vector.extract_strided_slice %469 {offsets = [0, 6, 0], sizes = [1, 1, 16], strides = [1, 1, 1]} : vector<1x16x16xf32> to vector<1x1x16xf32>
    %489 = vector.shape_cast %488 : vector<1x1x16xf32> to vector<1x16xf32>
    %c0_68 = arith.constant 0 : index
    %c96_69 = arith.constant 96 : index
    %490 = vector.load %arg7[%c0_68, %c96_69] : memref<1x256xf32, #tpu.memory_space<vmem>>, vector<1x16xf32>
    tpu.vector_store %arg7[%c0_68, %c96_69], %489 {strides = array<i32>} : memref<1x256xf32, #tpu.memory_space<vmem>>, vector<1x16xf32>,
    %491 = vector.extract_strided_slice %469 {offsets = [0, 7, 0], sizes = [1, 1, 16], strides = [1, 1, 1]} : vector<1x16x16xf32> to vector<1x1x16xf32>
    %492 = vector.shape_cast %491 : vector<1x1x16xf32> to vector<1x16xf32>
    %c0_70 = arith.constant 0 : index
    %c112 = arith.constant 112 : index
    %493 = vector.load %arg7[%c0_70, %c112] : memref<1x256xf32, #tpu.memory_space<vmem>>, vector<1x16xf32>
    tpu.vector_store %arg7[%c0_70, %c112], %492 {strides = array<i32>} : memref<1x256xf32, #tpu.memory_space<vmem>>, vector<1x16xf32>,
    %494 = vector.extract_strided_slice %469 {offsets = [0, 8, 0], sizes = [1, 1, 16], strides = [1, 1, 1]} : vector<1x16x16xf32> to vector<1x1x16xf32>
    %495 = vector.shape_cast %494 : vector<1x1x16xf32> to vector<1x16xf32>
    %c0_71 = arith.constant 0 : index
    %c128_72 = arith.constant 128 : index
    %496 = vector.load %arg7[%c0_71, %c128_72] : memref<1x256xf32, #tpu.memory_space<vmem>>, vector<1x16xf32>
    tpu.vector_store %arg7[%c0_71, %c128_72], %495 {strides = array<i32>} : memref<1x256xf32, #tpu.memory_space<vmem>>, vector<1x16xf32>,
    %497 = vector.extract_strided_slice %469 {offsets = [0, 9, 0], sizes = [1, 1, 16], strides = [1, 1, 1]} : vector<1x16x16xf32> to vector<1x1x16xf32>
    %498 = vector.shape_cast %497 : vector<1x1x16xf32> to vector<1x16xf32>
    %c0_73 = arith.constant 0 : index
    %c144_74 = arith.constant 144 : index
    %499 = vector.load %arg7[%c0_73, %c144_74] : memref<1x256xf32, #tpu.memory_space<vmem>>, vector<1x16xf32>
    tpu.vector_store %arg7[%c0_73, %c144_74], %498 {strides = array<i32>} : memref<1x256xf32, #tpu.memory_space<vmem>>, vector<1x16xf32>,
    %500 = vector.extract_strided_slice %469 {offsets = [0, 10, 0], sizes = [1, 1, 16], strides = [1, 1, 1]} : vector<1x16x16xf32> to vector<1x1x16xf32>
    %501 = vector.shape_cast %500 : vector<1x1x16xf32> to vector<1x16xf32>
    %c0_75 = arith.constant 0 : index
    %c160 = arith.constant 160 : index
    %502 = vector.load %arg7[%c0_75, %c160] : memref<1x256xf32, #tpu.memory_space<vmem>>, vector<1x16xf32>
    tpu.vector_store %arg7[%c0_75, %c160], %501 {strides = array<i32>} : memref<1x256xf32, #tpu.memory_space<vmem>>, vector<1x16xf32>,
    %503 = vector.extract_strided_slice %469 {offsets = [0, 11, 0], sizes = [1, 1, 16], strides = [1, 1, 1]} : vector<1x16x16xf32> to vector<1x1x16xf32>
    %504 = vector.shape_cast %503 : vector<1x1x16xf32> to vector<1x16xf32>
    %c0_76 = arith.constant 0 : index
    %c176 = arith.constant 176 : index
    %505 = vector.load %arg7[%c0_76, %c176] : memref<1x256xf32, #tpu.memory_space<vmem>>, vector<1x16xf32>
    tpu.vector_store %arg7[%c0_76, %c176], %504 {strides = array<i32>} : memref<1x256xf32, #tpu.memory_space<vmem>>, vector<1x16xf32>,
    %506 = vector.extract_strided_slice %469 {offsets = [0, 12, 0], sizes = [1, 1, 16], strides = [1, 1, 1]} : vector<1x16x16xf32> to vector<1x1x16xf32>
    %507 = vector.shape_cast %506 : vector<1x1x16xf32> to vector<1x16xf32>
    %c0_77 = arith.constant 0 : index
    %c192 = arith.constant 192 : index
    %508 = vector.load %arg7[%c0_77, %c192] : memref<1x256xf32, #tpu.memory_space<vmem>>, vector<1x16xf32>
    tpu.vector_store %arg7[%c0_77, %c192], %507 {strides = array<i32>} : memref<1x256xf32, #tpu.memory_space<vmem>>, vector<1x16xf32>,
    %509 = vector.extract_strided_slice %469 {offsets = [0, 13, 0], sizes = [1, 1, 16], strides = [1, 1, 1]} : vector<1x16x16xf32> to vector<1x1x16xf32>
    %510 = vector.shape_cast %509 : vector<1x1x16xf32> to vector<1x16xf32>
    %c0_78 = arith.constant 0 : index
    %c208 = arith.constant 208 : index
    %511 = vector.load %arg7[%c0_78, %c208] : memref<1x256xf32, #tpu.memory_space<vmem>>, vector<1x16xf32>
    tpu.vector_store %arg7[%c0_78, %c208], %510 {strides = array<i32>} : memref<1x256xf32, #tpu.memory_space<vmem>>, vector<1x16xf32>,
    %512 = vector.extract_strided_slice %469 {offsets = [0, 14, 0], sizes = [1, 1, 16], strides = [1, 1, 1]} : vector<1x16x16xf32> to vector<1x1x16xf32>
    %513 = vector.shape_cast %512 : vector<1x1x16xf32> to vector<1x16xf32>
    %c0_79 = arith.constant 0 : index
    %c224 = arith.constant 224 : index
    %514 = vector.load %arg7[%c0_79, %c224] : memref<1x256xf32, #tpu.memory_space<vmem>>, vector<1x16xf32>
    tpu.vector_store %arg7[%c0_79, %c224], %513 {strides = array<i32>} : memref<1x256xf32, #tpu.memory_space<vmem>>, vector<1x16xf32>,
    %515 = vector.extract_strided_slice %469 {offsets = [0, 15, 0], sizes = [1, 1, 16], strides = [1, 1, 1]} : vector<1x16x16xf32> to vector<1x1x16xf32>
    %516 = vector.shape_cast %515 : vector<1x1x16xf32> to vector<1x16xf32>
    %c0_80 = arith.constant 0 : index
    %c240 = arith.constant 240 : index
    %517 = vector.load %arg7[%c0_80, %c240] : memref<1x256xf32, #tpu.memory_space<vmem>>, vector<1x16xf32>
    tpu.vector_store %arg7[%c0_80, %c240], %516 {strides = array<i32>} : memref<1x256xf32, #tpu.memory_space<vmem>>, vector<1x16xf32>,
    %c0_81 = arith.constant 0 : index
    %c0_82 = arith.constant 0 : index
    %518 = vector.load %arg7[%c0_81, %c0_82] : memref<1x256xf32, #tpu.memory_space<vmem>>, vector<1x256xf32>
    %c0_83 = arith.constant 0 : index
    %c0_84 = arith.constant 0 : index
    %c0_85 = arith.constant 0 : index
    %519 = vector.load %arg3[%c0_83, %c0_84, %c0_85] : memref<1x4x256xf32, #tpu.memory_space<vmem>>, vector<1x4x256xf32>
    %520 = vector.shape_cast %518 : vector<1x256xf32> to vector<1x1x256xf32>
    %521 = vector.broadcast %520 : vector<1x1x256xf32> to vector<1x4x256xf32>
    %522 = arith.mulf %519, %521 : vector<1x4x256xf32>
    %c0_86 = arith.constant 0 : index
    %c0_87 = arith.constant 0 : index
    %c0_88 = arith.constant 0 : index
    %523 = vector.load %arg5[%c0_86, %c0_87, %c0_88] : memref<1x4x256xf32, #tpu.memory_space<vmem>>, vector<1x4x256xf32>
    tpu.vector_store %arg5[%c0_86, %c0_87, %c0_88], %522 {strides = array<i32>} : memref<1x4x256xf32, #tpu.memory_space<vmem>>, vector<1x4x256xf32>,
    return
  }
  func.func @transform_0(%arg0: i32) -> i32 {
    %c0_i32 = arith.constant 0 : i32
    %c0_i32_0 = arith.constant 0 : i32
    return %c0_i32 : i32
  }
  func.func @transform_1(%arg0: i32) -> i32 {
    %c0_i32 = arith.constant 0 : i32
    %c0_i32_0 = arith.constant 0 : i32
    return %c0_i32 : i32
  }
  func.func @transform_2(%arg0: i32) -> (i32, i32, i32) {
    %c0_i32 = arith.constant 0 : i32
    %c0_i32_0 = arith.constant 0 : i32
    %c0_i32_1 = arith.constant 0 : i32
    return %arg0, %c0_i32, %c0_i32_0 : i32, i32, i32
  }
  func.func @transform_3(%arg0: i32) -> (i32, i32, i32, i32) {
    %c0_i32 = arith.constant 0 : i32
    %c0_i32_0 = arith.constant 0 : i32
    %c0_i32_1 = arith.constant 0 : i32
    %c0_i32_2 = arith.constant 0 : i32
    return %arg0, %c0_i32, %c0_i32_0, %c0_i32_1 : i32, i32, i32, i32
  }
  func.func @transform_4(%arg0: i32) -> (i32, i32, i32) {
    %c0_i32 = arith.constant 0 : i32
    %c0_i32_0 = arith.constant 0 : i32
    %c0_i32_1 = arith.constant 0 : i32
    return %arg0, %c0_i32, %c0_i32_0 : i32, i32, i32
  }
}

</mosaic_0001>

<llo_original>
// kernel: tpu_custom_call.1
$region0: #{tpu_custom_call.1}
  #allocation0 [shape = 'u32[]', space=smem, size = 0x4, offset = 0x4, fixed_abs, tag = 'smem constant byte address 0x4 - core index']
  #allocation1 [shape = 'u32[144,128]{1,0:T(1,128)}', space=vmem, size = 0x12000, scoped, tag = 'internal scratch']
  #allocation2 [shape = 'f32[2,1,32,256]{3,2,1,0:T(8,128)}', space=vmem, size = 0x10000, scoped, tag = 'scratch operand']
  #allocation3 [shape = 'f32[1,256]{1,0:T(1,128)}', space=vmem, size = 0x400, scoped, tag = 'scratch operand']
  #allocation4 [shape = 'f32[1]{0:T(128)S(6)}', space=smem, size = 0x200, scoped, tag = 'scoped memory for tpu_custom_call.1']
  %s0 = inlined_call_operand.vmem [shape: f32[98], index: 0, kind: input, shape index: {}]
  %s1 = inlined_call_operand.<no memory space> [shape: f32[1], index: 1, kind: input, shape index: {}]
  %s2 = inlined_call_operand.hbm [shape: f32[2,4,256], index: 2, kind: input, shape index: {}]
  %s3 = inlined_call_operand.hbm [shape: f32[2,4,16,16], index: 3, kind: input, shape index: {}]
  %s4 = inlined_call_operand.hbm [shape: f32[2,4,256], index: 4, kind: output, shape index: {}]
  %s5 = sld [smem:[#allocation0]]
  $region61: #{tpu_custom_call.1} parent=0
    _
  %s7 = ssub.s32 1, %s5
  %s8 = scalar_select 0, %s7, %s5
  %9 = sst [smem:[#allocation4]] %s1
  $region1: #{tpu_custom_call.1} parent=0
    #allocation5 [shape = 'u8[512]{0}', space=smem, size = 0x200, scoped, tag = 'input window, operand 0, single buffered']
    #allocation6 [shape = 's32[2]{0}', space=sflag, size = 0x8, scoped, tag = 'scoped memory for tpu_custom_call.1']
    #allocation7 [shape = 's32[2]{0}', space=sflag, size = 0x8, scoped, tag = 'scoped memory for tpu_custom_call.1']
    #allocation8 [shape = 's32[2]{0}', space=sflag, size = 0x8, scoped, tag = 'scoped memory for tpu_custom_call.1']
    #allocation9 [shape = 'u8[8192]{0}', space=vmem, size = 0x2000, scoped, tag = 'input window, operand 2']
    #allocation10 [shape = 'u8[65536]{0}', space=vmem, size = 0x10000, scoped, tag = 'input window, operand 3']
    #allocation11 [shape = 's32[2]{0}', space=sflag, size = 0x8, scoped, tag = 'scoped memory for tpu_custom_call.1']
    #allocation12 [shape = 'u8[8192]{0}', space=vmem, size = 0x2000, scoped, tag = 'output window, operand 0']
    %10 = vsyncpa [#allocation8], 0
    %11 = vsyncpa [#allocation6], 0
    %s12 = scalar_lea.sflag [#allocation6], 1
    %13 = vsyncpa %s12, 0
    %14 = vsyncpa [#allocation11], 0
    %s15 = scalar_lea.sflag [#allocation11], 1
    %16 = vsyncpa %s15, 0
    %17 = vsyncpa [#allocation7], 0
    %s18 = scalar_lea.sflag [#allocation7], 1
    %19 = vsyncpa %s18, 0
    loop: start=0, step=1, limit=4
    $region2: #{tpu_custom_call.1} parent=1 // loop_pre_header
      _
    $region3: #{tpu_custom_call.1} parent=1 // loop_header
      %s21 = sphi 0, %s25
      %p22 = scmp.ge.s32.totalorder %s21, 4
      %s29 = sphi 0, %s29
      %s31 = sphi 0, %s29
      %s32 = sphi 0, %s31
      %s46 = sphi 0, %s32
      %s50 = sphi 0, %s50
      %s52 = sphi 0, %s50
      %s53 = sphi 0, %s52
      %s67 = sphi 0, %s53
      %s73 = sphi 0, %s75
      %s76 = sphi 0, %s73
      %s77 = sphi 0, %s76
      %s93 = sphi 0, %s77
      %s99 = sphi 0, %s101
      %s102 = sphi 0, %s99
      %s103 = sphi 0, %s102
      %s119 = sphi 0, %s103
      %s125 = sphi 0, %s127
      %s128 = sphi 0, %s125
      %s129 = sphi 0, %s128
      %s145 = sphi 0, %s129
    $region4: #{tpu_custom_call.1} parent=1 // loop_header_branch
      %24 = sbr.rel (%p22) target = $region8
    $region5: #{tpu_custom_call.1} parent=1 // loop_body
      %s26 = ssub.s32 %s21, 1
      %s27 = ssub.s32 %s21, 2
      %s28 = sadd.s32 %s21, 1
      %s30 = sadd.s32 %s29, 1
      %p33 = scmp.eq.s32.totalorder %s21, 1
      %p34 = scmp.ne.s32.totalorder %s29, %s31
      %p35 = scmp.eq.s32.totalorder %s21, 0
      %p36 = por %p34, %p35
      %p37 = scmp.ne.s32.totalorder %s29, %s31
      %p38 = scmp.eq.s32.totalorder %s26, 1
      %p39 = por %p37, %p38
      %p40 = scmp.ne.s32.totalorder %s31, %s32
      %p41 = scmp.eq.s32.totalorder %s26, 0
      %p42 = por %p40, %p41
      %p43 = scmp.ne.s32.totalorder %s31, %s32
      %p44 = scmp.eq.s32.totalorder %s27, 1
      %p45 = por %p43, %p44
      %p47 = scmp.ne.s32.totalorder %s32, %s46
      %p48 = scmp.eq.s32.totalorder %s27, 0
      %p49 = por %p47, %p48
      %s51 = sadd.s32 %s50, 1
      %p54 = scmp.eq.s32.totalorder %s21, 1
      %p55 = scmp.ne.s32.totalorder %s50, %s52
      %p56 = scmp.eq.s32.totalorder %s21, 0
      %p57 = por %p55, %p56
      %p58 = scmp.ne.s32.totalorder %s50, %s52
      %p59 = scmp.eq.s32.totalorder %s26, 1
      %p60 = por %p58, %p59
      %p61 = scmp.ne.s32.totalorder %s52, %s53
      %p62 = scmp.eq.s32.totalorder %s26, 0
      %p63 = por %p61, %p62
      %p64 = scmp.ne.s32.totalorder %s52, %s53
      %p65 = scmp.eq.s32.totalorder %s27, 1
      %p66 = por %p64, %p65
      %p68 = scmp.ne.s32.totalorder %s53, %s67
      %p69 = scmp.eq.s32.totalorder %s27, 0
      %p70 = por %p68, %p69
      %s71 = ssub.s32 %s21, %s28
      %p72 = scmp.eq.s32.totalorder %s71, 0
      %s74 = sadd.s32 %s73, 1
      %s75 = scalar_select %p72, %s73, %s74
      %p78 = pneg %p72
      %p79 = scmp.eq.s32.totalorder %s21, 1
      %p80 = por %p78, %p79
      %p81 = scmp.ne.s32.totalorder %s73, %s76
      %p82 = scmp.eq.s32.totalorder %s21, 0
      %p83 = por %p81, %p82
      %p84 = scmp.ne.s32.totalorder %s73, %s76
      %p85 = scmp.eq.s32.totalorder %s26, 1
      %p86 = por %p84, %p85
      %p87 = scmp.ne.s32.totalorder %s76, %s77
      %p88 = scmp.eq.s32.totalorder %s26, 0
      %p89 = por %p87, %p88
      %p90 = scmp.ne.s32.totalorder %s76, %s77
      %p91 = scmp.eq.s32.totalorder %s27, 1
      %p92 = por %p90, %p91
      %p94 = scmp.ne.s32.totalorder %s77, %s93
      %p95 = scmp.eq.s32.totalorder %s27, 0
      %p96 = por %p94, %p95
      %s97 = ssub.s32 %s21, %s28
      %p98 = scmp.eq.s32.totalorder %s97, 0
      %s100 = sadd.s32 %s99, 1
      %s101 = scalar_select %p98, %s99, %s100
      %p104 = pneg %p98
      %p105 = scmp.eq.s32.totalorder %s21, 1
      %p106 = por %p104, %p105
      %p107 = scmp.ne.s32.totalorder %s99, %s102
      %p108 = scmp.eq.s32.totalorder %s21, 0
      %p109 = por %p107, %p108
      %p110 = scmp.ne.s32.totalorder %s99, %s102
      %p111 = scmp.eq.s32.totalorder %s26, 1
      %p112 = por %p110, %p111
      %p113 = scmp.ne.s32.totalorder %s102, %s103
      %p114 = scmp.eq.s32.totalorder %s26, 0
      %p115 = por %p113, %p114
      %p116 = scmp.ne.s32.totalorder %s102, %s103
      %p117 = scmp.eq.s32.totalorder %s27, 1
      %p118 = por %p116, %p117
      %p120 = scmp.ne.s32.totalorder %s103, %s119
      %p121 = scmp.eq.s32.totalorder %s27, 0
      %p122 = por %p120, %p121
      %s123 = ssub.s32 %s21, %s28
      %p124 = scmp.eq.s32.totalorder %s123, 0
      %s126 = sadd.s32 %s125, 1
      %s127 = scalar_select %p124, %s125, %s126
      %p130 = pneg %p124
      %p131 = scmp.eq.s32.totalorder %s21, 1
      %p132 = por %p130, %p131
      %p133 = scmp.ne.s32.totalorder %s125, %s128
      %p134 = scmp.eq.s32.totalorder %s21, 0
      %p135 = por %p133, %p134
      %p136 = scmp.ne.s32.totalorder %s125, %s128
      %p137 = scmp.eq.s32.totalorder %s26, 1
      %p138 = por %p136, %p137
      %p139 = scmp.ne.s32.totalorder %s128, %s129
      %p140 = scmp.eq.s32.totalorder %s26, 0
      %p141 = por %p139, %p140
      %p142 = scmp.ne.s32.totalorder %s128, %s129
      %p143 = scmp.eq.s32.totalorder %s27, 1
      %p144 = por %p142, %p143
      %p146 = scmp.ne.s32.totalorder %s129, %s145
      %p147 = scmp.eq.s32.totalorder %s27, 0
      %p148 = por %p146, %p147
      %p149 = scmp.le.s32.totalorder 1, %s21
      %p150 = scmp.lt.s32.totalorder %s21, 3
      %p151 = pnand %p149, %p150
      %p152 = pneg %p151
      // Predicated region
      $region9: #{tpu_custom_call.1} parent=5 // pred_check
        _
      $region10: #{tpu_custom_call.1} parent=5 // pred_check_branch
        %154 = sbr.rel (%p151) target = $region12
      $region11: #{tpu_custom_call.1} parent=5 // pred_region
        %s155 = ssub.s32 %s21, 1
        // Predicated region
        $region13: #{tpu_custom_call.1} parent=11 // pred_check
          %p156 = pneg %p42
        $region14: #{tpu_custom_call.1} parent=11 // pred_check_branch
          %158 = sbr.rel (%p156) target = $region16
        $region15: #{tpu_custom_call.1} parent=11 // pred_region
          %s160 = ssub.s32 16, 16
          %161 = vsyncadd [#allocation8], %s160
          %s163 = sshll.u32 %s0, 4
          %s164 = int_to_ptr.vmem [resolvable:$true] %s163
          %166 = dma.vmem_to_smem %s164, 16, [#allocation5], [#allocation8]
        $region16: #{tpu_custom_call.1} parent=11 // pred_fallthru
          _
        // Predicated region
        $region17: #{tpu_custom_call.1} parent=11 // pred_check
          %p167 = pneg %p63
        $region18: #{tpu_custom_call.1} parent=11 // pred_check_branch
          %169 = sbr.rel (%p167) target = $region20
        $region19: #{tpu_custom_call.1} parent=11 // pred_region
          _
        $region20: #{tpu_custom_call.1} parent=11 // pred_fallthru
          _
      $region12: #{tpu_custom_call.1} parent=5 // pred_fallthru
        _
      %p170 = scmp.lt.s32.totalorder %s21, 2
      // Predicated region
      $region21: #{tpu_custom_call.1} parent=5 // pred_check
        %p171 = pneg %p170
      $region22: #{tpu_custom_call.1} parent=5 // pred_check_branch
        %173 = sbr.rel (%p171) target = $region24
      $region23: #{tpu_custom_call.1} parent=5 // pred_region
        // Predicated region
        $region25: #{tpu_custom_call.1} parent=23 // pred_check
          %p174 = pneg %p83
        $region26: #{tpu_custom_call.1} parent=23 // pred_check_branch
          %176 = sbr.rel (%p174) target = $region28
        $region27: #{tpu_custom_call.1} parent=23 // pred_region
          %s177 = sand.u32 %s73, 1
          %s178 = scalar_lea.sflag [#allocation6], %s177
          %s179 = sand.u32 %s73, 1
          %s180 = smul.addr %s179, 8
          %s181 = scalar_lea.vmem [#allocation9], %s180
          %s183 = ssub.s32 128, 128
          %184 = vsyncadd %s178, %s183
          %s185 = smul.addr %s21, 2
          %s186 = smul.addr %s185, 64
          %s187 = scalar_lea.hbm %s2, %s186
          %s189 = sshll.u32 %s181, 4
          %s190 = int_to_ptr.vmem [resolvable:$true] %s189
          %192 = dma.hbm_to_vmem [thread:$0]  %s187, 128, %s190, %s178
        $region28: #{tpu_custom_call.1} parent=23 // pred_fallthru
          _
        // Predicated region
        $region29: #{tpu_custom_call.1} parent=23 // pred_check
          %p193 = pneg %p109
        $region30: #{tpu_custom_call.1} parent=23 // pred_check_branch
          %195 = sbr.rel (%p193) target = $region32
        $region31: #{tpu_custom_call.1} parent=23 // pred_region
          %s196 = sand.u32 %s99, 1
          %s197 = scalar_lea.sflag [#allocation11], %s196
          %s198 = sand.u32 %s99, 1
          %s199 = smul.addr %s198, 64
          %s200 = scalar_lea.vmem [#allocation10], %s199
          %s202 = ssub.s32 1024, 1024
          %203 = vsyncadd %s197, %s202
          %s204 = smul.addr %s21, 8
          %s205 = smul.addr %s204, 128
          %s206 = scalar_lea.hbm %s3, %s205
          %s207 = sshll.u32 %s200, 4
          %s208 = int_to_ptr.vmem [resolvable:$true] %s207
          %213 = dma.hbm_to_vmem [thread:$0]  %s206, 1024, %s208, %s197, 128, 128, 8
        $region32: #{tpu_custom_call.1} parent=23 // pred_fallthru
          _
      $region24: #{tpu_custom_call.1} parent=5 // pred_fallthru
        _
      %p214 = scmp.le.s32.totalorder 1, %s21
      %p215 = scmp.lt.s32.totalorder %s21, 3
      %p216 = pnand %p214, %p215
      %p217 = pneg %p216
      // Predicated region
      $region33: #{tpu_custom_call.1} parent=5 // pred_check
        _
      $region34: #{tpu_custom_call.1} parent=5 // pred_check_branch
        %219 = sbr.rel (%p216) target = $region36
      $region35: #{tpu_custom_call.1} parent=5 // pred_region
        %s220 = ssub.s32 %s21, 1
        // Predicated region
        $region37: #{tpu_custom_call.1} parent=35 // pred_check
          %p221 = pneg %p42
        $region38: #{tpu_custom_call.1} parent=35 // pred_check_branch
          %223 = sbr.rel (%p221) target = $region40
        $region39: #{tpu_custom_call.1} parent=35 // pred_region
          %224 = dma.done [#allocation8], 16
        $region40: #{tpu_custom_call.1} parent=35 // pred_fallthru
          _
        %s225 = sand.u32 %s76, 1
        %s226 = scalar_lea.sflag [#allocation6], %s225
        %s227 = sand.u32 %s76, 1
        %s228 = smul.addr %s227, 8
        %s229 = scalar_lea.vmem [#allocation9], %s228
        // Predicated region
        $region41: #{tpu_custom_call.1} parent=35 // pred_check
          %p230 = pneg %p89
        $region42: #{tpu_custom_call.1} parent=35 // pred_check_branch
          %232 = sbr.rel (%p230) target = $region44
        $region43: #{tpu_custom_call.1} parent=35 // pred_region
          %233 = dma.done %s226, 128
        $region44: #{tpu_custom_call.1} parent=35 // pred_fallthru
          _
        %s234 = sand.u32 %s102, 1
        %s235 = scalar_lea.sflag [#allocation11], %s234
        %s236 = sand.u32 %s102, 1
        %s237 = smul.addr %s236, 64
        %s238 = scalar_lea.vmem [#allocation10], %s237
        // Predicated region
        $region45: #{tpu_custom_call.1} parent=35 // pred_check
          %p239 = pneg %p115
        $region46: #{tpu_custom_call.1} parent=35 // pred_check_branch
          %241 = sbr.rel (%p239) target = $region48
        $region47: #{tpu_custom_call.1} parent=35 // pred_region
          %242 = dma.done %s235, 1024
        $region48: #{tpu_custom_call.1} parent=35 // pred_fallthru
          _
        %243 = sfence
        %p244 = pneg %p42
        %p245 = pneg %p39
        %p246 = pneg %p63
        %p247 = pneg %p60
        %s248 = sand.u32 %s76, 1
        %s249 = scalar_lea.sflag [#allocation6], %s248
        %s250 = sand.u32 %s76, 1
        %s251 = smul.addr %s250, 8
        %s252 = scalar_lea.vmem [#allocation9], %s251
        %p253 = pneg %p89
        %p254 = pneg %p86
        %s255 = sand.u32 %s102, 1
        %s256 = scalar_lea.sflag [#allocation11], %s255
        %s257 = sand.u32 %s102, 1
        %s258 = smul.addr %s257, 64
        %s259 = scalar_lea.vmem [#allocation10], %s258
        %p260 = pneg %p115
        %p261 = pneg %p112
        %p262 = pneg %p141
        %p263 = pneg %p138
        %s264 = sand.u32 %s128, 1
        %s265 = scalar_lea.sflag [#allocation7], %s264
        %s266 = sand.u32 %s128, 1
        %s267 = smul.addr %s266, 8
        %s268 = scalar_lea.vmem [#allocation12], %s267
        %v269 = vld [vmem:[%s238] sm:$0xff]
        %v270 = vld [vmem:[%s238 + $0x8] sm:$0xff]
        %v271 = vld [vmem:[%s238 + $0x10] sm:$0xff]
        %v272 = vld [vmem:[%s238 + $0x18] sm:$0xff]
        %v273 = vld [vmem:[%s238 + $0x20] sm:$0xff]
        %v274 = vld [vmem:[%s238 + $0x28] sm:$0xff]
        %v275 = vld [vmem:[%s238 + $0x30] sm:$0xff]
        %v276 = vld [vmem:[%s238 + $0x38] sm:$0xff]
        %vm277 = vcmask 130048
        %v278 = vsel %vm277, %v269, -inf
        %v279 = vsel %vm277, %v271, -inf
        %v280 = vsel %vm277, %v273, -inf
        %v281 = vmax.f32 %v278, %v280
        %v282 = vsel %vm277, %v275, -inf
        %v283 = vmax.f32 %v279, %v282
        %v284 = vmax.f32 %v281, %v283
        %v285 = vsel %vm277, %v270, -inf
        %v286 = vsel %vm277, %v272, -inf
        %v287 = vsel %vm277, %v274, -inf
        %v288 = vmax.f32 %v285, %v287
        %v289 = vsel %vm277, %v276, -inf
        %v290 = vmax.f32 %v286, %v289
        %v291 = vmax.f32 %v288, %v290
        %v292 = vsel %vm277, %v269, 0.0
        %v293 = vsel %vm277, %v271, 0.0
        %v294 = vadd.f32 %v292, %v293
        %v295 = vsel %vm277, %v273, 0.0
        %v296 = vadd.f32 %v294, %v295
        %v297 = vsel %vm277, %v275, 0.0
        %v298 = vadd.f32 %v296, %v297
        %v299 = vsel %vm277, %v270, 0.0
        %v300 = vsel %vm277, %v272, 0.0
        %v301 = vadd.f32 %v299, %v300
        %v302 = vsel %vm277, %v274, 0.0
        %v303 = vadd.f32 %v301, %v302
        %v304 = vsel %vm277, %v276, 0.0
        %v305 = vadd.f32 %v303, %v304
        %306 = vst [vmem:[#allocation2] sm:$0xe0] 0.0
        %307 = vst [vmem:[#allocation2 + $0x8] sm:$0xe0] 0.0
        %308 = vst [vmem:[#allocation2 + $0x30] sm:$0x7] 0.0
        %309 = vst [vmem:[#allocation2 + $0x38] sm:$0x7] 0.0
        %vm310 = vcmask 1048552
        %311 = vst.msk [vmem:[#allocation2 + $0x10] sm:$0xff] %vm310, 0.0
        %312 = vst.msk [vmem:[#allocation2 + $0x20] sm:$0xff] %vm310, 0.0
        %vm313 = vcmask 154752
        %314 = vst.msk [vmem:[#allocation2 + $0x18] sm:$0xff] %vm313, 0.0
        %315 = vst.msk [vmem:[#allocation2 + $0x28] sm:$0xff] %vm313, 0.0
        %s316 = scalar_lea.vmem [#allocation2], 64
        %317 = vst [vmem:[%s316] sm:$0xe0] 0.0
        %318 = vst [vmem:[%s316 + $0x8] sm:$0xe0] 0.0
        %319 = vst [vmem:[%s316 + $0x30] sm:$0x7] 0.0
        %320 = vst [vmem:[%s316 + $0x38] sm:$0x7] 0.0
        %321 = vst.msk [vmem:[%s316 + $0x10] sm:$0xff] %vm310, 0.0
        %322 = vst.msk [vmem:[%s316 + $0x20] sm:$0xff] %vm310, 0.0
        %323 = vst.msk [vmem:[%s316 + $0x18] sm:$0xff] %vm313, 0.0
        %324 = vst.msk [vmem:[%s316 + $0x28] sm:$0xff] %vm313, 0.0
        %325 = vst.msk [vmem:[#allocation2 + $0x18] sm:$0xff] %vm277, %v284
        %326 = vst.msk [vmem:[#allocation2 + $0x28] sm:$0xff] %vm277, %v291
        %327 = vst.msk [vmem:[%s316 + $0x18] sm:$0xff] %vm277, %v298
        %328 = vst.msk [vmem:[%s316 + $0x28] sm:$0xff] %vm277, %v305
        %v329 = vld [vmem:[#allocation2] sm:$0xff]
        %v330 = vld [vmem:[#allocation2 + $0x8] sm:$0xff]
        %v331 = vld [vmem:[#allocation2 + $0x10] sm:$0xff]
        %v332 = vld [vmem:[#allocation2 + $0x18] sm:$0xff]
        %v333 = vld [vmem:[#allocation2 + $0x20] sm:$0xff]
        %v334 = vld [vmem:[#allocation2 + $0x28] sm:$0xff]
        %v335 = vld [vmem:[#allocation2 + $0x30] sm:$0xff]
        %v336 = vld [vmem:[#allocation2 + $0x38] sm:$0xff]
        %s337 = sld [smem:[#allocation5]]
        %v338 = vstv %s337
        %v339 = vmul.f32 %v329, %v338
        %v340 = vmul.f32 %v330, %v338
        %v341 = vmul.f32 %v331, %v338
        %v342 = vmul.f32 %v332, %v338
        %v343 = vmul.f32 %v333, %v338
        %v344 = vmul.f32 %v334, %v338
        %s345 = sld [smem:[#allocation5 + $0x1]]
        %v346 = vstv %s345
        %v347 = vmul.f32 %v329, %v346
        %v348 = vmul.f32 %v330, %v346
        %v349 = vmul.f32 %v331, %v346
        %v350 = vmul.f32 %v332, %v346
        %v351 = vmul.f32 %v333, %v346
        %v352 = vmul.f32 %v334, %v346
        %359 = vrot.lane.b32.xlu0 %v347, 127
        %v360 = vpop.permute.xlu0 %359
        %361 = vrot.lane.b32.xlu0 %v348, 127
        %v362 = vpop.permute.xlu0 %361
        %363 = vrot.lane.b32.xlu0 %v349, 127
        %v364 = vpop.permute.xlu0 %363
        %365 = vrot.lane.b32.xlu0 %v350, 127
        %v366 = vpop.permute.xlu0 %365
        %367 = vrot.lane.b32.xlu0 %v351, 127
        %v368 = vpop.permute.xlu0 %367
        %369 = vrot.lane.b32.xlu0 %v352, 127
        %v370 = vpop.permute.xlu0 %369
        %vm371 = vcmask 1039360
        %v372 = vsel %vm371, %v360, %v362
        %v373 = vsel %vm371, %v364, %v366
        %v374 = vsel %vm371, %v368, %v370
        %v381 = vadd.f32 %v339, %v372
        %v382 = vadd.f32 %v340, %v362
        %v383 = vadd.f32 %v341, %v373
        %v384 = vadd.f32 %v342, %v366
        %v385 = vadd.f32 %v343, %v374
        %v386 = vadd.f32 %v344, %v370
        %s387 = sld [smem:[#allocation5 + $0x2]]
        %v388 = vstv %s387
        %v389 = vmul.f32 %v329, %v388
        %v390 = vmul.f32 %v330, %v388
        %v391 = vmul.f32 %v331, %v388
        %v392 = vmul.f32 %v332, %v388
        %v393 = vmul.f32 %v333, %v388
        %v394 = vmul.f32 %v334, %v388
        %401 = vrot.lane.b32.xlu0 %v389, 126
        %v402 = vpop.permute.xlu0 %401
        %403 = vrot.lane.b32.xlu0 %v390, 126
        %v404 = vpop.permute.xlu0 %403
        %405 = vrot.lane.b32.xlu0 %v391, 126
        %v406 = vpop.permute.xlu0 %405
        %407 = vrot.lane.b32.xlu0 %v392, 126
        %v408 = vpop.permute.xlu0 %407
        %409 = vrot.lane.b32.xlu0 %v393, 126
        %v410 = vpop.permute.xlu0 %409
        %411 = vrot.lane.b32.xlu0 %v394, 126
        %v412 = vpop.permute.xlu0 %411
        %vm413 = vcmask 1031168
        %v414 = vsel %vm413, %v402, %v404
        %v415 = vsel %vm413, %v406, %v408
        %v416 = vsel %vm413, %v410, %v412
        %v423 = vadd.f32 %v381, %v414
        %v424 = vadd.f32 %v382, %v404
        %v425 = vadd.f32 %v383, %v415
        %v426 = vadd.f32 %v384, %v408
        %v427 = vadd.f32 %v385, %v416
        %v428 = vadd.f32 %v386, %v412
        %s429 = sld [smem:[#allocation5 + $0x3]]
        %v430 = vstv %s429
        %v431 = vmul.f32 %v330, %v430
        %v432 = vmul.f32 %v332, %v430
        %v433 = vmul.f32 %v334, %v430
        %437 = vrot.lane.b32.xlu0 %v431, 125
        %v438 = vpop.permute.xlu0 %437
        %439 = vrot.lane.b32.xlu0 %v432, 125
        %v440 = vpop.permute.xlu0 %439
        %441 = vrot.lane.b32.xlu0 %v433, 125
        %v442 = vpop.permute.xlu0 %441
        %v446 = vadd.f32 %v423, %v438
        %v447 = vadd.f32 %v424, %v438
        %v448 = vadd.f32 %v425, %v440
        %v449 = vadd.f32 %v426, %v440
        %v450 = vadd.f32 %v427, %v442
        %v451 = vadd.f32 %v428, %v442
        %s452 = sld [smem:[#allocation5 + $0x4]]
        %v453 = vstv %s452
        %v454 = vmul.f32 %v330, %v453
        %v455 = vmul.f32 %v332, %v453
        %v456 = vmul.f32 %v334, %v453
        %460 = vrot.lane.b32.xlu0 %v454, 124
        %v461 = vpop.permute.xlu0 %460
        %462 = vrot.lane.b32.xlu0 %v455, 124
        %v463 = vpop.permute.xlu0 %462
        %464 = vrot.lane.b32.xlu0 %v456, 124
        %v465 = vpop.permute.xlu0 %464
        %v469 = vadd.f32 %v446, %v461
        %v470 = vadd.f32 %v447, %v461
        %v471 = vadd.f32 %v448, %v463
        %v472 = vadd.f32 %v449, %v463
        %v473 = vadd.f32 %v450, %v465
        %v474 = vadd.f32 %v451, %v465
        %s475 = sld [smem:[#allocation5 + $0x5]]
        %v476 = vstv %s475
        %v477 = vmul.f32 %v330, %v476
        %v478 = vmul.f32 %v332, %v476
        %v479 = vmul.f32 %v334, %v476
        %483 = vrot.lane.b32.xlu0 %v477, 123
        %v484 = vpop.permute.xlu0 %483
        %485 = vrot.lane.b32.xlu0 %v478, 123
        %v486 = vpop.permute.xlu0 %485
        %487 = vrot.lane.b32.xlu0 %v479, 123
        %v488 = vpop.permute.xlu0 %487
        %v492 = vadd.f32 %v469, %v484
        %v493 = vadd.f32 %v470, %v484
        %v494 = vadd.f32 %v471, %v486
        %v495 = vadd.f32 %v472, %v486
        %v496 = vadd.f32 %v473, %v488
        %v497 = vadd.f32 %v474, %v488
        %s498 = sld [smem:[#allocation5 + $0x6]]
        %v499 = vstv %s498
        %v500 = vmul.f32 %v330, %v499
        %v501 = vmul.f32 %v332, %v499
        %v502 = vmul.f32 %v334, %v499
        %506 = vrot.lane.b32.xlu0 %v500, 122
        %v507 = vpop.permute.xlu0 %506
        %508 = vrot.lane.b32.xlu0 %v501, 122
        %v509 = vpop.permute.xlu0 %508
        %510 = vrot.lane.b32.xlu0 %v502, 122
        %v511 = vpop.permute.xlu0 %510
        %v515 = vadd.f32 %v492, %v507
        %v516 = vadd.f32 %v493, %v507
        %v517 = vadd.f32 %v494, %v509
        %v518 = vadd.f32 %v495, %v509
        %v519 = vadd.f32 %v496, %v511
        %v520 = vadd.f32 %v497, %v511
        %v521 = vadd.f32 %v515, 0.0
        %v522 = vadd.f32 %v516, 0.0
        %v523 = vadd.f32 %v517, 0.0
        %v524 = vadd.f32 %v518, 0.0
        %v525 = vadd.f32 %v519, 0.0
        %v526 = vadd.f32 %v520, 0.0
        %s527 = sld [smem:[#allocation5 + $0x7]]
        %v528 = vstv %s527
        %v529 = vmul.f32 %v329, %v528
        %v530 = vmul.f32 %v330, %v528
        %v531 = vmul.f32 %v331, %v528
        %v532 = vmul.f32 %v332, %v528
        %v533 = vmul.f32 %v333, %v528
        %v534 = vmul.f32 %v334, %v528
        %s535 = sld [smem:[#allocation5 + $0x8]]
        %v536 = vstv %s535
        %v537 = vmul.f32 %v329, %v536
        %v538 = vmul.f32 %v330, %v536
        %v539 = vmul.f32 %v331, %v536
        %v540 = vmul.f32 %v332, %v536
        %v541 = vmul.f32 %v333, %v536
        %v542 = vmul.f32 %v334, %v536
        %549 = vrot.lane.b32.xlu0 %v537, 127
        %v550 = vpop.permute.xlu0 %549
        %551 = vrot.lane.b32.xlu0 %v538, 127
        %v552 = vpop.permute.xlu0 %551
        %553 = vrot.lane.b32.xlu0 %v539, 127
        %v554 = vpop.permute.xlu0 %553
        %555 = vrot.lane.b32.xlu0 %v540, 127
        %v556 = vpop.permute.xlu0 %555
        %557 = vrot.lane.b32.xlu0 %v541, 127
        %v558 = vpop.permute.xlu0 %557
        %559 = vrot.lane.b32.xlu0 %v542, 127
        %v560 = vpop.permute.xlu0 %559
        %v561 = vsel %vm371, %v550, %v552
        %v562 = vsel %vm371, %v554, %v556
        %v563 = vsel %vm371, %v558, %v560
        %v570 = vadd.f32 %v529, %v561
        %v571 = vadd.f32 %v530, %v552
        %v572 = vadd.f32 %v531, %v562
        %v573 = vadd.f32 %v532, %v556
        %v574 = vadd.f32 %v533, %v563
        %v575 = vadd.f32 %v534, %v560
        %s576 = sld [smem:[#allocation5 + $0x9]]
        %v577 = vstv %s576
        %v578 = vmul.f32 %v329, %v577
        %v579 = vmul.f32 %v330, %v577
        %v580 = vmul.f32 %v331, %v577
        %v581 = vmul.f32 %v332, %v577
        %v582 = vmul.f32 %v333, %v577
        %v583 = vmul.f32 %v334, %v577
        %590 = vrot.lane.b32.xlu0 %v578, 126
        %v591 = vpop.permute.xlu0 %590
        %592 = vrot.lane.b32.xlu0 %v579, 126
        %v593 = vpop.permute.xlu0 %592
        %594 = vrot.lane.b32.xlu0 %v580, 126
        %v595 = vpop.permute.xlu0 %594
        %596 = vrot.lane.b32.xlu0 %v581, 126
        %v597 = vpop.permute.xlu0 %596
        %598 = vrot.lane.b32.xlu0 %v582, 126
        %v599 = vpop.permute.xlu0 %598
        %600 = vrot.lane.b32.xlu0 %v583, 126
        %v601 = vpop.permute.xlu0 %600
        %v602 = vsel %vm413, %v591, %v593
        %v603 = vsel %vm413, %v595, %v597
        %v604 = vsel %vm413, %v599, %v601
        %v611 = vadd.f32 %v570, %v602
        %v612 = vadd.f32 %v571, %v593
        %v613 = vadd.f32 %v572, %v603
        %v614 = vadd.f32 %v573, %v597
        %v615 = vadd.f32 %v574, %v604
        %v616 = vadd.f32 %v575, %v601
        %s617 = sld [smem:[#allocation5 + $0xa]]
        %v618 = vstv %s617
        %v619 = vmul.f32 %v330, %v618
        %v620 = vmul.f32 %v332, %v618
        %v621 = vmul.f32 %v334, %v618
        %625 = vrot.lane.b32.xlu0 %v619, 125
        %v626 = vpop.permute.xlu0 %625
        %627 = vrot.lane.b32.xlu0 %v620, 125
        %v628 = vpop.permute.xlu0 %627
        %629 = vrot.lane.b32.xlu0 %v621, 125
        %v630 = vpop.permute.xlu0 %629
        %v634 = vadd.f32 %v611, %v626
        %v635 = vadd.f32 %v612, %v626
        %v636 = vadd.f32 %v613, %v628
        %v637 = vadd.f32 %v614, %v628
        %v638 = vadd.f32 %v615, %v630
        %v639 = vadd.f32 %v616, %v630
        %s640 = sld [smem:[#allocation5 + $0xb]]
        %v641 = vstv %s640
        %v642 = vmul.f32 %v330, %v641
        %v643 = vmul.f32 %v332, %v641
        %v644 = vmul.f32 %v334, %v641
        %648 = vrot.lane.b32.xlu0 %v642, 124
        %v649 = vpop.permute.xlu0 %648
        %650 = vrot.lane.b32.xlu0 %v643, 124
        %v651 = vpop.permute.xlu0 %650
        %652 = vrot.lane.b32.xlu0 %v644, 124
        %v653 = vpop.permute.xlu0 %652
        %v657 = vadd.f32 %v634, %v649
        %v658 = vadd.f32 %v635, %v649
        %v659 = vadd.f32 %v636, %v651
        %v660 = vadd.f32 %v637, %v651
        %v661 = vadd.f32 %v638, %v653
        %v662 = vadd.f32 %v639, %v653
        %s663 = sld [smem:[#allocation5 + $0xc]]
        %v664 = vstv %s663
        %v665 = vmul.f32 %v330, %v664
        %v666 = vmul.f32 %v332, %v664
        %v667 = vmul.f32 %v334, %v664
        %671 = vrot.lane.b32.xlu0 %v665, 123
        %v672 = vpop.permute.xlu0 %671
        %673 = vrot.lane.b32.xlu0 %v666, 123
        %v674 = vpop.permute.xlu0 %673
        %675 = vrot.lane.b32.xlu0 %v667, 123
        %v676 = vpop.permute.xlu0 %675
        %v680 = vadd.f32 %v657, %v672
        %v681 = vadd.f32 %v658, %v672
        %v682 = vadd.f32 %v659, %v674
        %v683 = vadd.f32 %v660, %v674
        %v684 = vadd.f32 %v661, %v676
        %v685 = vadd.f32 %v662, %v676
        %s686 = sld [smem:[#allocation5 + $0xd]]
        %v687 = vstv %s686
        %v688 = vmul.f32 %v330, %v687
        %v689 = vmul.f32 %v332, %v687
        %v690 = vmul.f32 %v334, %v687
        %694 = vrot.lane.b32.xlu0 %v688, 122
        %v695 = vpop.permute.xlu0 %694
        %696 = vrot.lane.b32.xlu0 %v689, 122
        %v697 = vpop.permute.xlu0 %696
        %698 = vrot.lane.b32.xlu0 %v690, 122
        %v699 = vpop.permute.xlu0 %698
        %v703 = vadd.f32 %v680, %v695
        %v704 = vadd.f32 %v681, %v695
        %v705 = vadd.f32 %v682, %v697
        %v706 = vadd.f32 %v683, %v697
        %v707 = vadd.f32 %v684, %v699
        %v708 = vadd.f32 %v685, %v699
        %vm715 = vcmask 1046528
        %v716 = vrot.slane %v703, 1
        %v717 = vrot.slane %v705, 1
        %v718 = vsel %vm715, %v716, %v717
        %v719 = vrot.slane %v704, 1
        %v720 = vrot.slane %v706, 1
        %v721 = vsel %vm715, %v719, %v720
        %v722 = vrot.slane %v707, 1
        %v723 = vsel %vm715, %v717, %v722
        %v724 = vrot.slane %v708, 1
        %v725 = vsel %vm715, %v720, %v724
        %v732 = vadd.f32 %v521, %v718
        %v733 = vadd.f32 %v522, %v721
        %v734 = vadd.f32 %v523, %v723
        %v735 = vadd.f32 %v524, %v725
        %v736 = vadd.f32 %v525, %v722
        %v737 = vadd.f32 %v526, %v724
        %s738 = sld [smem:[#allocation5 + $0xe]]
        %v739 = vstv %s738
        %v740 = vmul.f32 %v329, %v739
        %v741 = vmul.f32 %v330, %v739
        %v742 = vmul.f32 %v331, %v739
        %v743 = vmul.f32 %v332, %v739
        %v744 = vmul.f32 %v333, %v739
        %v745 = vmul.f32 %v334, %v739
        %s746 = sld [smem:[#allocation5 + $0xf]]
        %v747 = vstv %s746
        %v748 = vmul.f32 %v329, %v747
        %v749 = vmul.f32 %v330, %v747
        %v750 = vmul.f32 %v331, %v747
        %v751 = vmul.f32 %v332, %v747
        %v752 = vmul.f32 %v333, %v747
        %v753 = vmul.f32 %v334, %v747
        %760 = vrot.lane.b32.xlu0 %v748, 127
        %v761 = vpop.permute.xlu0 %760
        %762 = vrot.lane.b32.xlu0 %v749, 127
        %v763 = vpop.permute.xlu0 %762
        %764 = vrot.lane.b32.xlu0 %v750, 127
        %v765 = vpop.permute.xlu0 %764
        %766 = vrot.lane.b32.xlu0 %v751, 127
        %v767 = vpop.permute.xlu0 %766
        %768 = vrot.lane.b32.xlu0 %v752, 127
        %v769 = vpop.permute.xlu0 %768
        %770 = vrot.lane.b32.xlu0 %v753, 127
        %v771 = vpop.permute.xlu0 %770
        %v772 = vsel %vm371, %v761, %v763
        %v773 = vsel %vm371, %v765, %v767
        %v774 = vsel %vm371, %v769, %v771
        %v781 = vadd.f32 %v740, %v772
        %v782 = vadd.f32 %v741, %v763
        %v783 = vadd.f32 %v742, %v773
        %v784 = vadd.f32 %v743, %v767
        %v785 = vadd.f32 %v744, %v774
        %v786 = vadd.f32 %v745, %v771
        %s787 = sld [smem:[#allocation5 + $0x10]]
        %v788 = vstv %s787
        %v789 = vmul.f32 %v329, %v788
        %v790 = vmul.f32 %v330, %v788
        %v791 = vmul.f32 %v331, %v788
        %v792 = vmul.f32 %v332, %v788
        %v793 = vmul.f32 %v333, %v788
        %v794 = vmul.f32 %v334, %v788
        %801 = vrot.lane.b32.xlu0 %v789, 126
        %v802 = vpop.permute.xlu0 %801
        %803 = vrot.lane.b32.xlu0 %v790, 126
        %v804 = vpop.permute.xlu0 %803
        %805 = vrot.lane.b32.xlu0 %v791, 126
        %v806 = vpop.permute.xlu0 %805
        %807 = vrot.lane.b32.xlu0 %v792, 126
        %v808 = vpop.permute.xlu0 %807
        %809 = vrot.lane.b32.xlu0 %v793, 126
        %v810 = vpop.permute.xlu0 %809
        %811 = vrot.lane.b32.xlu0 %v794, 126
        %v812 = vpop.permute.xlu0 %811
        %v813 = vsel %vm413, %v802, %v804
        %v814 = vsel %vm413, %v806, %v808
        %v815 = vsel %vm413, %v810, %v812
        %v822 = vadd.f32 %v781, %v813
        %v823 = vadd.f32 %v782, %v804
        %v824 = vadd.f32 %v783, %v814
        %v825 = vadd.f32 %v784, %v808
        %v826 = vadd.f32 %v785, %v815
        %v827 = vadd.f32 %v786, %v812
        %s828 = sld [smem:[#allocation5 + $0x11]]
        %v829 = vstv %s828
        %v830 = vmul.f32 %v330, %v829
        %v831 = vmul.f32 %v332, %v829
        %v832 = vmul.f32 %v334, %v829
        %836 = vrot.lane.b32.xlu0 %v830, 125
        %v837 = vpop.permute.xlu0 %836
        %838 = vrot.lane.b32.xlu0 %v831, 125
        %v839 = vpop.permute.xlu0 %838
        %840 = vrot.lane.b32.xlu0 %v832, 125
        %v841 = vpop.permute.xlu0 %840
        %v845 = vadd.f32 %v822, %v837
        %v846 = vadd.f32 %v823, %v837
        %v847 = vadd.f32 %v824, %v839
        %v848 = vadd.f32 %v825, %v839
        %v849 = vadd.f32 %v826, %v841
        %v850 = vadd.f32 %v827, %v841
        %s851 = sld [smem:[#allocation5 + $0x12]]
        %v852 = vstv %s851
        %v853 = vmul.f32 %v330, %v852
        %v854 = vmul.f32 %v332, %v852
        %v855 = vmul.f32 %v334, %v852
        %859 = vrot.lane.b32.xlu0 %v853, 124
        %v860 = vpop.permute.xlu0 %859
        %861 = vrot.lane.b32.xlu0 %v854, 124
        %v862 = vpop.permute.xlu0 %861
        %863 = vrot.lane.b32.xlu0 %v855, 124
        %v864 = vpop.permute.xlu0 %863
        %v868 = vadd.f32 %v845, %v860
        %v869 = vadd.f32 %v846, %v860
        %v870 = vadd.f32 %v847, %v862
        %v871 = vadd.f32 %v848, %v862
        %v872 = vadd.f32 %v849, %v864
        %v873 = vadd.f32 %v850, %v864
        %s874 = sld [smem:[#allocation5 + $0x13]]
        %v875 = vstv %s874
        %v876 = vmul.f32 %v330, %v875
        %v877 = vmul.f32 %v332, %v875
        %v878 = vmul.f32 %v334, %v875
        %882 = vrot.lane.b32.xlu0 %v876, 123
        %v883 = vpop.permute.xlu0 %882
        %884 = vrot.lane.b32.xlu0 %v877, 123
        %v885 = vpop.permute.xlu0 %884
        %886 = vrot.lane.b32.xlu0 %v878, 123
        %v887 = vpop.permute.xlu0 %886
        %v891 = vadd.f32 %v868, %v883
        %v892 = vadd.f32 %v869, %v883
        %v893 = vadd.f32 %v870, %v885
        %v894 = vadd.f32 %v871, %v885
        %v895 = vadd.f32 %v872, %v887
        %v896 = vadd.f32 %v873, %v887
        %s897 = sld [smem:[#allocation5 + $0x14]]
        %v898 = vstv %s897
        %v899 = vmul.f32 %v330, %v898
        %v900 = vmul.f32 %v332, %v898
        %v901 = vmul.f32 %v334, %v898
        %905 = vrot.lane.b32.xlu0 %v899, 122
        %v906 = vpop.permute.xlu0 %905
        %907 = vrot.lane.b32.xlu0 %v900, 122
        %v908 = vpop.permute.xlu0 %907
        %909 = vrot.lane.b32.xlu0 %v901, 122
        %v910 = vpop.permute.xlu0 %909
        %v914 = vadd.f32 %v891, %v906
        %v915 = vadd.f32 %v892, %v906
        %v916 = vadd.f32 %v893, %v908
        %v917 = vadd.f32 %v894, %v908
        %v918 = vadd.f32 %v895, %v910
        %v919 = vadd.f32 %v896, %v910
        %vm926 = vcmask 1045504
        %v927 = vrot.slane %v914, 2
        %v928 = vrot.slane %v916, 2
        %v929 = vsel %vm926, %v927, %v928
        %v930 = vrot.slane %v915, 2
        %v931 = vrot.slane %v917, 2
        %v932 = vsel %vm926, %v930, %v931
        %v933 = vrot.slane %v918, 2
        %v934 = vsel %vm926, %v928, %v933
        %v935 = vrot.slane %v919, 2
        %v936 = vsel %vm926, %v931, %v935
        %v943 = vadd.f32 %v732, %v929
        %v944 = vadd.f32 %v733, %v932
        %v945 = vadd.f32 %v734, %v934
        %v946 = vadd.f32 %v735, %v936
        %v947 = vadd.f32 %v736, %v933
        %v948 = vadd.f32 %v737, %v935
        %s949 = sld [smem:[#allocation5 + $0x15]]
        %v950 = vstv %s949
        %v951 = vmul.f32 %v331, %v950
        %v952 = vmul.f32 %v332, %v950
        %v953 = vmul.f32 %v333, %v950
        %v954 = vmul.f32 %v334, %v950
        %s955 = sld [smem:[#allocation5 + $0x16]]
        %v956 = vstv %s955
        %v957 = vmul.f32 %v331, %v956
        %v958 = vmul.f32 %v332, %v956
        %v959 = vmul.f32 %v333, %v956
        %v960 = vmul.f32 %v334, %v956
        %965 = vrot.lane.b32.xlu0 %v957, 127
        %v966 = vpop.permute.xlu0 %965
        %967 = vrot.lane.b32.xlu0 %v958, 127
        %v968 = vpop.permute.xlu0 %967
        %969 = vrot.lane.b32.xlu0 %v959, 127
        %v970 = vpop.permute.xlu0 %969
        %971 = vrot.lane.b32.xlu0 %v960, 127
        %v972 = vpop.permute.xlu0 %971
        %v973 = vsel %vm371, %v966, %v968
        %v974 = vsel %vm371, %v970, %v972
        %v979 = vadd.f32 %v951, %v973
        %v980 = vadd.f32 %v952, %v968
        %v981 = vadd.f32 %v953, %v974
        %v982 = vadd.f32 %v954, %v972
        %s983 = sld [smem:[#allocation5 + $0x17]]
        %v984 = vstv %s983
        %v985 = vmul.f32 %v331, %v984
        %v986 = vmul.f32 %v332, %v984
        %v987 = vmul.f32 %v333, %v984
        %v988 = vmul.f32 %v334, %v984
        %993 = vrot.lane.b32.xlu0 %v985, 126
        %v994 = vpop.permute.xlu0 %993
        %995 = vrot.lane.b32.xlu0 %v986, 126
        %v996 = vpop.permute.xlu0 %995
        %997 = vrot.lane.b32.xlu0 %v987, 126
        %v998 = vpop.permute.xlu0 %997
        %999 = vrot.lane.b32.xlu0 %v988, 126
        %v1000 = vpop.permute.xlu0 %999
        %v1001 = vsel %vm413, %v994, %v996
        %v1002 = vsel %vm413, %v998, %v1000
        %v1007 = vadd.f32 %v979, %v1001
        %v1008 = vadd.f32 %v980, %v996
        %v1009 = vadd.f32 %v981, %v1002
        %v1010 = vadd.f32 %v982, %v1000
        %s1011 = sld [smem:[#allocation5 + $0x18]]
        %v1012 = vstv %s1011
        %v1013 = vmul.f32 %v332, %v1012
        %v1014 = vmul.f32 %v334, %v1012
        %1017 = vrot.lane.b32.xlu0 %v1013, 125
        %v1018 = vpop.permute.xlu0 %1017
        %1019 = vrot.lane.b32.xlu0 %v1014, 125
        %v1020 = vpop.permute.xlu0 %1019
        %v1023 = vadd.f32 %v1007, %v1018
        %v1024 = vadd.f32 %v1008, %v1018
        %v1025 = vadd.f32 %v1009, %v1020
        %v1026 = vadd.f32 %v1010, %v1020
        %s1027 = sld [smem:[#allocation5 + $0x19]]
        %v1028 = vstv %s1027
        %v1029 = vmul.f32 %v332, %v1028
        %v1030 = vmul.f32 %v334, %v1028
        %1033 = vrot.lane.b32.xlu0 %v1029, 124
        %v1034 = vpop.permute.xlu0 %1033
        %1035 = vrot.lane.b32.xlu0 %v1030, 124
        %v1036 = vpop.permute.xlu0 %1035
        %v1039 = vadd.f32 %v1023, %v1034
        %v1040 = vadd.f32 %v1024, %v1034
        %v1041 = vadd.f32 %v1025, %v1036
        %v1042 = vadd.f32 %v1026, %v1036
        %s1043 = sld [smem:[#allocation5 + $0x1a]]
        %v1044 = vstv %s1043
        %v1045 = vmul.f32 %v332, %v1044
        %v1046 = vmul.f32 %v334, %v1044
        %1049 = vrot.lane.b32.xlu0 %v1045, 123
        %v1050 = vpop.permute.xlu0 %1049
        %1051 = vrot.lane.b32.xlu0 %v1046, 123
        %v1052 = vpop.permute.xlu0 %1051
        %v1055 = vadd.f32 %v1039, %v1050
        %v1056 = vadd.f32 %v1040, %v1050
        %v1057 = vadd.f32 %v1041, %v1052
        %v1058 = vadd.f32 %v1042, %v1052
        %s1059 = sld [smem:[#allocation5 + $0x1b]]
        %v1060 = vstv %s1059
        %v1061 = vmul.f32 %v332, %v1060
        %v1062 = vmul.f32 %v334, %v1060
        %1065 = vrot.lane.b32.xlu0 %v1061, 122
        %v1066 = vpop.permute.xlu0 %1065
        %1067 = vrot.lane.b32.xlu0 %v1062, 122
        %v1068 = vpop.permute.xlu0 %1067
        %v1071 = vadd.f32 %v1055, %v1066
        %v1072 = vadd.f32 %v1056, %v1066
        %v1073 = vadd.f32 %v1057, %v1068
        %v1074 = vadd.f32 %v1058, %v1068
        %vm1079 = vcmask 1044480
        %v1080 = vrot.slane %v1071, 3
        %v1081 = vrot.slane %v1072, 3
        %v1082 = vrot.slane %v1073, 3
        %v1083 = vsel %vm1079, %v1080, %v1082
        %v1084 = vrot.slane %v1074, 3
        %v1085 = vsel %vm1079, %v1081, %v1084
        %v1092 = vadd.f32 %v943, %v1080
        %v1093 = vadd.f32 %v944, %v1081
        %v1094 = vadd.f32 %v945, %v1083
        %v1095 = vadd.f32 %v946, %v1085
        %v1096 = vadd.f32 %v947, %v1082
        %v1097 = vadd.f32 %v948, %v1084
        %s1098 = sld [smem:[#allocation5 + $0x1c]]
        %v1099 = vstv %s1098
        %v1100 = vmul.f32 %v331, %v1099
        %v1101 = vmul.f32 %v332, %v1099
        %v1102 = vmul.f32 %v333, %v1099
        %v1103 = vmul.f32 %v334, %v1099
        %v1104 = vmul.f32 %v335, %v1099
        %v1105 = vmul.f32 %v336, %v1099
        %s1106 = sld [smem:[#allocation5 + $0x1d]]
        %v1107 = vstv %s1106
        %v1108 = vmul.f32 %v331, %v1107
        %v1109 = vmul.f32 %v332, %v1107
        %v1110 = vmul.f32 %v333, %v1107
        %v1111 = vmul.f32 %v334, %v1107
        %v1112 = vmul.f32 %v335, %v1107
        %v1113 = vmul.f32 %v336, %v1107
        %1120 = vrot.lane.b32.xlu0 %v1108, 127
        %v1121 = vpop.permute.xlu0 %1120
        %1122 = vrot.lane.b32.xlu0 %v1109, 127
        %v1123 = vpop.permute.xlu0 %1122
        %1124 = vrot.lane.b32.xlu0 %v1110, 127
        %v1125 = vpop.permute.xlu0 %1124
        %1126 = vrot.lane.b32.xlu0 %v1111, 127
        %v1127 = vpop.permute.xlu0 %1126
        %1128 = vrot.lane.b32.xlu0 %v1112, 127
        %v1129 = vpop.permute.xlu0 %1128
        %1130 = vrot.lane.b32.xlu0 %v1113, 127
        %v1131 = vpop.permute.xlu0 %1130
        %v1132 = vsel %vm371, %v1121, %v1123
        %v1133 = vsel %vm371, %v1125, %v1127
        %v1134 = vsel %vm371, %v1129, %v1131
        %v1141 = vadd.f32 %v1100, %v1132
        %v1142 = vadd.f32 %v1101, %v1123
        %v1143 = vadd.f32 %v1102, %v1133
        %v1144 = vadd.f32 %v1103, %v1127
        %v1145 = vadd.f32 %v1104, %v1134
        %v1146 = vadd.f32 %v1105, %v1131
        %s1147 = sld [smem:[#allocation5 + $0x1e]]
        %v1148 = vstv %s1147
        %v1149 = vmul.f32 %v331, %v1148
        %v1150 = vmul.f32 %v332, %v1148
        %v1151 = vmul.f32 %v333, %v1148
        %v1152 = vmul.f32 %v334, %v1148
        %v1153 = vmul.f32 %v335, %v1148
        %v1154 = vmul.f32 %v336, %v1148
        %1161 = vrot.lane.b32.xlu0 %v1149, 126
        %v1162 = vpop.permute.xlu0 %1161
        %1163 = vrot.lane.b32.xlu0 %v1150, 126
        %v1164 = vpop.permute.xlu0 %1163
        %1165 = vrot.lane.b32.xlu0 %v1151, 126
        %v1166 = vpop.permute.xlu0 %1165
        %1167 = vrot.lane.b32.xlu0 %v1152, 126
        %v1168 = vpop.permute.xlu0 %1167
        %1169 = vrot.lane.b32.xlu0 %v1153, 126
        %v1170 = vpop.permute.xlu0 %1169
        %1171 = vrot.lane.b32.xlu0 %v1154, 126
        %v1172 = vpop.permute.xlu0 %1171
        %v1173 = vsel %vm413, %v1162, %v1164
        %v1174 = vsel %vm413, %v1166, %v1168
        %v1175 = vsel %vm413, %v1170, %v1172
        %v1182 = vadd.f32 %v1141, %v1173
        %v1183 = vadd.f32 %v1142, %v1164
        %v1184 = vadd.f32 %v1143, %v1174
        %v1185 = vadd.f32 %v1144, %v1168
        %v1186 = vadd.f32 %v1145, %v1175
        %v1187 = vadd.f32 %v1146, %v1172
        %s1188 = sld [smem:[#allocation5 + $0x1f]]
        %v1189 = vstv %s1188
        %v1190 = vmul.f32 %v332, %v1189
        %v1191 = vmul.f32 %v334, %v1189
        %v1192 = vmul.f32 %v336, %v1189
        %1196 = vrot.lane.b32.xlu0 %v1190, 125
        %v1197 = vpop.permute.xlu0 %1196
        %1198 = vrot.lane.b32.xlu0 %v1191, 125
        %v1199 = vpop.permute.xlu0 %1198
        %1200 = vrot.lane.b32.xlu0 %v1192, 125
        %v1201 = vpop.permute.xlu0 %1200
        %v1205 = vadd.f32 %v1182, %v1197
        %v1206 = vadd.f32 %v1183, %v1197
        %v1207 = vadd.f32 %v1184, %v1199
        %v1208 = vadd.f32 %v1185, %v1199
        %v1209 = vadd.f32 %v1186, %v1201
        %v1210 = vadd.f32 %v1187, %v1201
        %s1211 = sld [smem:[#allocation5 + $0x20]]
        %v1212 = vstv %s1211
        %v1213 = vmul.f32 %v332, %v1212
        %v1214 = vmul.f32 %v334, %v1212
        %v1215 = vmul.f32 %v336, %v1212
        %1219 = vrot.lane.b32.xlu0 %v1213, 124
        %v1220 = vpop.permute.xlu0 %1219
        %1221 = vrot.lane.b32.xlu0 %v1214, 124
        %v1222 = vpop.permute.xlu0 %1221
        %1223 = vrot.lane.b32.xlu0 %v1215, 124
        %v1224 = vpop.permute.xlu0 %1223
        %v1228 = vadd.f32 %v1205, %v1220
        %v1229 = vadd.f32 %v1206, %v1220
        %v1230 = vadd.f32 %v1207, %v1222
        %v1231 = vadd.f32 %v1208, %v1222
        %v1232 = vadd.f32 %v1209, %v1224
        %v1233 = vadd.f32 %v1210, %v1224
        %s1234 = sld [smem:[#allocation5 + $0x21]]
        %v1235 = vstv %s1234
        %v1236 = vmul.f32 %v332, %v1235
        %v1237 = vmul.f32 %v334, %v1235
        %v1238 = vmul.f32 %v336, %v1235
        %1242 = vrot.lane.b32.xlu0 %v1236, 123
        %v1243 = vpop.permute.xlu0 %1242
        %1244 = vrot.lane.b32.xlu0 %v1237, 123
        %v1245 = vpop.permute.xlu0 %1244
        %1246 = vrot.lane.b32.xlu0 %v1238, 123
        %v1247 = vpop.permute.xlu0 %1246
        %v1251 = vadd.f32 %v1228, %v1243
        %v1252 = vadd.f32 %v1229, %v1243
        %v1253 = vadd.f32 %v1230, %v1245
        %v1254 = vadd.f32 %v1231, %v1245
        %v1255 = vadd.f32 %v1232, %v1247
        %v1256 = vadd.f32 %v1233, %v1247
        %s1257 = sld [smem:[#allocation5 + $0x22]]
        %v1258 = vstv %s1257
        %v1259 = vmul.f32 %v332, %v1258
        %v1260 = vmul.f32 %v334, %v1258
        %v1261 = vmul.f32 %v336, %v1258
        %1265 = vrot.lane.b32.xlu0 %v1259, 122
        %v1266 = vpop.permute.xlu0 %1265
        %1267 = vrot.lane.b32.xlu0 %v1260, 122
        %v1268 = vpop.permute.xlu0 %1267
        %1269 = vrot.lane.b32.xlu0 %v1261, 122
        %v1270 = vpop.permute.xlu0 %1269
        %v1274 = vadd.f32 %v1251, %v1266
        %v1275 = vadd.f32 %v1252, %v1266
        %v1276 = vadd.f32 %v1253, %v1268
        %v1277 = vadd.f32 %v1254, %v1268
        %v1278 = vadd.f32 %v1255, %v1270
        %v1279 = vadd.f32 %v1256, %v1270
        %vm1286 = vcmask 1043456
        %v1287 = vrot.slane %v1274, 4
        %v1288 = vrot.slane %v1275, 4
        %v1289 = vrot.slane %v1276, 4
        %v1290 = vsel %vm1286, %v1287, %v1289
        %v1291 = vrot.slane %v1277, 4
        %v1292 = vsel %vm1286, %v1288, %v1291
        %v1293 = vrot.slane %v1278, 4
        %v1294 = vsel %vm1286, %v1289, %v1293
        %v1295 = vrot.slane %v1279, 4
        %v1296 = vsel %vm1286, %v1291, %v1295
        %v1303 = vadd.f32 %v1092, %v1287
        %v1304 = vadd.f32 %v1093, %v1288
        %v1305 = vadd.f32 %v1094, %v1290
        %v1306 = vadd.f32 %v1095, %v1292
        %v1307 = vadd.f32 %v1096, %v1294
        %v1308 = vadd.f32 %v1097, %v1296
        %s1309 = sld [smem:[#allocation5 + $0x23]]
        %v1310 = vstv %s1309
        %v1311 = vmul.f32 %v331, %v1310
        %v1312 = vmul.f32 %v332, %v1310
        %v1313 = vmul.f32 %v333, %v1310
        %v1314 = vmul.f32 %v334, %v1310
        %v1315 = vmul.f32 %v335, %v1310
        %v1316 = vmul.f32 %v336, %v1310
        %s1317 = sld [smem:[#allocation5 + $0x24]]
        %v1318 = vstv %s1317
        %v1319 = vmul.f32 %v331, %v1318
        %v1320 = vmul.f32 %v332, %v1318
        %v1321 = vmul.f32 %v333, %v1318
        %v1322 = vmul.f32 %v334, %v1318
        %v1323 = vmul.f32 %v335, %v1318
        %v1324 = vmul.f32 %v336, %v1318
        %1331 = vrot.lane.b32.xlu0 %v1319, 127
        %v1332 = vpop.permute.xlu0 %1331
        %1333 = vrot.lane.b32.xlu0 %v1320, 127
        %v1334 = vpop.permute.xlu0 %1333
        %1335 = vrot.lane.b32.xlu0 %v1321, 127
        %v1336 = vpop.permute.xlu0 %1335
        %1337 = vrot.lane.b32.xlu0 %v1322, 127
        %v1338 = vpop.permute.xlu0 %1337
        %1339 = vrot.lane.b32.xlu0 %v1323, 127
        %v1340 = vpop.permute.xlu0 %1339
        %1341 = vrot.lane.b32.xlu0 %v1324, 127
        %v1342 = vpop.permute.xlu0 %1341
        %v1343 = vsel %vm371, %v1332, %v1334
        %v1344 = vsel %vm371, %v1336, %v1338
        %v1345 = vsel %vm371, %v1340, %v1342
        %v1352 = vadd.f32 %v1311, %v1343
        %v1353 = vadd.f32 %v1312, %v1334
        %v1354 = vadd.f32 %v1313, %v1344
        %v1355 = vadd.f32 %v1314, %v1338
        %v1356 = vadd.f32 %v1315, %v1345
        %v1357 = vadd.f32 %v1316, %v1342
        %s1358 = sld [smem:[#allocation5 + $0x25]]
        %v1359 = vstv %s1358
        %v1360 = vmul.f32 %v331, %v1359
        %v1361 = vmul.f32 %v332, %v1359
        %v1362 = vmul.f32 %v333, %v1359
        %v1363 = vmul.f32 %v334, %v1359
        %v1364 = vmul.f32 %v335, %v1359
        %v1365 = vmul.f32 %v336, %v1359
        %1372 = vrot.lane.b32.xlu0 %v1360, 126
        %v1373 = vpop.permute.xlu0 %1372
        %1374 = vrot.lane.b32.xlu0 %v1361, 126
        %v1375 = vpop.permute.xlu0 %1374
        %1376 = vrot.lane.b32.xlu0 %v1362, 126
        %v1377 = vpop.permute.xlu0 %1376
        %1378 = vrot.lane.b32.xlu0 %v1363, 126
        %v1379 = vpop.permute.xlu0 %1378
        %1380 = vrot.lane.b32.xlu0 %v1364, 126
        %v1381 = vpop.permute.xlu0 %1380
        %1382 = vrot.lane.b32.xlu0 %v1365, 126
        %v1383 = vpop.permute.xlu0 %1382
        %v1384 = vsel %vm413, %v1373, %v1375
        %v1385 = vsel %vm413, %v1377, %v1379
        %v1386 = vsel %vm413, %v1381, %v1383
        %v1393 = vadd.f32 %v1352, %v1384
        %v1394 = vadd.f32 %v1353, %v1375
        %v1395 = vadd.f32 %v1354, %v1385
        %v1396 = vadd.f32 %v1355, %v1379
        %v1397 = vadd.f32 %v1356, %v1386
        %v1398 = vadd.f32 %v1357, %v1383
        %s1399 = sld [smem:[#allocation5 + $0x26]]
        %v1400 = vstv %s1399
        %v1401 = vmul.f32 %v332, %v1400
        %v1402 = vmul.f32 %v334, %v1400
        %v1403 = vmul.f32 %v336, %v1400
        %1407 = vrot.lane.b32.xlu0 %v1401, 125
        %v1408 = vpop.permute.xlu0 %1407
        %1409 = vrot.lane.b32.xlu0 %v1402, 125
        %v1410 = vpop.permute.xlu0 %1409
        %1411 = vrot.lane.b32.xlu0 %v1403, 125
        %v1412 = vpop.permute.xlu0 %1411
        %v1416 = vadd.f32 %v1393, %v1408
        %v1417 = vadd.f32 %v1394, %v1408
        %v1418 = vadd.f32 %v1395, %v1410
        %v1419 = vadd.f32 %v1396, %v1410
        %v1420 = vadd.f32 %v1397, %v1412
        %v1421 = vadd.f32 %v1398, %v1412
        %s1422 = sld [smem:[#allocation5 + $0x27]]
        %v1423 = vstv %s1422
        %v1424 = vmul.f32 %v332, %v1423
        %v1425 = vmul.f32 %v334, %v1423
        %v1426 = vmul.f32 %v336, %v1423
        %1430 = vrot.lane.b32.xlu0 %v1424, 124
        %v1431 = vpop.permute.xlu0 %1430
        %1432 = vrot.lane.b32.xlu0 %v1425, 124
        %v1433 = vpop.permute.xlu0 %1432
        %1434 = vrot.lane.b32.xlu0 %v1426, 124
        %v1435 = vpop.permute.xlu0 %1434
        %v1439 = vadd.f32 %v1416, %v1431
        %v1440 = vadd.f32 %v1417, %v1431
        %v1441 = vadd.f32 %v1418, %v1433
        %v1442 = vadd.f32 %v1419, %v1433
        %v1443 = vadd.f32 %v1420, %v1435
        %v1444 = vadd.f32 %v1421, %v1435
        %s1445 = sld [smem:[#allocation5 + $0x28]]
        %v1446 = vstv %s1445
        %v1447 = vmul.f32 %v332, %v1446
        %v1448 = vmul.f32 %v334, %v1446
        %v1449 = vmul.f32 %v336, %v1446
        %1453 = vrot.lane.b32.xlu0 %v1447, 123
        %v1454 = vpop.permute.xlu0 %1453
        %1455 = vrot.lane.b32.xlu0 %v1448, 123
        %v1456 = vpop.permute.xlu0 %1455
        %1457 = vrot.lane.b32.xlu0 %v1449, 123
        %v1458 = vpop.permute.xlu0 %1457
        %v1462 = vadd.f32 %v1439, %v1454
        %v1463 = vadd.f32 %v1440, %v1454
        %v1464 = vadd.f32 %v1441, %v1456
        %v1465 = vadd.f32 %v1442, %v1456
        %v1466 = vadd.f32 %v1443, %v1458
        %v1467 = vadd.f32 %v1444, %v1458
        %s1468 = sld [smem:[#allocation5 + $0x29]]
        %v1469 = vstv %s1468
        %v1470 = vmul.f32 %v332, %v1469
        %v1471 = vmul.f32 %v334, %v1469
        %v1472 = vmul.f32 %v336, %v1469
        %1476 = vrot.lane.b32.xlu0 %v1470, 122
        %v1477 = vpop.permute.xlu0 %1476
        %1478 = vrot.lane.b32.xlu0 %v1471, 122
        %v1479 = vpop.permute.xlu0 %1478
        %1480 = vrot.lane.b32.xlu0 %v1472, 122
        %v1481 = vpop.permute.xlu0 %1480
        %v1485 = vadd.f32 %v1462, %v1477
        %v1486 = vadd.f32 %v1463, %v1477
        %v1487 = vadd.f32 %v1464, %v1479
        %v1488 = vadd.f32 %v1465, %v1479
        %v1489 = vadd.f32 %v1466, %v1481
        %v1490 = vadd.f32 %v1467, %v1481
        %vm1497 = vcmask 1042432
        %v1498 = vrot.slane %v1485, 5
        %v1499 = vrot.slane %v1486, 5
        %v1500 = vrot.slane %v1487, 5
        %v1501 = vsel %vm1497, %v1498, %v1500
        %v1502 = vrot.slane %v1488, 5
        %v1503 = vsel %vm1497, %v1499, %v1502
        %v1504 = vrot.slane %v1489, 5
        %v1505 = vsel %vm1497, %v1500, %v1504
        %v1506 = vrot.slane %v1490, 5
        %v1507 = vsel %vm1497, %v1502, %v1506
        %v1514 = vadd.f32 %v1303, %v1498
        %v1515 = vadd.f32 %v1304, %v1499
        %v1516 = vadd.f32 %v1305, %v1501
        %v1517 = vadd.f32 %v1306, %v1503
        %v1518 = vadd.f32 %v1307, %v1505
        %v1519 = vadd.f32 %v1308, %v1507
        %s1520 = sld [smem:[#allocation5 + $0x2a]]
        %v1521 = vstv %s1520
        %v1522 = vmul.f32 %v331, %v1521
        %v1523 = vmul.f32 %v332, %v1521
        %v1524 = vmul.f32 %v333, %v1521
        %v1525 = vmul.f32 %v334, %v1521
        %v1526 = vmul.f32 %v335, %v1521
        %v1527 = vmul.f32 %v336, %v1521
        %s1528 = sld [smem:[#allocation5 + $0x2b]]
        %v1529 = vstv %s1528
        %v1530 = vmul.f32 %v331, %v1529
        %v1531 = vmul.f32 %v332, %v1529
        %v1532 = vmul.f32 %v333, %v1529
        %v1533 = vmul.f32 %v334, %v1529
        %v1534 = vmul.f32 %v335, %v1529
        %v1535 = vmul.f32 %v336, %v1529
        %1542 = vrot.lane.b32.xlu0 %v1530, 127
        %v1543 = vpop.permute.xlu0 %1542
        %1544 = vrot.lane.b32.xlu0 %v1531, 127
        %v1545 = vpop.permute.xlu0 %1544
        %1546 = vrot.lane.b32.xlu0 %v1532, 127
        %v1547 = vpop.permute.xlu0 %1546
        %1548 = vrot.lane.b32.xlu0 %v1533, 127
        %v1549 = vpop.permute.xlu0 %1548
        %1550 = vrot.lane.b32.xlu0 %v1534, 127
        %v1551 = vpop.permute.xlu0 %1550
        %1552 = vrot.lane.b32.xlu0 %v1535, 127
        %v1553 = vpop.permute.xlu0 %1552
        %v1554 = vsel %vm371, %v1543, %v1545
        %v1555 = vsel %vm371, %v1547, %v1549
        %v1556 = vsel %vm371, %v1551, %v1553
        %v1563 = vadd.f32 %v1522, %v1554
        %v1564 = vadd.f32 %v1523, %v1545
        %v1565 = vadd.f32 %v1524, %v1555
        %v1566 = vadd.f32 %v1525, %v1549
        %v1567 = vadd.f32 %v1526, %v1556
        %v1568 = vadd.f32 %v1527, %v1553
        %s1569 = sld [smem:[#allocation5 + $0x2c]]
        %v1570 = vstv %s1569
        %v1571 = vmul.f32 %v331, %v1570
        %v1572 = vmul.f32 %v332, %v1570
        %v1573 = vmul.f32 %v333, %v1570
        %v1574 = vmul.f32 %v334, %v1570
        %v1575 = vmul.f32 %v335, %v1570
        %v1576 = vmul.f32 %v336, %v1570
        %1583 = vrot.lane.b32.xlu0 %v1571, 126
        %v1584 = vpop.permute.xlu0 %1583
        %1585 = vrot.lane.b32.xlu0 %v1572, 126
        %v1586 = vpop.permute.xlu0 %1585
        %1587 = vrot.lane.b32.xlu0 %v1573, 126
        %v1588 = vpop.permute.xlu0 %1587
        %1589 = vrot.lane.b32.xlu0 %v1574, 126
        %v1590 = vpop.permute.xlu0 %1589
        %1591 = vrot.lane.b32.xlu0 %v1575, 126
        %v1592 = vpop.permute.xlu0 %1591
        %1593 = vrot.lane.b32.xlu0 %v1576, 126
        %v1594 = vpop.permute.xlu0 %1593
        %v1595 = vsel %vm413, %v1584, %v1586
        %v1596 = vsel %vm413, %v1588, %v1590
        %v1597 = vsel %vm413, %v1592, %v1594
        %v1604 = vadd.f32 %v1563, %v1595
        %v1605 = vadd.f32 %v1564, %v1586
        %v1606 = vadd.f32 %v1565, %v1596
        %v1607 = vadd.f32 %v1566, %v1590
        %v1608 = vadd.f32 %v1567, %v1597
        %v1609 = vadd.f32 %v1568, %v1594
        %s1610 = sld [smem:[#allocation5 + $0x2d]]
        %v1611 = vstv %s1610
        %v1612 = vmul.f32 %v332, %v1611
        %v1613 = vmul.f32 %v334, %v1611
        %v1614 = vmul.f32 %v336, %v1611
        %1618 = vrot.lane.b32.xlu0 %v1612, 125
        %v1619 = vpop.permute.xlu0 %1618
        %1620 = vrot.lane.b32.xlu0 %v1613, 125
        %v1621 = vpop.permute.xlu0 %1620
        %1622 = vrot.lane.b32.xlu0 %v1614, 125
        %v1623 = vpop.permute.xlu0 %1622
        %v1627 = vadd.f32 %v1604, %v1619
        %v1628 = vadd.f32 %v1605, %v1619
        %v1629 = vadd.f32 %v1606, %v1621
        %v1630 = vadd.f32 %v1607, %v1621
        %v1631 = vadd.f32 %v1608, %v1623
        %v1632 = vadd.f32 %v1609, %v1623
        %s1633 = sld [smem:[#allocation5 + $0x2e]]
        %v1634 = vstv %s1633
        %v1635 = vmul.f32 %v332, %v1634
        %v1636 = vmul.f32 %v334, %v1634
        %v1637 = vmul.f32 %v336, %v1634
        %1641 = vrot.lane.b32.xlu0 %v1635, 124
        %v1642 = vpop.permute.xlu0 %1641
        %1643 = vrot.lane.b32.xlu0 %v1636, 124
        %v1644 = vpop.permute.xlu0 %1643
        %1645 = vrot.lane.b32.xlu0 %v1637, 124
        %v1646 = vpop.permute.xlu0 %1645
        %v1650 = vadd.f32 %v1627, %v1642
        %v1651 = vadd.f32 %v1628, %v1642
        %v1652 = vadd.f32 %v1629, %v1644
        %v1653 = vadd.f32 %v1630, %v1644
        %v1654 = vadd.f32 %v1631, %v1646
        %v1655 = vadd.f32 %v1632, %v1646
        %s1656 = sld [smem:[#allocation5 + $0x2f]]
        %v1657 = vstv %s1656
        %v1658 = vmul.f32 %v332, %v1657
        %v1659 = vmul.f32 %v334, %v1657
        %v1660 = vmul.f32 %v336, %v1657
        %1664 = vrot.lane.b32.xlu0 %v1658, 123
        %v1665 = vpop.permute.xlu0 %1664
        %1666 = vrot.lane.b32.xlu0 %v1659, 123
        %v1667 = vpop.permute.xlu0 %1666
        %1668 = vrot.lane.b32.xlu0 %v1660, 123
        %v1669 = vpop.permute.xlu0 %1668
        %v1673 = vadd.f32 %v1650, %v1665
        %v1674 = vadd.f32 %v1651, %v1665
        %v1675 = vadd.f32 %v1652, %v1667
        %v1676 = vadd.f32 %v1653, %v1667
        %v1677 = vadd.f32 %v1654, %v1669
        %v1678 = vadd.f32 %v1655, %v1669
        %s1679 = sld [smem:[#allocation5 + $0x30]]
        %v1680 = vstv %s1679
        %v1681 = vmul.f32 %v332, %v1680
        %v1682 = vmul.f32 %v334, %v1680
        %v1683 = vmul.f32 %v336, %v1680
        %1687 = vrot.lane.b32.xlu0 %v1681, 122
        %v1688 = vpop.permute.xlu0 %1687
        %1689 = vrot.lane.b32.xlu0 %v1682, 122
        %v1690 = vpop.permute.xlu0 %1689
        %1691 = vrot.lane.b32.xlu0 %v1683, 122
        %v1692 = vpop.permute.xlu0 %1691
        %v1696 = vadd.f32 %v1673, %v1688
        %v1697 = vadd.f32 %v1674, %v1688
        %v1698 = vadd.f32 %v1675, %v1690
        %v1699 = vadd.f32 %v1676, %v1690
        %v1700 = vadd.f32 %v1677, %v1692
        %v1701 = vadd.f32 %v1678, %v1692
        %vm1708 = vcmask 1041408
        %v1709 = vrot.slane %v1696, 6
        %v1710 = vrot.slane %v1697, 6
        %v1711 = vrot.slane %v1698, 6
        %v1712 = vsel %vm1708, %v1709, %v1711
        %v1713 = vrot.slane %v1699, 6
        %v1714 = vsel %vm1708, %v1710, %v1713
        %v1715 = vrot.slane %v1700, 6
        %v1716 = vsel %vm1708, %v1711, %v1715
        %v1717 = vrot.slane %v1701, 6
        %v1718 = vsel %vm1708, %v1713, %v1717
        %v1725 = vadd.f32 %v1514, %v1709
        %v1726 = vadd.f32 %v1515, %v1710
        %v1727 = vadd.f32 %v1516, %v1712
        %v1728 = vadd.f32 %v1517, %v1714
        %v1729 = vadd.f32 %v1518, %v1716
        %v1730 = vadd.f32 %v1519, %v1718
        %v1731 = vld [vmem:[%s316] sm:$0xff]
        %v1732 = vld [vmem:[%s316 + $0x8] sm:$0xff]
        %v1733 = vld [vmem:[%s316 + $0x10] sm:$0xff]
        %v1734 = vld [vmem:[%s316 + $0x18] sm:$0xff]
        %v1735 = vld [vmem:[%s316 + $0x20] sm:$0xff]
        %v1736 = vld [vmem:[%s316 + $0x28] sm:$0xff]
        %v1737 = vld [vmem:[%s316 + $0x30] sm:$0xff]
        %v1738 = vld [vmem:[%s316 + $0x38] sm:$0xff]
        %s1739 = sld [smem:[#allocation5 + $0x31]]
        %v1740 = vstv %s1739
        %v1741 = vmul.f32 %v1731, %v1740
        %v1742 = vmul.f32 %v1732, %v1740
        %v1743 = vmul.f32 %v1733, %v1740
        %v1744 = vmul.f32 %v1734, %v1740
        %v1745 = vmul.f32 %v1735, %v1740
        %v1746 = vmul.f32 %v1736, %v1740
        %s1747 = sld [smem:[#allocation5 + $0x32]]
        %v1748 = vstv %s1747
        %v1749 = vmul.f32 %v1731, %v1748
        %v1750 = vmul.f32 %v1732, %v1748
        %v1751 = vmul.f32 %v1733, %v1748
        %v1752 = vmul.f32 %v1734, %v1748
        %v1753 = vmul.f32 %v1735, %v1748
        %v1754 = vmul.f32 %v1736, %v1748
        %1761 = vrot.lane.b32.xlu0 %v1749, 127
        %v1762 = vpop.permute.xlu0 %1761
        %1763 = vrot.lane.b32.xlu0 %v1750, 127
        %v1764 = vpop.permute.xlu0 %1763
        %1765 = vrot.lane.b32.xlu0 %v1751, 127
        %v1766 = vpop.permute.xlu0 %1765
        %1767 = vrot.lane.b32.xlu0 %v1752, 127
        %v1768 = vpop.permute.xlu0 %1767
        %1769 = vrot.lane.b32.xlu0 %v1753, 127
        %v1770 = vpop.permute.xlu0 %1769
        %1771 = vrot.lane.b32.xlu0 %v1754, 127
        %v1772 = vpop.permute.xlu0 %1771
        %v1773 = vsel %vm371, %v1762, %v1764
        %v1774 = vsel %vm371, %v1766, %v1768
        %v1775 = vsel %vm371, %v1770, %v1772
        %v1782 = vadd.f32 %v1741, %v1773
        %v1783 = vadd.f32 %v1742, %v1764
        %v1784 = vadd.f32 %v1743, %v1774
        %v1785 = vadd.f32 %v1744, %v1768
        %v1786 = vadd.f32 %v1745, %v1775
        %v1787 = vadd.f32 %v1746, %v1772
        %s1788 = sld [smem:[#allocation5 + $0x33]]
        %v1789 = vstv %s1788
        %v1790 = vmul.f32 %v1731, %v1789
        %v1791 = vmul.f32 %v1732, %v1789
        %v1792 = vmul.f32 %v1733, %v1789
        %v1793 = vmul.f32 %v1734, %v1789
        %v1794 = vmul.f32 %v1735, %v1789
        %v1795 = vmul.f32 %v1736, %v1789
        %1802 = vrot.lane.b32.xlu0 %v1790, 126
        %v1803 = vpop.permute.xlu0 %1802
        %1804 = vrot.lane.b32.xlu0 %v1791, 126
        %v1805 = vpop.permute.xlu0 %1804
        %1806 = vrot.lane.b32.xlu0 %v1792, 126
        %v1807 = vpop.permute.xlu0 %1806
        %1808 = vrot.lane.b32.xlu0 %v1793, 126
        %v1809 = vpop.permute.xlu0 %1808
        %1810 = vrot.lane.b32.xlu0 %v1794, 126
        %v1811 = vpop.permute.xlu0 %1810
        %1812 = vrot.lane.b32.xlu0 %v1795, 126
        %v1813 = vpop.permute.xlu0 %1812
        %v1814 = vsel %vm413, %v1803, %v1805
        %v1815 = vsel %vm413, %v1807, %v1809
        %v1816 = vsel %vm413, %v1811, %v1813
        %v1823 = vadd.f32 %v1782, %v1814
        %v1824 = vadd.f32 %v1783, %v1805
        %v1825 = vadd.f32 %v1784, %v1815
        %v1826 = vadd.f32 %v1785, %v1809
        %v1827 = vadd.f32 %v1786, %v1816
        %v1828 = vadd.f32 %v1787, %v1813
        %s1829 = sld [smem:[#allocation5 + $0x34]]
        %v1830 = vstv %s1829
        %v1831 = vmul.f32 %v1732, %v1830
        %v1832 = vmul.f32 %v1734, %v1830
        %v1833 = vmul.f32 %v1736, %v1830
        %1837 = vrot.lane.b32.xlu0 %v1831, 125
        %v1838 = vpop.permute.xlu0 %1837
        %1839 = vrot.lane.b32.xlu0 %v1832, 125
        %v1840 = vpop.permute.xlu0 %1839
        %1841 = vrot.lane.b32.xlu0 %v1833, 125
        %v1842 = vpop.permute.xlu0 %1841
        %v1846 = vadd.f32 %v1823, %v1838
        %v1847 = vadd.f32 %v1824, %v1838
        %v1848 = vadd.f32 %v1825, %v1840
        %v1849 = vadd.f32 %v1826, %v1840
        %v1850 = vadd.f32 %v1827, %v1842
        %v1851 = vadd.f32 %v1828, %v1842
        %s1852 = sld [smem:[#allocation5 + $0x35]]
        %v1853 = vstv %s1852
        %v1854 = vmul.f32 %v1732, %v1853
        %v1855 = vmul.f32 %v1734, %v1853
        %v1856 = vmul.f32 %v1736, %v1853
        %1860 = vrot.lane.b32.xlu0 %v1854, 124
        %v1861 = vpop.permute.xlu0 %1860
        %1862 = vrot.lane.b32.xlu0 %v1855, 124
        %v1863 = vpop.permute.xlu0 %1862
        %1864 = vrot.lane.b32.xlu0 %v1856, 124
        %v1865 = vpop.permute.xlu0 %1864
        %v1869 = vadd.f32 %v1846, %v1861
        %v1870 = vadd.f32 %v1847, %v1861
        %v1871 = vadd.f32 %v1848, %v1863
        %v1872 = vadd.f32 %v1849, %v1863
        %v1873 = vadd.f32 %v1850, %v1865
        %v1874 = vadd.f32 %v1851, %v1865
        %s1875 = sld [smem:[#allocation5 + $0x36]]
        %v1876 = vstv %s1875
        %v1877 = vmul.f32 %v1732, %v1876
        %v1878 = vmul.f32 %v1734, %v1876
        %v1879 = vmul.f32 %v1736, %v1876
        %1883 = vrot.lane.b32.xlu0 %v1877, 123
        %v1884 = vpop.permute.xlu0 %1883
        %1885 = vrot.lane.b32.xlu0 %v1878, 123
        %v1886 = vpop.permute.xlu0 %1885
        %1887 = vrot.lane.b32.xlu0 %v1879, 123
        %v1888 = vpop.permute.xlu0 %1887
        %v1892 = vadd.f32 %v1869, %v1884
        %v1893 = vadd.f32 %v1870, %v1884
        %v1894 = vadd.f32 %v1871, %v1886
        %v1895 = vadd.f32 %v1872, %v1886
        %v1896 = vadd.f32 %v1873, %v1888
        %v1897 = vadd.f32 %v1874, %v1888
        %s1898 = sld [smem:[#allocation5 + $0x37]]
        %v1899 = vstv %s1898
        %v1900 = vmul.f32 %v1732, %v1899
        %v1901 = vmul.f32 %v1734, %v1899
        %v1902 = vmul.f32 %v1736, %v1899
        %1906 = vrot.lane.b32.xlu0 %v1900, 122
        %v1907 = vpop.permute.xlu0 %1906
        %1908 = vrot.lane.b32.xlu0 %v1901, 122
        %v1909 = vpop.permute.xlu0 %1908
        %1910 = vrot.lane.b32.xlu0 %v1902, 122
        %v1911 = vpop.permute.xlu0 %1910
        %v1915 = vadd.f32 %v1892, %v1907
        %v1916 = vadd.f32 %v1893, %v1907
        %v1917 = vadd.f32 %v1894, %v1909
        %v1918 = vadd.f32 %v1895, %v1909
        %v1919 = vadd.f32 %v1896, %v1911
        %v1920 = vadd.f32 %v1897, %v1911
        %v1921 = vadd.f32 %v1915, 0.0
        %v1922 = vadd.f32 %v1916, 0.0
        %v1923 = vadd.f32 %v1917, 0.0
        %v1924 = vadd.f32 %v1918, 0.0
        %v1925 = vadd.f32 %v1919, 0.0
        %v1926 = vadd.f32 %v1920, 0.0
        %s1927 = sld [smem:[#allocation5 + $0x38]]
        %v1928 = vstv %s1927
        %v1929 = vmul.f32 %v1731, %v1928
        %v1930 = vmul.f32 %v1732, %v1928
        %v1931 = vmul.f32 %v1733, %v1928
        %v1932 = vmul.f32 %v1734, %v1928
        %v1933 = vmul.f32 %v1735, %v1928
        %v1934 = vmul.f32 %v1736, %v1928
        %s1935 = sld [smem:[#allocation5 + $0x39]]
        %v1936 = vstv %s1935
        %v1937 = vmul.f32 %v1731, %v1936
        %v1938 = vmul.f32 %v1732, %v1936
        %v1939 = vmul.f32 %v1733, %v1936
        %v1940 = vmul.f32 %v1734, %v1936
        %v1941 = vmul.f32 %v1735, %v1936
        %v1942 = vmul.f32 %v1736, %v1936
        %1949 = vrot.lane.b32.xlu0 %v1937, 127
        %v1950 = vpop.permute.xlu0 %1949
        %1951 = vrot.lane.b32.xlu0 %v1938, 127
        %v1952 = vpop.permute.xlu0 %1951
        %1953 = vrot.lane.b32.xlu0 %v1939, 127
        %v1954 = vpop.permute.xlu0 %1953
        %1955 = vrot.lane.b32.xlu0 %v1940, 127
        %v1956 = vpop.permute.xlu0 %1955
        %1957 = vrot.lane.b32.xlu0 %v1941, 127
        %v1958 = vpop.permute.xlu0 %1957
        %1959 = vrot.lane.b32.xlu0 %v1942, 127
        %v1960 = vpop.permute.xlu0 %1959
        %v1961 = vsel %vm371, %v1950, %v1952
        %v1962 = vsel %vm371, %v1954, %v1956
        %v1963 = vsel %vm371, %v1958, %v1960
        %v1970 = vadd.f32 %v1929, %v1961
        %v1971 = vadd.f32 %v1930, %v1952
        %v1972 = vadd.f32 %v1931, %v1962
        %v1973 = vadd.f32 %v1932, %v1956
        %v1974 = vadd.f32 %v1933, %v1963
        %v1975 = vadd.f32 %v1934, %v1960
        %s1976 = sld [smem:[#allocation5 + $0x3a]]
        %v1977 = vstv %s1976
        %v1978 = vmul.f32 %v1731, %v1977
        %v1979 = vmul.f32 %v1732, %v1977
        %v1980 = vmul.f32 %v1733, %v1977
        %v1981 = vmul.f32 %v1734, %v1977
        %v1982 = vmul.f32 %v1735, %v1977
        %v1983 = vmul.f32 %v1736, %v1977
        %1990 = vrot.lane.b32.xlu0 %v1978, 126
        %v1991 = vpop.permute.xlu0 %1990
        %1992 = vrot.lane.b32.xlu0 %v1979, 126
        %v1993 = vpop.permute.xlu0 %1992
        %1994 = vrot.lane.b32.xlu0 %v1980, 126
        %v1995 = vpop.permute.xlu0 %1994
        %1996 = vrot.lane.b32.xlu0 %v1981, 126
        %v1997 = vpop.permute.xlu0 %1996
        %1998 = vrot.lane.b32.xlu0 %v1982, 126
        %v1999 = vpop.permute.xlu0 %1998
        %2000 = vrot.lane.b32.xlu0 %v1983, 126
        %v2001 = vpop.permute.xlu0 %2000
        %v2002 = vsel %vm413, %v1991, %v1993
        %v2003 = vsel %vm413, %v1995, %v1997
        %v2004 = vsel %vm413, %v1999, %v2001
        %v2011 = vadd.f32 %v1970, %v2002
        %v2012 = vadd.f32 %v1971, %v1993
        %v2013 = vadd.f32 %v1972, %v2003
        %v2014 = vadd.f32 %v1973, %v1997
        %v2015 = vadd.f32 %v1974, %v2004
        %v2016 = vadd.f32 %v1975, %v2001
        %s2017 = sld [smem:[#allocation5 + $0x3b]]
        %v2018 = vstv %s2017
        %v2019 = vmul.f32 %v1732, %v2018
        %v2020 = vmul.f32 %v1734, %v2018
        %v2021 = vmul.f32 %v1736, %v2018
        %2025 = vrot.lane.b32.xlu0 %v2019, 125
        %v2026 = vpop.permute.xlu0 %2025
        %2027 = vrot.lane.b32.xlu0 %v2020, 125
        %v2028 = vpop.permute.xlu0 %2027
        %2029 = vrot.lane.b32.xlu0 %v2021, 125
        %v2030 = vpop.permute.xlu0 %2029
        %v2034 = vadd.f32 %v2011, %v2026
        %v2035 = vadd.f32 %v2012, %v2026
        %v2036 = vadd.f32 %v2013, %v2028
        %v2037 = vadd.f32 %v2014, %v2028
        %v2038 = vadd.f32 %v2015, %v2030
        %v2039 = vadd.f32 %v2016, %v2030
        %s2040 = sld [smem:[#allocation5 + $0x3c]]
        %v2041 = vstv %s2040
        %v2042 = vmul.f32 %v1732, %v2041
        %v2043 = vmul.f32 %v1734, %v2041
        %v2044 = vmul.f32 %v1736, %v2041
        %2048 = vrot.lane.b32.xlu0 %v2042, 124
        %v2049 = vpop.permute.xlu0 %2048
        %2050 = vrot.lane.b32.xlu0 %v2043, 124
        %v2051 = vpop.permute.xlu0 %2050
        %2052 = vrot.lane.b32.xlu0 %v2044, 124
        %v2053 = vpop.permute.xlu0 %2052
        %v2057 = vadd.f32 %v2034, %v2049
        %v2058 = vadd.f32 %v2035, %v2049
        %v2059 = vadd.f32 %v2036, %v2051
        %v2060 = vadd.f32 %v2037, %v2051
        %v2061 = vadd.f32 %v2038, %v2053
        %v2062 = vadd.f32 %v2039, %v2053
        %s2063 = sld [smem:[#allocation5 + $0x3d]]
        %v2064 = vstv %s2063
        %v2065 = vmul.f32 %v1732, %v2064
        %v2066 = vmul.f32 %v1734, %v2064
        %v2067 = vmul.f32 %v1736, %v2064
        %2071 = vrot.lane.b32.xlu0 %v2065, 123
        %v2072 = vpop.permute.xlu0 %2071
        %2073 = vrot.lane.b32.xlu0 %v2066, 123
        %v2074 = vpop.permute.xlu0 %2073
        %2075 = vrot.lane.b32.xlu0 %v2067, 123
        %v2076 = vpop.permute.xlu0 %2075
        %v2080 = vadd.f32 %v2057, %v2072
        %v2081 = vadd.f32 %v2058, %v2072
        %v2082 = vadd.f32 %v2059, %v2074
        %v2083 = vadd.f32 %v2060, %v2074
        %v2084 = vadd.f32 %v2061, %v2076
        %v2085 = vadd.f32 %v2062, %v2076
        %s2086 = sld [smem:[#allocation5 + $0x3e]]
        %v2087 = vstv %s2086
        %v2088 = vmul.f32 %v1732, %v2087
        %v2089 = vmul.f32 %v1734, %v2087
        %v2090 = vmul.f32 %v1736, %v2087
        %2094 = vrot.lane.b32.xlu0 %v2088, 122
        %v2095 = vpop.permute.xlu0 %2094
        %2096 = vrot.lane.b32.xlu0 %v2089, 122
        %v2097 = vpop.permute.xlu0 %2096
        %2098 = vrot.lane.b32.xlu0 %v2090, 122
        %v2099 = vpop.permute.xlu0 %2098
        %v2103 = vadd.f32 %v2080, %v2095
        %v2104 = vadd.f32 %v2081, %v2095
        %v2105 = vadd.f32 %v2082, %v2097
        %v2106 = vadd.f32 %v2083, %v2097
        %v2107 = vadd.f32 %v2084, %v2099
        %v2108 = vadd.f32 %v2085, %v2099
        %v2115 = vrot.slane %v2103, 1
        %v2116 = vrot.slane %v2105, 1
        %v2117 = vsel %vm715, %v2115, %v2116
        %v2118 = vrot.slane %v2104, 1
        %v2119 = vrot.slane %v2106, 1
        %v2120 = vsel %vm715, %v2118, %v2119
        %v2121 = vrot.slane %v2107, 1
        %v2122 = vsel %vm715, %v2116, %v2121
        %v2123 = vrot.slane %v2108, 1
        %v2124 = vsel %vm715, %v2119, %v2123
        %v2131 = vadd.f32 %v1921, %v2117
        %v2132 = vadd.f32 %v1922, %v2120
        %v2133 = vadd.f32 %v1923, %v2122
        %v2134 = vadd.f32 %v1924, %v2124
        %v2135 = vadd.f32 %v1925, %v2121
        %v2136 = vadd.f32 %v1926, %v2123
        %s2137 = sld [smem:[#allocation5 + $0x3f]]
        %v2138 = vstv %s2137
        %v2139 = vmul.f32 %v1731, %v2138
        %v2140 = vmul.f32 %v1732, %v2138
        %v2141 = vmul.f32 %v1733, %v2138
        %v2142 = vmul.f32 %v1734, %v2138
        %v2143 = vmul.f32 %v1735, %v2138
        %v2144 = vmul.f32 %v1736, %v2138
        %s2145 = sld [smem:[#allocation5 + $0x40]]
        %v2146 = vstv %s2145
        %v2147 = vmul.f32 %v1731, %v2146
        %v2148 = vmul.f32 %v1732, %v2146
        %v2149 = vmul.f32 %v1733, %v2146
        %v2150 = vmul.f32 %v1734, %v2146
        %v2151 = vmul.f32 %v1735, %v2146
        %v2152 = vmul.f32 %v1736, %v2146
        %2159 = vrot.lane.b32.xlu0 %v2147, 127
        %v2160 = vpop.permute.xlu0 %2159
        %2161 = vrot.lane.b32.xlu0 %v2148, 127
        %v2162 = vpop.permute.xlu0 %2161
        %2163 = vrot.lane.b32.xlu0 %v2149, 127
        %v2164 = vpop.permute.xlu0 %2163
        %2165 = vrot.lane.b32.xlu0 %v2150, 127
        %v2166 = vpop.permute.xlu0 %2165
        %2167 = vrot.lane.b32.xlu0 %v2151, 127
        %v2168 = vpop.permute.xlu0 %2167
        %2169 = vrot.lane.b32.xlu0 %v2152, 127
        %v2170 = vpop.permute.xlu0 %2169
        %v2171 = vsel %vm371, %v2160, %v2162
        %v2172 = vsel %vm371, %v2164, %v2166
        %v2173 = vsel %vm371, %v2168, %v2170
        %v2180 = vadd.f32 %v2139, %v2171
        %v2181 = vadd.f32 %v2140, %v2162
        %v2182 = vadd.f32 %v2141, %v2172
        %v2183 = vadd.f32 %v2142, %v2166
        %v2184 = vadd.f32 %v2143, %v2173
        %v2185 = vadd.f32 %v2144, %v2170
        %s2186 = sld [smem:[#allocation5 + $0x41]]
        %v2187 = vstv %s2186
        %v2188 = vmul.f32 %v1731, %v2187
        %v2189 = vmul.f32 %v1732, %v2187
        %v2190 = vmul.f32 %v1733, %v2187
        %v2191 = vmul.f32 %v1734, %v2187
        %v2192 = vmul.f32 %v1735, %v2187
        %v2193 = vmul.f32 %v1736, %v2187
        %2200 = vrot.lane.b32.xlu0 %v2188, 126
        %v2201 = vpop.permute.xlu0 %2200
        %2202 = vrot.lane.b32.xlu0 %v2189, 126
        %v2203 = vpop.permute.xlu0 %2202
        %2204 = vrot.lane.b32.xlu0 %v2190, 126
        %v2205 = vpop.permute.xlu0 %2204
        %2206 = vrot.lane.b32.xlu0 %v2191, 126
        %v2207 = vpop.permute.xlu0 %2206
        %2208 = vrot.lane.b32.xlu0 %v2192, 126
        %v2209 = vpop.permute.xlu0 %2208
        %2210 = vrot.lane.b32.xlu0 %v2193, 126
        %v2211 = vpop.permute.xlu0 %2210
        %v2212 = vsel %vm413, %v2201, %v2203
        %v2213 = vsel %vm413, %v2205, %v2207
        %v2214 = vsel %vm413, %v2209, %v2211
        %v2221 = vadd.f32 %v2180, %v2212
        %v2222 = vadd.f32 %v2181, %v2203
        %v2223 = vadd.f32 %v2182, %v2213
        %v2224 = vadd.f32 %v2183, %v2207
        %v2225 = vadd.f32 %v2184, %v2214
        %v2226 = vadd.f32 %v2185, %v2211
        %s2227 = sld [smem:[#allocation5 + $0x42]]
        %v2228 = vstv %s2227
        %v2229 = vmul.f32 %v1732, %v2228
        %v2230 = vmul.f32 %v1734, %v2228
        %v2231 = vmul.f32 %v1736, %v2228
        %2235 = vrot.lane.b32.xlu0 %v2229, 125
        %v2236 = vpop.permute.xlu0 %2235
        %2237 = vrot.lane.b32.xlu0 %v2230, 125
        %v2238 = vpop.permute.xlu0 %2237
        %2239 = vrot.lane.b32.xlu0 %v2231, 125
        %v2240 = vpop.permute.xlu0 %2239
        %v2244 = vadd.f32 %v2221, %v2236
        %v2245 = vadd.f32 %v2222, %v2236
        %v2246 = vadd.f32 %v2223, %v2238
        %v2247 = vadd.f32 %v2224, %v2238
        %v2248 = vadd.f32 %v2225, %v2240
        %v2249 = vadd.f32 %v2226, %v2240
        %s2250 = sld [smem:[#allocation5 + $0x43]]
        %v2251 = vstv %s2250
        %v2252 = vmul.f32 %v1732, %v2251
        %v2253 = vmul.f32 %v1734, %v2251
        %v2254 = vmul.f32 %v1736, %v2251
        %2258 = vrot.lane.b32.xlu0 %v2252, 124
        %v2259 = vpop.permute.xlu0 %2258
        %2260 = vrot.lane.b32.xlu0 %v2253, 124
        %v2261 = vpop.permute.xlu0 %2260
        %2262 = vrot.lane.b32.xlu0 %v2254, 124
        %v2263 = vpop.permute.xlu0 %2262
        %v2267 = vadd.f32 %v2244, %v2259
        %v2268 = vadd.f32 %v2245, %v2259
        %v2269 = vadd.f32 %v2246, %v2261
        %v2270 = vadd.f32 %v2247, %v2261
        %v2271 = vadd.f32 %v2248, %v2263
        %v2272 = vadd.f32 %v2249, %v2263
        %s2273 = sld [smem:[#allocation5 + $0x44]]
        %v2274 = vstv %s2273
        %v2275 = vmul.f32 %v1732, %v2274
        %v2276 = vmul.f32 %v1734, %v2274
        %v2277 = vmul.f32 %v1736, %v2274
        %2281 = vrot.lane.b32.xlu0 %v2275, 123
        %v2282 = vpop.permute.xlu0 %2281
        %2283 = vrot.lane.b32.xlu0 %v2276, 123
        %v2284 = vpop.permute.xlu0 %2283
        %2285 = vrot.lane.b32.xlu0 %v2277, 123
        %v2286 = vpop.permute.xlu0 %2285
        %v2290 = vadd.f32 %v2267, %v2282
        %v2291 = vadd.f32 %v2268, %v2282
        %v2292 = vadd.f32 %v2269, %v2284
        %v2293 = vadd.f32 %v2270, %v2284
        %v2294 = vadd.f32 %v2271, %v2286
        %v2295 = vadd.f32 %v2272, %v2286
        %s2296 = sld [smem:[#allocation5 + $0x45]]
        %v2297 = vstv %s2296
        %v2298 = vmul.f32 %v1732, %v2297
        %v2299 = vmul.f32 %v1734, %v2297
        %v2300 = vmul.f32 %v1736, %v2297
        %2304 = vrot.lane.b32.xlu0 %v2298, 122
        %v2305 = vpop.permute.xlu0 %2304
        %2306 = vrot.lane.b32.xlu0 %v2299, 122
        %v2307 = vpop.permute.xlu0 %2306
        %2308 = vrot.lane.b32.xlu0 %v2300, 122
        %v2309 = vpop.permute.xlu0 %2308
        %v2313 = vadd.f32 %v2290, %v2305
        %v2314 = vadd.f32 %v2291, %v2305
        %v2315 = vadd.f32 %v2292, %v2307
        %v2316 = vadd.f32 %v2293, %v2307
        %v2317 = vadd.f32 %v2294, %v2309
        %v2318 = vadd.f32 %v2295, %v2309
        %v2325 = vrot.slane %v2313, 2
        %v2326 = vrot.slane %v2315, 2
        %v2327 = vsel %vm926, %v2325, %v2326
        %v2328 = vrot.slane %v2314, 2
        %v2329 = vrot.slane %v2316, 2
        %v2330 = vsel %vm926, %v2328, %v2329
        %v2331 = vrot.slane %v2317, 2
        %v2332 = vsel %vm926, %v2326, %v2331
        %v2333 = vrot.slane %v2318, 2
        %v2334 = vsel %vm926, %v2329, %v2333
        %v2341 = vadd.f32 %v2131, %v2327
        %v2342 = vadd.f32 %v2132, %v2330
        %v2343 = vadd.f32 %v2133, %v2332
        %v2344 = vadd.f32 %v2134, %v2334
        %v2345 = vadd.f32 %v2135, %v2331
        %v2346 = vadd.f32 %v2136, %v2333
        %s2347 = sld [smem:[#allocation5 + $0x46]]
        %v2348 = vstv %s2347
        %v2349 = vmul.f32 %v1733, %v2348
        %v2350 = vmul.f32 %v1734, %v2348
        %v2351 = vmul.f32 %v1735, %v2348
        %v2352 = vmul.f32 %v1736, %v2348
        %s2353 = sld [smem:[#allocation5 + $0x47]]
        %v2354 = vstv %s2353
        %v2355 = vmul.f32 %v1733, %v2354
        %v2356 = vmul.f32 %v1734, %v2354
        %v2357 = vmul.f32 %v1735, %v2354
        %v2358 = vmul.f32 %v1736, %v2354
        %2363 = vrot.lane.b32.xlu0 %v2355, 127
        %v2364 = vpop.permute.xlu0 %2363
        %2365 = vrot.lane.b32.xlu0 %v2356, 127
        %v2366 = vpop.permute.xlu0 %2365
        %2367 = vrot.lane.b32.xlu0 %v2357, 127
        %v2368 = vpop.permute.xlu0 %2367
        %2369 = vrot.lane.b32.xlu0 %v2358, 127
        %v2370 = vpop.permute.xlu0 %2369
        %v2371 = vsel %vm371, %v2364, %v2366
        %v2372 = vsel %vm371, %v2368, %v2370
        %v2377 = vadd.f32 %v2349, %v2371
        %v2378 = vadd.f32 %v2350, %v2366
        %v2379 = vadd.f32 %v2351, %v2372
        %v2380 = vadd.f32 %v2352, %v2370
        %s2381 = sld [smem:[#allocation5 + $0x48]]
        %v2382 = vstv %s2381
        %v2383 = vmul.f32 %v1733, %v2382
        %v2384 = vmul.f32 %v1734, %v2382
        %v2385 = vmul.f32 %v1735, %v2382
        %v2386 = vmul.f32 %v1736, %v2382
        %2391 = vrot.lane.b32.xlu0 %v2383, 126
        %v2392 = vpop.permute.xlu0 %2391
        %2393 = vrot.lane.b32.xlu0 %v2384, 126
        %v2394 = vpop.permute.xlu0 %2393
        %2395 = vrot.lane.b32.xlu0 %v2385, 126
        %v2396 = vpop.permute.xlu0 %2395
        %2397 = vrot.lane.b32.xlu0 %v2386, 126
        %v2398 = vpop.permute.xlu0 %2397
        %v2399 = vsel %vm413, %v2392, %v2394
        %v2400 = vsel %vm413, %v2396, %v2398
        %v2405 = vadd.f32 %v2377, %v2399
        %v2406 = vadd.f32 %v2378, %v2394
        %v2407 = vadd.f32 %v2379, %v2400
        %v2408 = vadd.f32 %v2380, %v2398
        %s2409 = sld [smem:[#allocation5 + $0x49]]
        %v2410 = vstv %s2409
        %v2411 = vmul.f32 %v1734, %v2410
        %v2412 = vmul.f32 %v1736, %v2410
        %2415 = vrot.lane.b32.xlu0 %v2411, 125
        %v2416 = vpop.permute.xlu0 %2415
        %2417 = vrot.lane.b32.xlu0 %v2412, 125
        %v2418 = vpop.permute.xlu0 %2417
        %v2421 = vadd.f32 %v2405, %v2416
        %v2422 = vadd.f32 %v2406, %v2416
        %v2423 = vadd.f32 %v2407, %v2418
        %v2424 = vadd.f32 %v2408, %v2418
        %s2425 = sld [smem:[#allocation5 + $0x4a]]
        %v2426 = vstv %s2425
        %v2427 = vmul.f32 %v1734, %v2426
        %v2428 = vmul.f32 %v1736, %v2426
        %2431 = vrot.lane.b32.xlu0 %v2427, 124
        %v2432 = vpop.permute.xlu0 %2431
        %2433 = vrot.lane.b32.xlu0 %v2428, 124
        %v2434 = vpop.permute.xlu0 %2433
        %v2437 = vadd.f32 %v2421, %v2432
        %v2438 = vadd.f32 %v2422, %v2432
        %v2439 = vadd.f32 %v2423, %v2434
        %v2440 = vadd.f32 %v2424, %v2434
        %s2441 = sld [smem:[#allocation5 + $0x4b]]
        %v2442 = vstv %s2441
        %v2443 = vmul.f32 %v1734, %v2442
        %v2444 = vmul.f32 %v1736, %v2442
        %2447 = vrot.lane.b32.xlu0 %v2443, 123
        %v2448 = vpop.permute.xlu0 %2447
        %2449 = vrot.lane.b32.xlu0 %v2444, 123
        %v2450 = vpop.permute.xlu0 %2449
        %v2453 = vadd.f32 %v2437, %v2448
        %v2454 = vadd.f32 %v2438, %v2448
        %v2455 = vadd.f32 %v2439, %v2450
        %v2456 = vadd.f32 %v2440, %v2450
        %s2457 = sld [smem:[#allocation5 + $0x4c]]
        %v2458 = vstv %s2457
        %v2459 = vmul.f32 %v1734, %v2458
        %v2460 = vmul.f32 %v1736, %v2458
        %2463 = vrot.lane.b32.xlu0 %v2459, 122
        %v2464 = vpop.permute.xlu0 %2463
        %2465 = vrot.lane.b32.xlu0 %v2460, 122
        %v2466 = vpop.permute.xlu0 %2465
        %v2469 = vadd.f32 %v2453, %v2464
        %v2470 = vadd.f32 %v2454, %v2464
        %v2471 = vadd.f32 %v2455, %v2466
        %v2472 = vadd.f32 %v2456, %v2466
        %v2477 = vrot.slane %v2469, 3
        %v2478 = vrot.slane %v2470, 3
        %v2479 = vrot.slane %v2471, 3
        %v2480 = vsel %vm1079, %v2477, %v2479
        %v2481 = vrot.slane %v2472, 3
        %v2482 = vsel %vm1079, %v2478, %v2481
        %v2489 = vadd.f32 %v2341, %v2477
        %v2490 = vadd.f32 %v2342, %v2478
        %v2491 = vadd.f32 %v2343, %v2480
        %v2492 = vadd.f32 %v2344, %v2482
        %v2493 = vadd.f32 %v2345, %v2479
        %v2494 = vadd.f32 %v2346, %v2481
        %s2495 = sld [smem:[#allocation5 + $0x4d]]
        %v2496 = vstv %s2495
        %v2497 = vmul.f32 %v1733, %v2496
        %v2498 = vmul.f32 %v1734, %v2496
        %v2499 = vmul.f32 %v1735, %v2496
        %v2500 = vmul.f32 %v1736, %v2496
        %v2501 = vmul.f32 %v1737, %v2496
        %v2502 = vmul.f32 %v1738, %v2496
        %s2503 = sld [smem:[#allocation5 + $0x4e]]
        %v2504 = vstv %s2503
        %v2505 = vmul.f32 %v1733, %v2504
        %v2506 = vmul.f32 %v1734, %v2504
        %v2507 = vmul.f32 %v1735, %v2504
        %v2508 = vmul.f32 %v1736, %v2504
        %v2509 = vmul.f32 %v1737, %v2504
        %v2510 = vmul.f32 %v1738, %v2504
        %2517 = vrot.lane.b32.xlu0 %v2505, 127
        %v2518 = vpop.permute.xlu0 %2517
        %2519 = vrot.lane.b32.xlu0 %v2506, 127
        %v2520 = vpop.permute.xlu0 %2519
        %2521 = vrot.lane.b32.xlu0 %v2507, 127
        %v2522 = vpop.permute.xlu0 %2521
        %2523 = vrot.lane.b32.xlu0 %v2508, 127
        %v2524 = vpop.permute.xlu0 %2523
        %2525 = vrot.lane.b32.xlu0 %v2509, 127
        %v2526 = vpop.permute.xlu0 %2525
        %2527 = vrot.lane.b32.xlu0 %v2510, 127
        %v2528 = vpop.permute.xlu0 %2527
        %v2529 = vsel %vm371, %v2518, %v2520
        %v2530 = vsel %vm371, %v2522, %v2524
        %v2531 = vsel %vm371, %v2526, %v2528
        %v2538 = vadd.f32 %v2497, %v2529
        %v2539 = vadd.f32 %v2498, %v2520
        %v2540 = vadd.f32 %v2499, %v2530
        %v2541 = vadd.f32 %v2500, %v2524
        %v2542 = vadd.f32 %v2501, %v2531
        %v2543 = vadd.f32 %v2502, %v2528
        %s2544 = sld [smem:[#allocation5 + $0x4f]]
        %v2545 = vstv %s2544
        %v2546 = vmul.f32 %v1733, %v2545
        %v2547 = vmul.f32 %v1734, %v2545
        %v2548 = vmul.f32 %v1735, %v2545
        %v2549 = vmul.f32 %v1736, %v2545
        %v2550 = vmul.f32 %v1737, %v2545
        %v2551 = vmul.f32 %v1738, %v2545
        %2558 = vrot.lane.b32.xlu0 %v2546, 126
        %v2559 = vpop.permute.xlu0 %2558
        %2560 = vrot.lane.b32.xlu0 %v2547, 126
        %v2561 = vpop.permute.xlu0 %2560
        %2562 = vrot.lane.b32.xlu0 %v2548, 126
        %v2563 = vpop.permute.xlu0 %2562
        %2564 = vrot.lane.b32.xlu0 %v2549, 126
        %v2565 = vpop.permute.xlu0 %2564
        %2566 = vrot.lane.b32.xlu0 %v2550, 126
        %v2567 = vpop.permute.xlu0 %2566
        %2568 = vrot.lane.b32.xlu0 %v2551, 126
        %v2569 = vpop.permute.xlu0 %2568
        %v2570 = vsel %vm413, %v2559, %v2561
        %v2571 = vsel %vm413, %v2563, %v2565
        %v2572 = vsel %vm413, %v2567, %v2569
        %v2579 = vadd.f32 %v2538, %v2570
        %v2580 = vadd.f32 %v2539, %v2561
        %v2581 = vadd.f32 %v2540, %v2571
        %v2582 = vadd.f32 %v2541, %v2565
        %v2583 = vadd.f32 %v2542, %v2572
        %v2584 = vadd.f32 %v2543, %v2569
        %s2585 = sld [smem:[#allocation5 + $0x50]]
        %v2586 = vstv %s2585
        %v2587 = vmul.f32 %v1734, %v2586
        %v2588 = vmul.f32 %v1736, %v2586
        %v2589 = vmul.f32 %v1738, %v2586
        %2593 = vrot.lane.b32.xlu0 %v2587, 125
        %v2594 = vpop.permute.xlu0 %2593
        %2595 = vrot.lane.b32.xlu0 %v2588, 125
        %v2596 = vpop.permute.xlu0 %2595
        %2597 = vrot.lane.b32.xlu0 %v2589, 125
        %v2598 = vpop.permute.xlu0 %2597
        %v2602 = vadd.f32 %v2579, %v2594
        %v2603 = vadd.f32 %v2580, %v2594
        %v2604 = vadd.f32 %v2581, %v2596
        %v2605 = vadd.f32 %v2582, %v2596
        %v2606 = vadd.f32 %v2583, %v2598
        %v2607 = vadd.f32 %v2584, %v2598
        %s2608 = sld [smem:[#allocation5 + $0x51]]
        %v2609 = vstv %s2608
        %v2610 = vmul.f32 %v1734, %v2609
        %v2611 = vmul.f32 %v1736, %v2609
        %v2612 = vmul.f32 %v1738, %v2609
        %2616 = vrot.lane.b32.xlu0 %v2610, 124
        %v2617 = vpop.permute.xlu0 %2616
        %2618 = vrot.lane.b32.xlu0 %v2611, 124
        %v2619 = vpop.permute.xlu0 %2618
        %2620 = vrot.lane.b32.xlu0 %v2612, 124
        %v2621 = vpop.permute.xlu0 %2620
        %v2625 = vadd.f32 %v2602, %v2617
        %v2626 = vadd.f32 %v2603, %v2617
        %v2627 = vadd.f32 %v2604, %v2619
        %v2628 = vadd.f32 %v2605, %v2619
        %v2629 = vadd.f32 %v2606, %v2621
        %v2630 = vadd.f32 %v2607, %v2621
        %s2631 = sld [smem:[#allocation5 + $0x52]]
        %v2632 = vstv %s2631
        %v2633 = vmul.f32 %v1734, %v2632
        %v2634 = vmul.f32 %v1736, %v2632
        %v2635 = vmul.f32 %v1738, %v2632
        %2639 = vrot.lane.b32.xlu0 %v2633, 123
        %v2640 = vpop.permute.xlu0 %2639
        %2641 = vrot.lane.b32.xlu0 %v2634, 123
        %v2642 = vpop.permute.xlu0 %2641
        %2643 = vrot.lane.b32.xlu0 %v2635, 123
        %v2644 = vpop.permute.xlu0 %2643
        %v2648 = vadd.f32 %v2625, %v2640
        %v2649 = vadd.f32 %v2626, %v2640
        %v2650 = vadd.f32 %v2627, %v2642
        %v2651 = vadd.f32 %v2628, %v2642
        %v2652 = vadd.f32 %v2629, %v2644
        %v2653 = vadd.f32 %v2630, %v2644
        %s2654 = sld [smem:[#allocation5 + $0x53]]
        %v2655 = vstv %s2654
        %v2656 = vmul.f32 %v1734, %v2655
        %v2657 = vmul.f32 %v1736, %v2655
        %v2658 = vmul.f32 %v1738, %v2655
        %2662 = vrot.lane.b32.xlu0 %v2656, 122
        %v2663 = vpop.permute.xlu0 %2662
        %2664 = vrot.lane.b32.xlu0 %v2657, 122
        %v2665 = vpop.permute.xlu0 %2664
        %2666 = vrot.lane.b32.xlu0 %v2658, 122
        %v2667 = vpop.permute.xlu0 %2666
        %v2671 = vadd.f32 %v2648, %v2663
        %v2672 = vadd.f32 %v2649, %v2663
        %v2673 = vadd.f32 %v2650, %v2665
        %v2674 = vadd.f32 %v2651, %v2665
        %v2675 = vadd.f32 %v2652, %v2667
        %v2676 = vadd.f32 %v2653, %v2667
        %v2683 = vrot.slane %v2671, 4
        %v2684 = vrot.slane %v2672, 4
        %v2685 = vrot.slane %v2673, 4
        %v2686 = vsel %vm1286, %v2683, %v2685
        %v2687 = vrot.slane %v2674, 4
        %v2688 = vsel %vm1286, %v2684, %v2687
        %v2689 = vrot.slane %v2675, 4
        %v2690 = vsel %vm1286, %v2685, %v2689
        %v2691 = vrot.slane %v2676, 4
        %v2692 = vsel %vm1286, %v2687, %v2691
        %v2699 = vadd.f32 %v2489, %v2683
        %v2700 = vadd.f32 %v2490, %v2684
        %v2701 = vadd.f32 %v2491, %v2686
        %v2702 = vadd.f32 %v2492, %v2688
        %v2703 = vadd.f32 %v2493, %v2690
        %v2704 = vadd.f32 %v2494, %v2692
        %s2705 = sld [smem:[#allocation5 + $0x54]]
        %v2706 = vstv %s2705
        %v2707 = vmul.f32 %v1733, %v2706
        %v2708 = vmul.f32 %v1734, %v2706
        %v2709 = vmul.f32 %v1735, %v2706
        %v2710 = vmul.f32 %v1736, %v2706
        %v2711 = vmul.f32 %v1737, %v2706
        %v2712 = vmul.f32 %v1738, %v2706
        %s2713 = sld [smem:[#allocation5 + $0x55]]
        %v2714 = vstv %s2713
        %v2715 = vmul.f32 %v1733, %v2714
        %v2716 = vmul.f32 %v1734, %v2714
        %v2717 = vmul.f32 %v1735, %v2714
        %v2718 = vmul.f32 %v1736, %v2714
        %v2719 = vmul.f32 %v1737, %v2714
        %v2720 = vmul.f32 %v1738, %v2714
        %2727 = vrot.lane.b32.xlu0 %v2715, 127
        %v2728 = vpop.permute.xlu0 %2727
        %2729 = vrot.lane.b32.xlu0 %v2716, 127
        %v2730 = vpop.permute.xlu0 %2729
        %2731 = vrot.lane.b32.xlu0 %v2717, 127
        %v2732 = vpop.permute.xlu0 %2731
        %2733 = vrot.lane.b32.xlu0 %v2718, 127
        %v2734 = vpop.permute.xlu0 %2733
        %2735 = vrot.lane.b32.xlu0 %v2719, 127
        %v2736 = vpop.permute.xlu0 %2735
        %2737 = vrot.lane.b32.xlu0 %v2720, 127
        %v2738 = vpop.permute.xlu0 %2737
        %v2739 = vsel %vm371, %v2728, %v2730
        %v2740 = vsel %vm371, %v2732, %v2734
        %v2741 = vsel %vm371, %v2736, %v2738
        %v2748 = vadd.f32 %v2707, %v2739
        %v2749 = vadd.f32 %v2708, %v2730
        %v2750 = vadd.f32 %v2709, %v2740
        %v2751 = vadd.f32 %v2710, %v2734
        %v2752 = vadd.f32 %v2711, %v2741
        %v2753 = vadd.f32 %v2712, %v2738
        %s2754 = sld [smem:[#allocation5 + $0x56]]
        %v2755 = vstv %s2754
        %v2756 = vmul.f32 %v1733, %v2755
        %v2757 = vmul.f32 %v1734, %v2755
        %v2758 = vmul.f32 %v1735, %v2755
        %v2759 = vmul.f32 %v1736, %v2755
        %v2760 = vmul.f32 %v1737, %v2755
        %v2761 = vmul.f32 %v1738, %v2755
        %2768 = vrot.lane.b32.xlu0 %v2756, 126
        %v2769 = vpop.permute.xlu0 %2768
        %2770 = vrot.lane.b32.xlu0 %v2757, 126
        %v2771 = vpop.permute.xlu0 %2770
        %2772 = vrot.lane.b32.xlu0 %v2758, 126
        %v2773 = vpop.permute.xlu0 %2772
        %2774 = vrot.lane.b32.xlu0 %v2759, 126
        %v2775 = vpop.permute.xlu0 %2774
        %2776 = vrot.lane.b32.xlu0 %v2760, 126
        %v2777 = vpop.permute.xlu0 %2776
        %2778 = vrot.lane.b32.xlu0 %v2761, 126
        %v2779 = vpop.permute.xlu0 %2778
        %v2780 = vsel %vm413, %v2769, %v2771
        %v2781 = vsel %vm413, %v2773, %v2775
        %v2782 = vsel %vm413, %v2777, %v2779
        %v2789 = vadd.f32 %v2748, %v2780
        %v2790 = vadd.f32 %v2749, %v2771
        %v2791 = vadd.f32 %v2750, %v2781
        %v2792 = vadd.f32 %v2751, %v2775
        %v2793 = vadd.f32 %v2752, %v2782
        %v2794 = vadd.f32 %v2753, %v2779
        %s2795 = sld [smem:[#allocation5 + $0x57]]
        %v2796 = vstv %s2795
        %v2797 = vmul.f32 %v1734, %v2796
        %v2798 = vmul.f32 %v1736, %v2796
        %v2799 = vmul.f32 %v1738, %v2796
        %2803 = vrot.lane.b32.xlu0 %v2797, 125
        %v2804 = vpop.permute.xlu0 %2803
        %2805 = vrot.lane.b32.xlu0 %v2798, 125
        %v2806 = vpop.permute.xlu0 %2805
        %2807 = vrot.lane.b32.xlu0 %v2799, 125
        %v2808 = vpop.permute.xlu0 %2807
        %v2812 = vadd.f32 %v2789, %v2804
        %v2813 = vadd.f32 %v2790, %v2804
        %v2814 = vadd.f32 %v2791, %v2806
        %v2815 = vadd.f32 %v2792, %v2806
        %v2816 = vadd.f32 %v2793, %v2808
        %v2817 = vadd.f32 %v2794, %v2808
        %s2818 = sld [smem:[#allocation5 + $0x58]]
        %v2819 = vstv %s2818
        %v2820 = vmul.f32 %v1734, %v2819
        %v2821 = vmul.f32 %v1736, %v2819
        %v2822 = vmul.f32 %v1738, %v2819
        %2826 = vrot.lane.b32.xlu0 %v2820, 124
        %v2827 = vpop.permute.xlu0 %2826
        %2828 = vrot.lane.b32.xlu0 %v2821, 124
        %v2829 = vpop.permute.xlu0 %2828
        %2830 = vrot.lane.b32.xlu0 %v2822, 124
        %v2831 = vpop.permute.xlu0 %2830
        %v2835 = vadd.f32 %v2812, %v2827
        %v2836 = vadd.f32 %v2813, %v2827
        %v2837 = vadd.f32 %v2814, %v2829
        %v2838 = vadd.f32 %v2815, %v2829
        %v2839 = vadd.f32 %v2816, %v2831
        %v2840 = vadd.f32 %v2817, %v2831
        %s2841 = sld [smem:[#allocation5 + $0x59]]
        %v2842 = vstv %s2841
        %v2843 = vmul.f32 %v1734, %v2842
        %v2844 = vmul.f32 %v1736, %v2842
        %v2845 = vmul.f32 %v1738, %v2842
        %2849 = vrot.lane.b32.xlu0 %v2843, 123
        %v2850 = vpop.permute.xlu0 %2849
        %2851 = vrot.lane.b32.xlu0 %v2844, 123
        %v2852 = vpop.permute.xlu0 %2851
        %2853 = vrot.lane.b32.xlu0 %v2845, 123
        %v2854 = vpop.permute.xlu0 %2853
        %v2858 = vadd.f32 %v2835, %v2850
        %v2859 = vadd.f32 %v2836, %v2850
        %v2860 = vadd.f32 %v2837, %v2852
        %v2861 = vadd.f32 %v2838, %v2852
        %v2862 = vadd.f32 %v2839, %v2854
        %v2863 = vadd.f32 %v2840, %v2854
        %s2864 = sld [smem:[#allocation5 + $0x5a]]
        %v2865 = vstv %s2864
        %v2866 = vmul.f32 %v1734, %v2865
        %v2867 = vmul.f32 %v1736, %v2865
        %v2868 = vmul.f32 %v1738, %v2865
        %2872 = vrot.lane.b32.xlu0 %v2866, 122
        %v2873 = vpop.permute.xlu0 %2872
        %2874 = vrot.lane.b32.xlu0 %v2867, 122
        %v2875 = vpop.permute.xlu0 %2874
        %2876 = vrot.lane.b32.xlu0 %v2868, 122
        %v2877 = vpop.permute.xlu0 %2876
        %v2881 = vadd.f32 %v2858, %v2873
        %v2882 = vadd.f32 %v2859, %v2873
        %v2883 = vadd.f32 %v2860, %v2875
        %v2884 = vadd.f32 %v2861, %v2875
        %v2885 = vadd.f32 %v2862, %v2877
        %v2886 = vadd.f32 %v2863, %v2877
        %v2893 = vrot.slane %v2881, 5
        %v2894 = vrot.slane %v2882, 5
        %v2895 = vrot.slane %v2883, 5
        %v2896 = vsel %vm1497, %v2893, %v2895
        %v2897 = vrot.slane %v2884, 5
        %v2898 = vsel %vm1497, %v2894, %v2897
        %v2899 = vrot.slane %v2885, 5
        %v2900 = vsel %vm1497, %v2895, %v2899
        %v2901 = vrot.slane %v2886, 5
        %v2902 = vsel %vm1497, %v2897, %v2901
        %v2909 = vadd.f32 %v2699, %v2893
        %v2910 = vadd.f32 %v2700, %v2894
        %v2911 = vadd.f32 %v2701, %v2896
        %v2912 = vadd.f32 %v2702, %v2898
        %v2913 = vadd.f32 %v2703, %v2900
        %v2914 = vadd.f32 %v2704, %v2902
        %s2915 = sld [smem:[#allocation5 + $0x5b]]
        %v2916 = vstv %s2915
        %v2917 = vmul.f32 %v1733, %v2916
        %v2918 = vmul.f32 %v1734, %v2916
        %v2919 = vmul.f32 %v1735, %v2916
        %v2920 = vmul.f32 %v1736, %v2916
        %v2921 = vmul.f32 %v1737, %v2916
        %v2922 = vmul.f32 %v1738, %v2916
        %s2923 = sld [smem:[#allocation5 + $0x5c]]
        %v2924 = vstv %s2923
        %v2925 = vmul.f32 %v1733, %v2924
        %v2926 = vmul.f32 %v1734, %v2924
        %v2927 = vmul.f32 %v1735, %v2924
        %v2928 = vmul.f32 %v1736, %v2924
        %v2929 = vmul.f32 %v1737, %v2924
        %v2930 = vmul.f32 %v1738, %v2924
        %2937 = vrot.lane.b32.xlu0 %v2925, 127
        %v2938 = vpop.permute.xlu0 %2937
        %2939 = vrot.lane.b32.xlu0 %v2926, 127
        %v2940 = vpop.permute.xlu0 %2939
        %2941 = vrot.lane.b32.xlu0 %v2927, 127
        %v2942 = vpop.permute.xlu0 %2941
        %2943 = vrot.lane.b32.xlu0 %v2928, 127
        %v2944 = vpop.permute.xlu0 %2943
        %2945 = vrot.lane.b32.xlu0 %v2929, 127
        %v2946 = vpop.permute.xlu0 %2945
        %2947 = vrot.lane.b32.xlu0 %v2930, 127
        %v2948 = vpop.permute.xlu0 %2947
        %v2949 = vsel %vm371, %v2938, %v2940
        %v2950 = vsel %vm371, %v2942, %v2944
        %v2951 = vsel %vm371, %v2946, %v2948
        %v2958 = vadd.f32 %v2917, %v2949
        %v2959 = vadd.f32 %v2918, %v2940
        %v2960 = vadd.f32 %v2919, %v2950
        %v2961 = vadd.f32 %v2920, %v2944
        %v2962 = vadd.f32 %v2921, %v2951
        %v2963 = vadd.f32 %v2922, %v2948
        %s2964 = sld [smem:[#allocation5 + $0x5d]]
        %v2965 = vstv %s2964
        %v2966 = vmul.f32 %v1733, %v2965
        %v2967 = vmul.f32 %v1734, %v2965
        %v2968 = vmul.f32 %v1735, %v2965
        %v2969 = vmul.f32 %v1736, %v2965
        %v2970 = vmul.f32 %v1737, %v2965
        %v2971 = vmul.f32 %v1738, %v2965
        %2978 = vrot.lane.b32.xlu0 %v2966, 126
        %v2979 = vpop.permute.xlu0 %2978
        %2980 = vrot.lane.b32.xlu0 %v2967, 126
        %v2981 = vpop.permute.xlu0 %2980
        %2982 = vrot.lane.b32.xlu0 %v2968, 126
        %v2983 = vpop.permute.xlu0 %2982
        %2984 = vrot.lane.b32.xlu0 %v2969, 126
        %v2985 = vpop.permute.xlu0 %2984
        %2986 = vrot.lane.b32.xlu0 %v2970, 126
        %v2987 = vpop.permute.xlu0 %2986
        %2988 = vrot.lane.b32.xlu0 %v2971, 126
        %v2989 = vpop.permute.xlu0 %2988
        %v2990 = vsel %vm413, %v2979, %v2981
        %v2991 = vsel %vm413, %v2983, %v2985
        %v2992 = vsel %vm413, %v2987, %v2989
        %v2999 = vadd.f32 %v2958, %v2990
        %v3000 = vadd.f32 %v2959, %v2981
        %v3001 = vadd.f32 %v2960, %v2991
        %v3002 = vadd.f32 %v2961, %v2985
        %v3003 = vadd.f32 %v2962, %v2992
        %v3004 = vadd.f32 %v2963, %v2989
        %s3005 = sld [smem:[#allocation5 + $0x5e]]
        %v3006 = vstv %s3005
        %v3007 = vmul.f32 %v1734, %v3006
        %v3008 = vmul.f32 %v1736, %v3006
        %v3009 = vmul.f32 %v1738, %v3006
        %3013 = vrot.lane.b32.xlu0 %v3007, 125
        %v3014 = vpop.permute.xlu0 %3013
        %3015 = vrot.lane.b32.xlu0 %v3008, 125
        %v3016 = vpop.permute.xlu0 %3015
        %3017 = vrot.lane.b32.xlu0 %v3009, 125
        %v3018 = vpop.permute.xlu0 %3017
        %v3022 = vadd.f32 %v2999, %v3014
        %v3023 = vadd.f32 %v3000, %v3014
        %v3024 = vadd.f32 %v3001, %v3016
        %v3025 = vadd.f32 %v3002, %v3016
        %v3026 = vadd.f32 %v3003, %v3018
        %v3027 = vadd.f32 %v3004, %v3018
        %s3028 = sld [smem:[#allocation5 + $0x5f]]
        %v3029 = vstv %s3028
        %v3030 = vmul.f32 %v1734, %v3029
        %v3031 = vmul.f32 %v1736, %v3029
        %v3032 = vmul.f32 %v1738, %v3029
        %3036 = vrot.lane.b32.xlu0 %v3030, 124
        %v3037 = vpop.permute.xlu0 %3036
        %3038 = vrot.lane.b32.xlu0 %v3031, 124
        %v3039 = vpop.permute.xlu0 %3038
        %3040 = vrot.lane.b32.xlu0 %v3032, 124
        %v3041 = vpop.permute.xlu0 %3040
        %v3045 = vadd.f32 %v3022, %v3037
        %v3046 = vadd.f32 %v3023, %v3037
        %v3047 = vadd.f32 %v3024, %v3039
        %v3048 = vadd.f32 %v3025, %v3039
        %v3049 = vadd.f32 %v3026, %v3041
        %v3050 = vadd.f32 %v3027, %v3041
        %s3051 = sld [smem:[#allocation5 + $0x60]]
        %v3052 = vstv %s3051
        %v3053 = vmul.f32 %v1734, %v3052
        %v3054 = vmul.f32 %v1736, %v3052
        %v3055 = vmul.f32 %v1738, %v3052
        %3059 = vrot.lane.b32.xlu0 %v3053, 123
        %v3060 = vpop.permute.xlu0 %3059
        %3061 = vrot.lane.b32.xlu0 %v3054, 123
        %v3062 = vpop.permute.xlu0 %3061
        %3063 = vrot.lane.b32.xlu0 %v3055, 123
        %v3064 = vpop.permute.xlu0 %3063
        %v3068 = vadd.f32 %v3045, %v3060
        %v3069 = vadd.f32 %v3046, %v3060
        %v3070 = vadd.f32 %v3047, %v3062
        %v3071 = vadd.f32 %v3048, %v3062
        %v3072 = vadd.f32 %v3049, %v3064
        %v3073 = vadd.f32 %v3050, %v3064
        %s3074 = sld [smem:[#allocation5 + $0x61]]
        %v3075 = vstv %s3074
        %v3076 = vmul.f32 %v1734, %v3075
        %v3077 = vmul.f32 %v1736, %v3075
        %v3078 = vmul.f32 %v1738, %v3075
        %3082 = vrot.lane.b32.xlu0 %v3076, 122
        %v3083 = vpop.permute.xlu0 %3082
        %3084 = vrot.lane.b32.xlu0 %v3077, 122
        %v3085 = vpop.permute.xlu0 %3084
        %3086 = vrot.lane.b32.xlu0 %v3078, 122
        %v3087 = vpop.permute.xlu0 %3086
        %v3091 = vadd.f32 %v3068, %v3083
        %v3092 = vadd.f32 %v3069, %v3083
        %v3093 = vadd.f32 %v3070, %v3085
        %v3094 = vadd.f32 %v3071, %v3085
        %v3095 = vadd.f32 %v3072, %v3087
        %v3096 = vadd.f32 %v3073, %v3087
        %v3103 = vrot.slane %v3091, 6
        %v3104 = vrot.slane %v3092, 6
        %v3105 = vrot.slane %v3093, 6
        %v3106 = vsel %vm1708, %v3103, %v3105
        %v3107 = vrot.slane %v3094, 6
        %v3108 = vsel %vm1708, %v3104, %v3107
        %v3109 = vrot.slane %v3095, 6
        %v3110 = vsel %vm1708, %v3105, %v3109
        %v3111 = vrot.slane %v3096, 6
        %v3112 = vsel %vm1708, %v3107, %v3111
        %v3119 = vadd.f32 %v2909, %v3103
        %v3120 = vadd.f32 %v2910, %v3104
        %v3121 = vadd.f32 %v2911, %v3106
        %v3122 = vadd.f32 %v2912, %v3108
        %v3123 = vadd.f32 %v2913, %v3110
        %v3124 = vadd.f32 %v2914, %v3112
        %v3125 = vadd.f32 %v1725, %v3119
        %v3126 = vadd.f32 %v1726, %v3120
        %v3127 = vadd.f32 %v1727, %v3121
        %v3128 = vadd.f32 %v1728, %v3122
        %v3129 = vadd.f32 %v1729, %v3123
        %v3130 = vadd.f32 %v1730, %v3124
        %s3131 = sld [smem:[#allocation4]]
        %v3132 = vstv %s3131
        %v3133 = vadd.f32 %v3125, %v3132
        %v3134 = vadd.f32 %v3126, %v3132
        %v3135 = vadd.f32 %v3127, %v3132
        %v3136 = vadd.f32 %v3128, %v3132
        %v3137 = vadd.f32 %v3129, %v3132
        %v3138 = vadd.f32 %v3130, %v3132
        %v3139 = vxor.u32 %v3133, 2147483648
        %v3140 = vxor.u32 %v3134, 2147483648
        %v3141 = vxor.u32 %v3135, 2147483648
        %v3142 = vxor.u32 %v3136, 2147483648
        %v3143 = vxor.u32 %v3137, 2147483648
        %v3144 = vxor.u32 %v3138, 2147483648
        %v3145 = vmul.f32 %v3139, 1.442695
        %v3146 = vpow.pop %v3145
        %v3147 = vmul.f32 %v3140, 1.442695
        %v3148 = vpow.pop %v3147
        %v3149 = vmul.f32 %v3141, 1.442695
        %v3150 = vpow.pop %v3149
        %v3151 = vmul.f32 %v3142, 1.442695
        %v3152 = vpow.pop %v3151
        %v3153 = vmul.f32 %v3143, 1.442695
        %v3154 = vpow.pop %v3153
        %v3155 = vmul.f32 %v3144, 1.442695
        %v3156 = vpow.pop %v3155
        %v3157 = vadd.f32 %v3146, 1.0
        %v3158 = vadd.f32 %v3148, 1.0
        %v3159 = vadd.f32 %v3150, 1.0
        %v3160 = vadd.f32 %v3152, 1.0
        %v3161 = vadd.f32 %v3154, 1.0
        %v3162 = vadd.f32 %v3156, 1.0
        %v3163 = vrcp.pop %v3157
        %v3164 = vmul.f32 1.0, %v3163
        %v3165 = vrcp.pop %v3158
        %v3166 = vmul.f32 1.0, %v3165
        %v3167 = vrcp.pop %v3159
        %v3168 = vmul.f32 1.0, %v3167
        %v3169 = vrcp.pop %v3160
        %v3170 = vmul.f32 1.0, %v3169
        %v3171 = vrcp.pop %v3161
        %v3172 = vmul.f32 1.0, %v3171
        %v3173 = vrcp.pop %v3162
        %v3174 = vmul.f32 1.0, %v3173
        %v3177 = vcombine.high %v3164, %v3166
        %v3179 = vunpack.c.l.s4 1966171168
        %v3180 = vunpack.c.0.s8 %v3179
        %v3181 = vlaneseq
        %v3182 = vshrl.u32 %v3181, 7
        %v3183 = vsub.s32 %v3180, %v3182
        %v3184 = vrot.slane %v3177, %v3183
        %v3185 = vcombine.high %v3184, %v3184
        %v3187 = vunpack.c.l.s4 1966171168
        %v3188 = vunpack.c.0.s8 %v3187
        %v3189 = vlaneseq
        %v3190 = vshrl.u32 %v3189, 7
        %v3191 = vsub.s32 %v3188, %v3190
        %v3192 = vrot.slane %v3185, %v3191
        %3193 = vrot.lane.b32.xlu0 %v3192, 3
        %v3194 = vpop.permute.xlu0 %3193
        %v3195 = vrot.slane %v3194, 1
        %vm3196 = vcmask 23552
        %v3197 = vsel %vm3196, %v3194, %v3195
        %v3199 = vlaneseq
        %vm3200 = vcmp.ge.s32.totalorder %v3199, 0
        %vm3201 = vcmp.lt.s32.totalorder %v3199, 16
        %vm3202 = vmand %vm3200, %vm3201
        %3203 = vst.msk [vmem:[#allocation3] sm:$0x1] %vm3202, %v3197
        %v3205 = vunpack.c.l.s4 1966171168
        %v3206 = vunpack.c.0.s8 %v3205
        %v3207 = vlaneseq
        %v3208 = vshrl.u32 %v3207, 7
        %v3209 = vsub.s32 %v3206, %v3208
        %v3210 = vrot.slane %v3184, %v3209
        %v3211 = vcombine.high %v3210, %v3210
        %3212 = vrot.lane.b32.xlu0 %v3211, 19
        %v3213 = vpop.permute.xlu0 %3212
        %v3214 = vrot.slane %v3213, 1
        %vm3215 = vcmask 154624
        %v3216 = vsel %vm3215, %v3213, %v3214
        %vm3218 = vcmp.ge.s32.totalorder %v3199, 16
        %vm3219 = vcmp.lt.s32.totalorder %v3199, 32
        %vm3220 = vmand %vm3218, %vm3219
        %3221 = vst.msk [vmem:[#allocation3] sm:$0x1] %vm3220, %v3216
        %v3222 = vcombine.high %v3192, %v3192
        %3223 = vrot.lane.b32.xlu0 %v3222, 35
        %v3224 = vpop.permute.xlu0 %3223
        %v3225 = vrot.slane %v3224, 1
        %vm3226 = vcmask 285696
        %v3227 = vsel %vm3226, %v3224, %v3225
        %vm3229 = vcmp.ge.s32.totalorder %v3199, 32
        %vm3230 = vcmp.lt.s32.totalorder %v3199, 48
        %vm3231 = vmand %vm3229, %vm3230
        %3232 = vst.msk [vmem:[#allocation3] sm:$0x1] %vm3231, %v3227
        %v3235 = vcombine.low %v3168, %v3170
        %v3237 = vunpack.c.l.s4 1966171168
        %v3238 = vunpack.c.0.s8 %v3237
        %v3239 = vlaneseq
        %v3240 = vshrl.u32 %v3239, 7
        %v3241 = vsub.s32 %v3238, %v3240
        %v3242 = vrot.slane %v3235, %v3241
        %v3244 = vunpack.c.l.s4 1966171168
        %v3245 = vunpack.c.0.s8 %v3244
        %v3246 = vlaneseq
        %v3247 = vshrl.u32 %v3246, 7
        %v3248 = vsub.s32 %v3245, %v3247
        %v3249 = vrot.slane %v3242, %v3248
        %3250 = vrot.lane.b32.xlu0 %v3249, 51
        %v3251 = vpop.permute.xlu0 %3250
        %v3252 = vrot.slane %v3251, 1
        %vm3253 = vcmask 416768
        %v3254 = vsel %vm3253, %v3251, %v3252
        %vm3256 = vcmp.ge.s32.totalorder %v3199, 48
        %vm3257 = vcmp.lt.s32.totalorder %v3199, 64
        %vm3258 = vmand %vm3256, %vm3257
        %3259 = vst.msk [vmem:[#allocation3] sm:$0x1] %vm3258, %v3254
        %v3260 = vcombine.high %v3242, %v3242
        %v3262 = vunpack.c.l.s4 1966171168
        %v3263 = vunpack.c.0.s8 %v3262
        %v3264 = vlaneseq
        %v3265 = vshrl.u32 %v3264, 7
        %v3266 = vsub.s32 %v3263, %v3265
        %v3267 = vrot.slane %v3260, %v3266
        %3268 = vrot.lane.b32.xlu0 %v3267, 67
        %v3269 = vpop.permute.xlu0 %3268
        %v3270 = vrot.slane %v3269, 1
        %vm3271 = vcmask 547840
        %v3272 = vsel %vm3271, %v3269, %v3270
        %vm3274 = vcmp.ge.s32.totalorder %v3199, 64
        %vm3275 = vcmp.lt.s32.totalorder %v3199, 80
        %vm3276 = vmand %vm3274, %vm3275
        %3277 = vst.msk [vmem:[#allocation3] sm:$0x1] %vm3276, %v3272
        %v3278 = vcombine.high %v3249, %v3249
        %3279 = vrot.lane.b32.xlu0 %v3278, 83
        %v3280 = vpop.permute.xlu0 %3279
        %v3281 = vrot.slane %v3280, 1
        %vm3282 = vcmask 678912
        %v3283 = vsel %vm3282, %v3280, %v3281
        %vm3285 = vcmp.ge.s32.totalorder %v3199, 80
        %vm3286 = vcmp.lt.s32.totalorder %v3199, 96
        %vm3287 = vmand %vm3285, %vm3286
        %3288 = vst.msk [vmem:[#allocation3] sm:$0x1] %vm3287, %v3283
        %v3289 = vcombine.high %v3267, %v3267
        %3290 = vrot.lane.b32.xlu0 %v3289, 99
        %v3291 = vpop.permute.xlu0 %3290
        %v3292 = vrot.slane %v3291, 1
        %vm3293 = vcmask 809984
        %v3294 = vsel %vm3293, %v3291, %v3292
        %vm3296 = vcmp.ge.s32.totalorder %v3199, 96
        %vm3297 = vcmp.lt.s32.totalorder %v3199, 112
        %vm3298 = vmand %vm3296, %vm3297
        %3299 = vst.msk [vmem:[#allocation3] sm:$0x1] %vm3298, %v3294
        %v3300 = vcombine.high %v3168, %v3170
        %v3302 = vunpack.c.l.s4 1966171168
        %v3303 = vunpack.c.0.s8 %v3302
        %v3304 = vlaneseq
        %v3305 = vshrl.u32 %v3304, 7
        %v3306 = vsub.s32 %v3303, %v3305
        %v3307 = vrot.slane %v3300, %v3306
        %v3309 = vunpack.c.l.s4 1966171168
        %v3310 = vunpack.c.0.s8 %v3309
        %v3311 = vlaneseq
        %v3312 = vshrl.u32 %v3311, 7
        %v3313 = vsub.s32 %v3310, %v3312
        %v3314 = vrot.slane %v3307, %v3313
        %3315 = vrot.lane.b32.xlu0 %v3314, 115
        %v3316 = vpop.permute.xlu0 %3315
        %v3317 = vrot.slane %v3316, 1
        %vm3318 = vcmask 941056
        %v3319 = vsel %vm3318, %v3316, %v3317
        %vm3321 = vcmp.ge.s32.totalorder %v3199, 112
        %vm3322 = vcmp.lt.s32.totalorder %v3199, 128
        %vm3323 = vmand %vm3321, %vm3322
        %3324 = vst.msk [vmem:[#allocation3] sm:$0x1] %vm3323, %v3319
        %v3325 = vcombine.high %v3307, %v3307
        %v3327 = vunpack.c.l.s4 1966171168
        %v3328 = vunpack.c.0.s8 %v3327
        %v3329 = vlaneseq
        %v3330 = vshrl.u32 %v3329, 7
        %v3331 = vsub.s32 %v3328, %v3330
        %v3332 = vrot.slane %v3325, %v3331
        %3333 = vrot.lane.b32.xlu0 %v3332, 3
        %v3334 = vpop.permute.xlu0 %3333
        %v3335 = vrot.slane %v3334, 1
        %v3336 = vsel %vm3196, %v3334, %v3335
        %3338 = vst.msk [vmem:[#allocation3 + $0x1] sm:$0x1] %vm3202, %v3336
        %v3339 = vcombine.high %v3314, %v3314
        %3340 = vrot.lane.b32.xlu0 %v3339, 19
        %v3341 = vpop.permute.xlu0 %3340
        %v3342 = vrot.slane %v3341, 1
        %v3343 = vsel %vm3215, %v3341, %v3342
        %3345 = vst.msk [vmem:[#allocation3 + $0x1] sm:$0x1] %vm3220, %v3343
        %v3346 = vcombine.high %v3332, %v3332
        %3347 = vrot.lane.b32.xlu0 %v3346, 35
        %v3348 = vpop.permute.xlu0 %3347
        %v3349 = vrot.slane %v3348, 1
        %v3350 = vsel %vm3226, %v3348, %v3349
        %3352 = vst.msk [vmem:[#allocation3 + $0x1] sm:$0x1] %vm3231, %v3350
        %v3355 = vcombine.low %v3172, %v3174
        %v3357 = vunpack.c.l.s4 1966171168
        %v3358 = vunpack.c.0.s8 %v3357
        %v3359 = vlaneseq
        %v3360 = vshrl.u32 %v3359, 7
        %v3361 = vsub.s32 %v3358, %v3360
        %v3362 = vrot.slane %v3355, %v3361
        %v3364 = vunpack.c.l.s4 1966171168
        %v3365 = vunpack.c.0.s8 %v3364
        %v3366 = vlaneseq
        %v3367 = vshrl.u32 %v3366, 7
        %v3368 = vsub.s32 %v3365, %v3367
        %v3369 = vrot.slane %v3362, %v3368
        %3370 = vrot.lane.b32.xlu0 %v3369, 51
        %v3371 = vpop.permute.xlu0 %3370
        %v3372 = vrot.slane %v3371, 1
        %v3373 = vsel %vm3253, %v3371, %v3372
        %3375 = vst.msk [vmem:[#allocation3 + $0x1] sm:$0x1] %vm3258, %v3373
        %v3376 = vcombine.high %v3362, %v3362
        %v3378 = vunpack.c.l.s4 1966171168
        %v3379 = vunpack.c.0.s8 %v3378
        %v3380 = vlaneseq
        %v3381 = vshrl.u32 %v3380, 7
        %v3382 = vsub.s32 %v3379, %v3381
        %v3383 = vrot.slane %v3376, %v3382
        %3384 = vrot.lane.b32.xlu0 %v3383, 67
        %v3385 = vpop.permute.xlu0 %3384
        %v3386 = vrot.slane %v3385, 1
        %v3387 = vsel %vm3271, %v3385, %v3386
        %3389 = vst.msk [vmem:[#allocation3 + $0x1] sm:$0x1] %vm3276, %v3387
        %v3390 = vcombine.high %v3369, %v3369
        %3391 = vrot.lane.b32.xlu0 %v3390, 83
        %v3392 = vpop.permute.xlu0 %3391
        %v3393 = vrot.slane %v3392, 1
        %v3394 = vsel %vm3282, %v3392, %v3393
        %3396 = vst.msk [vmem:[#allocation3 + $0x1] sm:$0x1] %vm3287, %v3394
        %v3397 = vcombine.high %v3383, %v3383
        %3398 = vrot.lane.b32.xlu0 %v3397, 99
        %v3399 = vpop.permute.xlu0 %3398
        %v3400 = vrot.slane %v3399, 1
        %v3401 = vsel %vm3293, %v3399, %v3400
        %3403 = vst.msk [vmem:[#allocation3 + $0x1] sm:$0x1] %vm3298, %v3401
        %v3404 = vcombine.high %v3172, %v3174
        %v3406 = vunpack.c.l.s4 1966171168
        %v3407 = vunpack.c.0.s8 %v3406
        %v3408 = vlaneseq
        %v3409 = vshrl.u32 %v3408, 7
        %v3410 = vsub.s32 %v3407, %v3409
        %v3411 = vrot.slane %v3404, %v3410
        %v3413 = vunpack.c.l.s4 1966171168
        %v3414 = vunpack.c.0.s8 %v3413
        %v3415 = vlaneseq
        %v3416 = vshrl.u32 %v3415, 7
        %v3417 = vsub.s32 %v3414, %v3416
        %v3418 = vrot.slane %v3411, %v3417
        %3419 = vrot.lane.b32.xlu0 %v3418, 115
        %v3420 = vpop.permute.xlu0 %3419
        %v3421 = vrot.slane %v3420, 1
        %v3422 = vsel %vm3318, %v3420, %v3421
        %3424 = vst.msk [vmem:[#allocation3 + $0x1] sm:$0x1] %vm3323, %v3422
        %v3425 = vld [vmem:[#allocation3] sm:$0x3]
        %v3426 = vld [vmem:[%s229] sm:$0xff]
        %v3428 = vlaneseq
        %v3429 = vshrl.u32 %v3428, 7
        %v3430 = vsub.s32 0, %v3429
        %v3431 = vrot.slane %v3425, %v3430
        %v3432 = vlaneseq
        %v3433 = vshrl.u32 %v3432, 7
        %v3434 = vsub.s32 1, %v3433
        %v3435 = vrot.slane %v3425, %v3434
        %v3436 = vcombine.low %v3431, %v3435
        %v3438 = vmul.f32 %v3426, %v3436
        %3439 = vst [vmem:[%s268] sm:$0xff] %v3438
        %s3440 = sand.u32 %s128, 1
        %s3441 = scalar_lea.sflag [#allocation7], %s3440
        %s3442 = sand.u32 %s128, 1
        %s3443 = smul.addr %s3442, 8
        %s3444 = scalar_lea.vmem [#allocation12], %s3443
        // Predicated region
        $region49: #{tpu_custom_call.1} parent=35 // pred_check
          %p3445 = pneg %p138
        $region50: #{tpu_custom_call.1} parent=35 // pred_check_branch
          %3447 = sbr.rel (%p3445) target = $region52
        $region51: #{tpu_custom_call.1} parent=35 // pred_region
          %s3449 = ssub.s32 128, 128
          %3450 = vsyncadd %s3441, %s3449
          %s3451 = smul.addr %s26, 2
          %s3452 = smul.addr %s3451, 64
          %s3453 = scalar_lea.hbm %s4, %s3452
          %s3455 = sshll.u32 %s3444, 4
          %s3456 = int_to_ptr.vmem [resolvable:$true] %s3455
          %3458 = dma.vmem_to_hbm [thread:$0]  %s3456, 128, %s3453, %s3441
        $region52: #{tpu_custom_call.1} parent=35 // pred_fallthru
          _
      $region36: #{tpu_custom_call.1} parent=5 // pred_fallthru
        _
      %p3459 = scmp.le.s32.totalorder 2, %s21
      // Predicated region
      $region53: #{tpu_custom_call.1} parent=5 // pred_check
        %p3460 = pneg %p3459
      $region54: #{tpu_custom_call.1} parent=5 // pred_check_branch
        %3462 = sbr.rel (%p3460) target = $region56
      $region55: #{tpu_custom_call.1} parent=5 // pred_region
        %s3463 = ssub.s32 %s21, 2
        // Predicated region
        $region57: #{tpu_custom_call.1} parent=55 // pred_check
          %p3464 = pneg %p144
        $region58: #{tpu_custom_call.1} parent=55 // pred_check_branch
          %3466 = sbr.rel (%p3464) target = $region60
        $region59: #{tpu_custom_call.1} parent=55 // pred_region
          %s3467 = sand.u32 %s129, 1
          %s3468 = scalar_lea.sflag [#allocation7], %s3467
          %s3469 = sand.u32 %s129, 1
          %s3470 = smul.addr %s3469, 8
          %s3471 = scalar_lea.vmem [#allocation12], %s3470
          %3472 = dma.done %s3468, 128
        $region60: #{tpu_custom_call.1} parent=55 // pred_fallthru
          _
      $region56: #{tpu_custom_call.1} parent=5 // pred_fallthru
        _
    $region6: #{tpu_custom_call.1} parent=1 // loop_footer
      %s25 = sadd.s32 1, %s21
    $region7: #{tpu_custom_call.1} parent=1 // loop_footer_branch
      %20 = sbr.rel target = $region3
    $region8: #{tpu_custom_call.1} parent=1 // loop_exit
      _
    %3473 = vsyncpa [#allocation6], 1
    %s3474 = scalar_lea.sflag [#allocation6], 1
    %3475 = vsyncpa %s3474, 1
    %3476 = vsyncpa [#allocation11], 1
    %s3477 = scalar_lea.sflag [#allocation11], 1
    %3478 = vsyncpa %s3477, 1
    %3479 = vsyncpa [#allocation7], 1
    %s3480 = scalar_lea.sflag [#allocation7], 1
    %3481 = vsyncpa %s3480, 1
    %3482 = vsyncpa [#allocation8], 1
    %s3483 = scalar_lea.sflag [#allocation8], 1
    %3484 = vsyncpa %s3483, 1

</llo_original>
